<compile_context>
chip_gen: v7x
topology: tpu7x:2x2x1
jax: 0.10.0
libtpu: 0.0.40
codegen_flags: <defaults>
</compile_context>

<pallas_src>
import functools

import jax
import jax.numpy as jnp
from jax import lax
from jax.experimental import pallas as pl
from jax.experimental.pallas import tpu as pltpu


# dot_general dimension numbers contracting the trailing dim of both operands:
# (Cout, Cin) x (HW, Cin) -> (Cout, HW).
_NT_DIMS = (((1,), (1,)), ((), ()))


def _net_fused_kernel(x_ref, w1_ref, s1_ref, b1_ref, w2_ref, s2_ref, b2_ref,
                      o_ref, xpad_ref, hpad_ref, *, H, W):
    """Whole Net forward for one batch element.

    x_ref:    (1, H, W, 1)    input image (channel-last view of NCHW, C=1)
    w1_ref:   (3, 3, 1, C1)   conv1 weights, HWIO
    s1_ref:   (1, C1)         folded BN1 scale
    b1_ref:   (1, C1)         folded BN1 shift (includes conv1 bias)
    w2_ref:   (3, 3, C2, C1)  conv2 weights as (kh, kw, Cout, Cin)
    s2_ref:   (C2, 1)         folded BN2 scale
    b2_ref:   (C2, 1)         folded BN2 shift (includes conv2 bias)
    o_ref:    (1, C2, H*W)    flattened-NCHW output (lane-dense store)
    xpad_ref: (H+2, W+2, 1)   VMEM scratch: zero-padded input
    hpad_ref: (H+2, W+2, C1)  VMEM scratch: zero-padded hidden activation
    """
    HW = H * W
    f32 = jnp.float32
    C1 = w1_ref.shape[-1]
    C2 = w2_ref.shape[2]

    # ---- in-kernel 'same' padding of the input -----------------------------
    xpad_ref[...] = jnp.zeros(xpad_ref.shape, xpad_ref.dtype)
    xpad_ref[1:H + 1, 1:W + 1, :] = x_ref[0]

    # ---- layer 1: conv(1 -> C1) + folded BN + ReLU --------------------------
    w1 = w1_ref[...]                                    # (3, 3, 1, C1)
    acc1 = jnp.zeros((HW, C1), f32)
    for dy in range(3):
        for dx in range(3):
            patch = xpad_ref[dy:dy + H, dx:dx + W, :]   # (H, W, 1)
            acc1 = acc1 + jnp.dot(patch.reshape(HW, 1), w1[dy, dx],
                                  preferred_element_type=f32)
    h = jnp.maximum(acc1 * s1_ref[...] + b1_ref[...], 0.0)     # (HW, C1)

    # hidden activation stays on-chip: zero-padded copy in VMEM scratch.
    hpad_ref[...] = jnp.zeros(hpad_ref.shape, hpad_ref.dtype)
    hpad_ref[1:H + 1, 1:W + 1, :] = h.reshape(H, W, C1)

    # ---- layer 2: conv(C1 -> C2) + folded BN --------------------------------
    w2 = w2_ref[...]                                    # (3, 3, C2, C1)
    acc2 = jnp.zeros((C2, HW), f32)
    for dy in range(3):
        for dx in range(3):
            patch = hpad_ref[dy:dy + H, dx:dx + W, :]   # (H, W, C1)
            acc2 = acc2 + lax.dot_general(
                w2[dy, dx], patch.reshape(HW, C1), _NT_DIMS,
                preferred_element_type=f32)             # (C2, HW) lane-dense
    y = acc2 * s2_ref[...] + b2_ref[...]                # (C2, 1) broadcasts
    o_ref[0] = y.astype(o_ref.dtype)                    # unmasked full-lane store


def _fold_bn(conv_bias, gamma, beta, mean, var, eps=1e-5):
    """Fold eval-mode BatchNorm (+ conv bias) into per-channel scale/shift."""
    scale = gamma / jnp.sqrt(var + eps)
    shift = beta + scale * (conv_bias - mean)
    return scale.astype(jnp.float32), shift.astype(jnp.float32)


def net_forward(params, x_nchw):
    """Forward pass matching Net.forward.  x_nchw: (B, 1, H, W) -> (B, 3, H, W)."""
    B, Cin, H, W = x_nchw.shape
    assert Cin == 1, "Net.conv1 expects a single-channel (grayscale) input"
    HW = H * W

    # Free, contiguous reshape only: NCHW with C=1 is bit-identical to NHWC.
    x = x_nchw.reshape(B, H, W, 1).astype(jnp.float32)

    # conv weights: PyTorch OIHW -> layouts the kernel consumes.
    w1 = jnp.transpose(params["w1"], (2, 3, 1, 0))      # (3, 3, 1, 8)  HWIO
    w2 = jnp.transpose(params["w2"], (2, 3, 0, 1))      # (3, 3, 3, 8)  (kh,kw,O,I)
    C1 = w1.shape[-1]
    C2 = w2.shape[2]

    s1, b1 = _fold_bn(params["b1"], params["bn1_gamma"], params["bn1_beta"],
                      params["bn1_mean"], params["bn1_var"])
    s2, b2 = _fold_bn(params["b2"], params["bn2_gamma"], params["bn2_beta"],
                      params["bn2_mean"], params["bn2_var"])
    s1 = s1.reshape(1, C1)
    b1 = b1.reshape(1, C1)          # broadcast over (HW, C1)
    s2 = s2.reshape(C2, 1)
    b2 = b2.reshape(C2, 1)          # broadcast over (C2, HW)

    kernel = functools.partial(_net_fused_kernel, H=H, W=W)
    out = pl.pallas_call(
        kernel,
        out_shape=jax.ShapeDtypeStruct((B, C2, HW), jnp.float32),
        grid=(B,),
        in_specs=[
            pl.BlockSpec((1, H, W, 1), lambda b: (b, 0, 0, 0)),
            pl.BlockSpec((3, 3, 1, C1), lambda b: (0, 0, 0, 0)),
            pl.BlockSpec((1, C1), lambda b: (0, 0)),
            pl.BlockSpec((1, C1), lambda b: (0, 0)),
            pl.BlockSpec((3, 3, C2, C1), lambda b: (0, 0, 0, 0)),
            pl.BlockSpec((C2, 1), lambda b: (0, 0)),
            pl.BlockSpec((C2, 1), lambda b: (0, 0)),
        ],
        out_specs=pl.BlockSpec((1, C2, HW), lambda b: (b, 0, 0)),
        scratch_shapes=[
            pltpu.VMEM((H + 2, W + 2, 1), jnp.float32),
            pltpu.VMEM((H + 2, W + 2, C1), jnp.float32),
        ],
        compiler_params=pltpu.CompilerParams(
            dimension_semantics=("parallel",)),
    )(x, w1, s1, b1, w2, s2, b2)

    # Output is already flattened NCHW; reshaping to (B, C2, H, W) is free.
    return out.reshape(B, C2, H, W)


def init_params(key):
    """Deterministic parameter init with shapes implied by Net.__init__ (OIHW)."""
    ks = jax.random.split(key, 8)
    p = {}
    # conv1: 1 -> 8, 3x3
    p["w1"] = jax.random.normal(ks[0], (8, 1, 3, 3), jnp.float32) * 0.1
    p["b1"] = jax.random.normal(ks[1], (8,), jnp.float32) * 0.1
    p["bn1_gamma"] = 1.0 + 0.1 * jax.random.normal(ks[2], (8,), jnp.float32)
    p["bn1_beta"] = 0.1 * jax.random.normal(ks[3], (8,), jnp.float32)
    p["bn1_mean"] = 0.05 * jax.random.normal(ks[4], (8,), jnp.float32)
    p["bn1_var"] = 1.0 + 0.1 * jnp.abs(jax.random.normal(ks[5], (8,), jnp.float32))
    # conv2: 8 -> 3, 3x3
    p["w2"] = jax.random.normal(ks[6], (3, 8, 3, 3), jnp.float32) * 0.1
    p["b2"] = jax.random.normal(ks[7], (3,), jnp.float32) * 0.1
    p["bn2_gamma"] = jnp.array([1.1, 0.9, 1.0], jnp.float32)
    p["bn2_beta"] = jnp.array([0.01, -0.02, 0.03], jnp.float32)
    p["bn2_mean"] = jnp.array([0.0, 0.05, -0.05], jnp.float32)
    p["bn2_var"] = jnp.array([1.0, 1.2, 0.8], jnp.float32)
    return p


def net_forward_ref(params, x_nchw):
    """Pure-JAX reference (lax.conv) for correctness checking."""
    def conv(x, w_oihw, bias):
        y = lax.conv_general_dilated(
            x, w_oihw, window_strides=(1, 1), padding=((1, 1), (1, 1)),
            dimension_numbers=("NCHW", "OIHW", "NCHW"))
        return y + bias.reshape(1, -1, 1, 1)

    def bn(x, g, b, m, v, eps=1e-5):
        return (x - m.reshape(1, -1, 1, 1)) / jnp.sqrt(v.reshape(1, -1, 1, 1) + eps) \
            * g.reshape(1, -1, 1, 1) + b.reshape(1, -1, 1, 1)

    x = conv(x_nchw, params["w1"], params["b1"])
    x = jnp.maximum(bn(x, params["bn1_gamma"], params["bn1_beta"],
                       params["bn1_mean"], params["bn1_var"]), 0.0)
    x = conv(x, params["w2"], params["b2"])
    x = bn(x, params["bn2_gamma"], params["bn2_beta"],
           params["bn2_mean"], params["bn2_var"])
    return x


if __name__ == "__main__":
    key = jax.random.PRNGKey(0)
    k_param, k_data = jax.random.split(key)

    params = init_params(k_param)
    # grayscale_image: batch=2, channels=1, spatial=16x16 (NCHW, as in PyTorch)
    x = jax.random.normal(k_data, (2, 1, 16, 16), jnp.float32)

    out = jax.block_until_ready(net_forward(params, x))
    ref = jax.block_until_ready(net_forward_ref(params, x))

    assert out.shape == (2, 3, 16, 16), out.shape
    assert jnp.allclose(out, ref, atol=1e-4, rtol=1e-4), \
        float(jnp.max(jnp.abs(out - ref)))

    # TODO(synk): training-mode BatchNorm (batch statistics + running-stat
    # updates) is intentionally not replicated; eval-mode BN is folded instead.
    print("KERNEL_OK")
</pallas_src>

<mosaic_0001>
module attributes {stable_mosaic.version = 11 : i64} {
  func.func @_net_fused_kernel(%arg0: i32, %arg1: memref<1x16x16x1xf32, #tpu.memory_space<vmem>>, %arg2: memref<3x3x1x8xf32, #tpu.memory_space<vmem>>, %arg3: memref<1x8xf32, #tpu.memory_space<vmem>>, %arg4: memref<1x8xf32, #tpu.memory_space<vmem>>, %arg5: memref<3x3x3x8xf32, #tpu.memory_space<vmem>>, %arg6: memref<3x1xf32, #tpu.memory_space<vmem>>, %arg7: memref<3x1xf32, #tpu.memory_space<vmem>>, %arg8: memref<1x3x256xf32, #tpu.memory_space<vmem>>, %arg9: memref<18x18x1xf32, #tpu.memory_space<vmem>>, %arg10: memref<18x18x8xf32, #tpu.memory_space<vmem>>) attributes {dimension_semantics = [#tpu.dimension_semantics<parallel>], iteration_bounds = array<i64: 2>, scalar_prefetch = 0 : i64, scratch_operands = 2 : i64, tpu.core_type = #tpu.core_type<tc>, window_params = [{transform_indices = @transform_0, window_bounds = array<i64: 1, 16, 16, 1>}, {pipeline_mode = #tpu.pipeline_mode<synchronous>, transform_indices = @transform_1, window_bounds = array<i64: 3, 3, 1, 8>}, {pipeline_mode = #tpu.pipeline_mode<synchronous>, transform_indices = @transform_2, window_bounds = array<i64: 1, 8>}, {pipeline_mode = #tpu.pipeline_mode<synchronous>, transform_indices = @transform_3, window_bounds = array<i64: 1, 8>}, {pipeline_mode = #tpu.pipeline_mode<synchronous>, transform_indices = @transform_4, window_bounds = array<i64: 3, 3, 3, 8>}, {pipeline_mode = #tpu.pipeline_mode<synchronous>, transform_indices = @transform_5, window_bounds = array<i64: 3, 1>}, {pipeline_mode = #tpu.pipeline_mode<synchronous>, transform_indices = @transform_6, window_bounds = array<i64: 3, 1>}, {transform_indices = @transform_7, window_bounds = array<i64: 1, 3, 256>}]} {
    %cst = arith.constant 0.000000e+00 : f32
    %0 = vector.broadcast %cst : f32 to vector<18x18x1xf32>
    %c0 = arith.constant 0 : index
    %c0_0 = arith.constant 0 : index
    %c0_1 = arith.constant 0 : index
    %1 = vector.load %arg9[%c0, %c0_0, %c0_1] : memref<18x18x1xf32, #tpu.memory_space<vmem>>, vector<18x18x1xf32>
    tpu.vector_store %arg9[%c0, %c0_0, %c0_1], %0 {strides = array<i32>} : memref<18x18x1xf32, #tpu.memory_space<vmem>>, vector<18x18x1xf32>,
    %c0_2 = arith.constant 0 : index
    %c0_3 = arith.constant 0 : index
    %c0_4 = arith.constant 0 : index
    %c0_5 = arith.constant 0 : index
    %2 = vector.load %arg1[%c0_2, %c0_3, %c0_4, %c0_5] : memref<1x16x16x1xf32, #tpu.memory_space<vmem>>, vector<1x16x16x1xf32>
    %3 = vector.shape_cast %2 : vector<1x16x16x1xf32> to vector<16x16x1xf32>
    %c1 = arith.constant 1 : index
    %c1_6 = arith.constant 1 : index
    %c0_7 = arith.constant 0 : index
    %4 = vector.load %arg9[%c1, %c1_6, %c0_7] : memref<18x18x1xf32, #tpu.memory_space<vmem>>, vector<16x16x1xf32>
    tpu.vector_store %arg9[%c1, %c1_6, %c0_7], %3 {strides = array<i32>} : memref<18x18x1xf32, #tpu.memory_space<vmem>>, vector<16x16x1xf32>,
    %c0_8 = arith.constant 0 : index
    %c0_9 = arith.constant 0 : index
    %c0_10 = arith.constant 0 : index
    %c0_11 = arith.constant 0 : index
    %5 = vector.load %arg2[%c0_8, %c0_9, %c0_10, %c0_11] : memref<3x3x1x8xf32, #tpu.memory_space<vmem>>, vector<3x3x1x8xf32>
    %cst_12 = arith.constant 0.000000e+00 : f32
    %6 = vector.broadcast %cst_12 : f32 to vector<256x8xf32>
    %c0_13 = arith.constant 0 : index
    %c0_14 = arith.constant 0 : index
    %c0_15 = arith.constant 0 : index
    %7 = vector.load %arg9[%c0_13, %c0_14, %c0_15] : memref<18x18x1xf32, #tpu.memory_space<vmem>>, vector<16x16x1xf32>
    %8 = vector.shape_cast %7 : vector<16x16x1xf32> to vector<256x1xf32>
    %9 = vector.extract_strided_slice %5 {offsets = [0, 0, 0, 0], sizes = [1, 1, 1, 8], strides = [1, 1, 1, 1]} : vector<3x3x1x8xf32> to vector<1x1x1x8xf32>
    %10 = vector.shape_cast %9 : vector<1x1x1x8xf32> to vector<1x8xf32>
    %cst_16 = arith.constant dense<0.000000e+00> : vector<256x8xf32>
    %11 = tpu.matmul %8, %10, %cst_16 {dimension_numbers = #tpu.dot_dimension_numbers<[1], [0], [0], [1], [0, 0, 1, 1], [], []>} : vector<256x1xf32>, vector<1x8xf32>, vector<256x8xf32> -> vector<256x8xf32>
    %12 = arith.addf %6, %11 : vector<256x8xf32>
    %c0_17 = arith.constant 0 : index
    %c1_18 = arith.constant 1 : index
    %c0_19 = arith.constant 0 : index
    %13 = vector.load %arg9[%c0_17, %c1_18, %c0_19] : memref<18x18x1xf32, #tpu.memory_space<vmem>>, vector<16x16x1xf32>
    %14 = vector.shape_cast %13 : vector<16x16x1xf32> to vector<256x1xf32>
    %15 = vector.extract_strided_slice %5 {offsets = [0, 1, 0, 0], sizes = [1, 1, 1, 8], strides = [1, 1, 1, 1]} : vector<3x3x1x8xf32> to vector<1x1x1x8xf32>
    %16 = vector.shape_cast %15 : vector<1x1x1x8xf32> to vector<1x8xf32>
    %cst_20 = arith.constant dense<0.000000e+00> : vector<256x8xf32>
    %17 = tpu.matmul %14, %16, %cst_20 {dimension_numbers = #tpu.dot_dimension_numbers<[1], [0], [0], [1], [0, 0, 1, 1], [], []>} : vector<256x1xf32>, vector<1x8xf32>, vector<256x8xf32> -> vector<256x8xf32>
    %18 = arith.addf %12, %17 : vector<256x8xf32>
    %c0_21 = arith.constant 0 : index
    %c2 = arith.constant 2 : index
    %c0_22 = arith.constant 0 : index
    %19 = vector.load %arg9[%c0_21, %c2, %c0_22] : memref<18x18x1xf32, #tpu.memory_space<vmem>>, vector<16x16x1xf32>
    %20 = vector.shape_cast %19 : vector<16x16x1xf32> to vector<256x1xf32>
    %21 = vector.extract_strided_slice %5 {offsets = [0, 2, 0, 0], sizes = [1, 1, 1, 8], strides = [1, 1, 1, 1]} : vector<3x3x1x8xf32> to vector<1x1x1x8xf32>
    %22 = vector.shape_cast %21 : vector<1x1x1x8xf32> to vector<1x8xf32>
    %cst_23 = arith.constant dense<0.000000e+00> : vector<256x8xf32>
    %23 = tpu.matmul %20, %22, %cst_23 {dimension_numbers = #tpu.dot_dimension_numbers<[1], [0], [0], [1], [0, 0, 1, 1], [], []>} : vector<256x1xf32>, vector<1x8xf32>, vector<256x8xf32> -> vector<256x8xf32>
    %24 = arith.addf %18, %23 : vector<256x8xf32>
    %c1_24 = arith.constant 1 : index
    %c0_25 = arith.constant 0 : index
    %c0_26 = arith.constant 0 : index
    %25 = vector.load %arg9[%c1_24, %c0_25, %c0_26] : memref<18x18x1xf32, #tpu.memory_space<vmem>>, vector<16x16x1xf32>
    %26 = vector.shape_cast %25 : vector<16x16x1xf32> to vector<256x1xf32>
    %27 = vector.extract_strided_slice %5 {offsets = [1, 0, 0, 0], sizes = [1, 1, 1, 8], strides = [1, 1, 1, 1]} : vector<3x3x1x8xf32> to vector<1x1x1x8xf32>
    %28 = vector.shape_cast %27 : vector<1x1x1x8xf32> to vector<1x8xf32>
    %cst_27 = arith.constant dense<0.000000e+00> : vector<256x8xf32>
    %29 = tpu.matmul %26, %28, %cst_27 {dimension_numbers = #tpu.dot_dimension_numbers<[1], [0], [0], [1], [0, 0, 1, 1], [], []>} : vector<256x1xf32>, vector<1x8xf32>, vector<256x8xf32> -> vector<256x8xf32>
    %30 = arith.addf %24, %29 : vector<256x8xf32>
    %c1_28 = arith.constant 1 : index
    %c1_29 = arith.constant 1 : index
    %c0_30 = arith.constant 0 : index
    %31 = vector.load %arg9[%c1_28, %c1_29, %c0_30] : memref<18x18x1xf32, #tpu.memory_space<vmem>>, vector<16x16x1xf32>
    %32 = vector.shape_cast %31 : vector<16x16x1xf32> to vector<256x1xf32>
    %33 = vector.extract_strided_slice %5 {offsets = [1, 1, 0, 0], sizes = [1, 1, 1, 8], strides = [1, 1, 1, 1]} : vector<3x3x1x8xf32> to vector<1x1x1x8xf32>
    %34 = vector.shape_cast %33 : vector<1x1x1x8xf32> to vector<1x8xf32>
    %cst_31 = arith.constant dense<0.000000e+00> : vector<256x8xf32>
    %35 = tpu.matmul %32, %34, %cst_31 {dimension_numbers = #tpu.dot_dimension_numbers<[1], [0], [0], [1], [0, 0, 1, 1], [], []>} : vector<256x1xf32>, vector<1x8xf32>, vector<256x8xf32> -> vector<256x8xf32>
    %36 = arith.addf %30, %35 : vector<256x8xf32>
    %c1_32 = arith.constant 1 : index
    %c2_33 = arith.constant 2 : index
    %c0_34 = arith.constant 0 : index
    %37 = vector.load %arg9[%c1_32, %c2_33, %c0_34] : memref<18x18x1xf32, #tpu.memory_space<vmem>>, vector<16x16x1xf32>
    %38 = vector.shape_cast %37 : vector<16x16x1xf32> to vector<256x1xf32>
    %39 = vector.extract_strided_slice %5 {offsets = [1, 2, 0, 0], sizes = [1, 1, 1, 8], strides = [1, 1, 1, 1]} : vector<3x3x1x8xf32> to vector<1x1x1x8xf32>
    %40 = vector.shape_cast %39 : vector<1x1x1x8xf32> to vector<1x8xf32>
    %cst_35 = arith.constant dense<0.000000e+00> : vector<256x8xf32>
    %41 = tpu.matmul %38, %40, %cst_35 {dimension_numbers = #tpu.dot_dimension_numbers<[1], [0], [0], [1], [0, 0, 1, 1], [], []>} : vector<256x1xf32>, vector<1x8xf32>, vector<256x8xf32> -> vector<256x8xf32>
    %42 = arith.addf %36, %41 : vector<256x8xf32>
    %c2_36 = arith.constant 2 : index
    %c0_37 = arith.constant 0 : index
    %c0_38 = arith.constant 0 : index
    %43 = vector.load %arg9[%c2_36, %c0_37, %c0_38] : memref<18x18x1xf32, #tpu.memory_space<vmem>>, vector<16x16x1xf32>
    %44 = vector.shape_cast %43 : vector<16x16x1xf32> to vector<256x1xf32>
    %45 = vector.extract_strided_slice %5 {offsets = [2, 0, 0, 0], sizes = [1, 1, 1, 8], strides = [1, 1, 1, 1]} : vector<3x3x1x8xf32> to vector<1x1x1x8xf32>
    %46 = vector.shape_cast %45 : vector<1x1x1x8xf32> to vector<1x8xf32>
    %cst_39 = arith.constant dense<0.000000e+00> : vector<256x8xf32>
    %47 = tpu.matmul %44, %46, %cst_39 {dimension_numbers = #tpu.dot_dimension_numbers<[1], [0], [0], [1], [0, 0, 1, 1], [], []>} : vector<256x1xf32>, vector<1x8xf32>, vector<256x8xf32> -> vector<256x8xf32>
    %48 = arith.addf %42, %47 : vector<256x8xf32>
    %c2_40 = arith.constant 2 : index
    %c1_41 = arith.constant 1 : index
    %c0_42 = arith.constant 0 : index
    %49 = vector.load %arg9[%c2_40, %c1_41, %c0_42] : memref<18x18x1xf32, #tpu.memory_space<vmem>>, vector<16x16x1xf32>
    %50 = vector.shape_cast %49 : vector<16x16x1xf32> to vector<256x1xf32>
    %51 = vector.extract_strided_slice %5 {offsets = [2, 1, 0, 0], sizes = [1, 1, 1, 8], strides = [1, 1, 1, 1]} : vector<3x3x1x8xf32> to vector<1x1x1x8xf32>
    %52 = vector.shape_cast %51 : vector<1x1x1x8xf32> to vector<1x8xf32>
    %cst_43 = arith.constant dense<0.000000e+00> : vector<256x8xf32>
    %53 = tpu.matmul %50, %52, %cst_43 {dimension_numbers = #tpu.dot_dimension_numbers<[1], [0], [0], [1], [0, 0, 1, 1], [], []>} : vector<256x1xf32>, vector<1x8xf32>, vector<256x8xf32> -> vector<256x8xf32>
    %54 = arith.addf %48, %53 : vector<256x8xf32>
    %c2_44 = arith.constant 2 : index
    %c2_45 = arith.constant 2 : index
    %c0_46 = arith.constant 0 : index
    %55 = vector.load %arg9[%c2_44, %c2_45, %c0_46] : memref<18x18x1xf32, #tpu.memory_space<vmem>>, vector<16x16x1xf32>
    %56 = vector.shape_cast %55 : vector<16x16x1xf32> to vector<256x1xf32>
    %57 = vector.extract_strided_slice %5 {offsets = [2, 2, 0, 0], sizes = [1, 1, 1, 8], strides = [1, 1, 1, 1]} : vector<3x3x1x8xf32> to vector<1x1x1x8xf32>
    %58 = vector.shape_cast %57 : vector<1x1x1x8xf32> to vector<1x8xf32>
    %cst_47 = arith.constant dense<0.000000e+00> : vector<256x8xf32>
    %59 = tpu.matmul %56, %58, %cst_47 {dimension_numbers = #tpu.dot_dimension_numbers<[1], [0], [0], [1], [0, 0, 1, 1], [], []>} : vector<256x1xf32>, vector<1x8xf32>, vector<256x8xf32> -> vector<256x8xf32>
    %60 = arith.addf %54, %59 : vector<256x8xf32>
    %c0_48 = arith.constant 0 : index
    %c0_49 = arith.constant 0 : index
    %61 = vector.load %arg3[%c0_48, %c0_49] : memref<1x8xf32, #tpu.memory_space<vmem>>, vector<1x8xf32>
    %62 = vector.broadcast %61 : vector<1x8xf32> to vector<256x8xf32>
    %63 = arith.mulf %60, %62 : vector<256x8xf32>
    %c0_50 = arith.constant 0 : index
    %c0_51 = arith.constant 0 : index
    %64 = vector.load %arg4[%c0_50, %c0_51] : memref<1x8xf32, #tpu.memory_space<vmem>>, vector<1x8xf32>
    %65 = vector.broadcast %64 : vector<1x8xf32> to vector<256x8xf32>
    %66 = arith.addf %63, %65 : vector<256x8xf32>
    %cst_52 = arith.constant 0.000000e+00 : f32
    %67 = vector.broadcast %cst_52 : f32 to vector<256x8xf32>
    %68 = arith.maximumf %66, %67 : vector<256x8xf32>
    %cst_53 = arith.constant 0.000000e+00 : f32
    %69 = vector.broadcast %cst_53 : f32 to vector<18x18x8xf32>
    %c0_54 = arith.constant 0 : index
    %c0_55 = arith.constant 0 : index
    %c0_56 = arith.constant 0 : index
    %70 = vector.load %arg10[%c0_54, %c0_55, %c0_56] : memref<18x18x8xf32, #tpu.memory_space<vmem>>, vector<18x18x8xf32>
    tpu.vector_store %arg10[%c0_54, %c0_55, %c0_56], %69 {strides = array<i32>} : memref<18x18x8xf32, #tpu.memory_space<vmem>>, vector<18x18x8xf32>,
    %71 = vector.shape_cast %68 : vector<256x8xf32> to vector<16x16x8xf32>
    %c1_57 = arith.constant 1 : index
    %c1_58 = arith.constant 1 : index
    %c0_59 = arith.constant 0 : index
    %72 = vector.load %arg10[%c1_57, %c1_58, %c0_59] : memref<18x18x8xf32, #tpu.memory_space<vmem>>, vector<16x16x8xf32>
    tpu.vector_store %arg10[%c1_57, %c1_58, %c0_59], %71 {strides = array<i32>} : memref<18x18x8xf32, #tpu.memory_space<vmem>>, vector<16x16x8xf32>,
    %c0_60 = arith.constant 0 : index
    %c0_61 = arith.constant 0 : index
    %c0_62 = arith.constant 0 : index
    %c0_63 = arith.constant 0 : index
    %73 = vector.load %arg5[%c0_60, %c0_61, %c0_62, %c0_63] : memref<3x3x3x8xf32, #tpu.memory_space<vmem>>, vector<3x3x3x8xf32>
    %cst_64 = arith.constant 0.000000e+00 : f32
    %74 = vector.broadcast %cst_64 : f32 to vector<3x256xf32>
    %c0_65 = arith.constant 0 : index
    %c0_66 = arith.constant 0 : index
    %c0_67 = arith.constant 0 : index
    %75 = vector.load %arg10[%c0_65, %c0_66, %c0_67] : memref<18x18x8xf32, #tpu.memory_space<vmem>>, vector<16x16x8xf32>
    %76 = vector.extract_strided_slice %73 {offsets = [0, 0, 0, 0], sizes = [1, 1, 3, 8], strides = [1, 1, 1, 1]} : vector<3x3x3x8xf32> to vector<1x1x3x8xf32>
    %77 = vector.shape_cast %76 : vector<1x1x3x8xf32> to vector<3x8xf32>
    %78 = vector.shape_cast %75 : vector<16x16x8xf32> to vector<256x8xf32>
    %cst_68 = arith.constant dense<0.000000e+00> : vector<3x256xf32>
    %79 = tpu.matmul %77, %78, %cst_68 {dimension_numbers = #tpu.dot_dimension_numbers<[1], [1], [0], [0], [0, 0, 1, 0], [], []>} : vector<3x8xf32>, vector<256x8xf32>, vector<3x256xf32> -> vector<3x256xf32>
    %80 = arith.addf %74, %79 : vector<3x256xf32>
    %c0_69 = arith.constant 0 : index
    %c1_70 = arith.constant 1 : index
    %c0_71 = arith.constant 0 : index
    %81 = vector.load %arg10[%c0_69, %c1_70, %c0_71] : memref<18x18x8xf32, #tpu.memory_space<vmem>>, vector<16x16x8xf32>
    %82 = vector.extract_strided_slice %73 {offsets = [0, 1, 0, 0], sizes = [1, 1, 3, 8], strides = [1, 1, 1, 1]} : vector<3x3x3x8xf32> to vector<1x1x3x8xf32>
    %83 = vector.shape_cast %82 : vector<1x1x3x8xf32> to vector<3x8xf32>
    %84 = vector.shape_cast %81 : vector<16x16x8xf32> to vector<256x8xf32>
    %cst_72 = arith.constant dense<0.000000e+00> : vector<3x256xf32>
    %85 = tpu.matmul %83, %84, %cst_72 {dimension_numbers = #tpu.dot_dimension_numbers<[1], [1], [0], [0], [0, 0, 1, 0], [], []>} : vector<3x8xf32>, vector<256x8xf32>, vector<3x256xf32> -> vector<3x256xf32>
    %86 = arith.addf %80, %85 : vector<3x256xf32>
    %c0_73 = arith.constant 0 : index
    %c2_74 = arith.constant 2 : index
    %c0_75 = arith.constant 0 : index
    %87 = vector.load %arg10[%c0_73, %c2_74, %c0_75] : memref<18x18x8xf32, #tpu.memory_space<vmem>>, vector<16x16x8xf32>
    %88 = vector.extract_strided_slice %73 {offsets = [0, 2, 0, 0], sizes = [1, 1, 3, 8], strides = [1, 1, 1, 1]} : vector<3x3x3x8xf32> to vector<1x1x3x8xf32>
    %89 = vector.shape_cast %88 : vector<1x1x3x8xf32> to vector<3x8xf32>
    %90 = vector.shape_cast %87 : vector<16x16x8xf32> to vector<256x8xf32>
    %cst_76 = arith.constant dense<0.000000e+00> : vector<3x256xf32>
    %91 = tpu.matmul %89, %90, %cst_76 {dimension_numbers = #tpu.dot_dimension_numbers<[1], [1], [0], [0], [0, 0, 1, 0], [], []>} : vector<3x8xf32>, vector<256x8xf32>, vector<3x256xf32> -> vector<3x256xf32>
    %92 = arith.addf %86, %91 : vector<3x256xf32>
    %c1_77 = arith.constant 1 : index
    %c0_78 = arith.constant 0 : index
    %c0_79 = arith.constant 0 : index
    %93 = vector.load %arg10[%c1_77, %c0_78, %c0_79] : memref<18x18x8xf32, #tpu.memory_space<vmem>>, vector<16x16x8xf32>
    %94 = vector.extract_strided_slice %73 {offsets = [1, 0, 0, 0], sizes = [1, 1, 3, 8], strides = [1, 1, 1, 1]} : vector<3x3x3x8xf32> to vector<1x1x3x8xf32>
    %95 = vector.shape_cast %94 : vector<1x1x3x8xf32> to vector<3x8xf32>
    %96 = vector.shape_cast %93 : vector<16x16x8xf32> to vector<256x8xf32>
    %cst_80 = arith.constant dense<0.000000e+00> : vector<3x256xf32>
    %97 = tpu.matmul %95, %96, %cst_80 {dimension_numbers = #tpu.dot_dimension_numbers<[1], [1], [0], [0], [0, 0, 1, 0], [], []>} : vector<3x8xf32>, vector<256x8xf32>, vector<3x256xf32> -> vector<3x256xf32>
    %98 = arith.addf %92, %97 : vector<3x256xf32>
    %c1_81 = arith.constant 1 : index
    %c1_82 = arith.constant 1 : index
    %c0_83 = arith.constant 0 : index
    %99 = vector.load %arg10[%c1_81, %c1_82, %c0_83] : memref<18x18x8xf32, #tpu.memory_space<vmem>>, vector<16x16x8xf32>
    %100 = vector.extract_strided_slice %73 {offsets = [1, 1, 0, 0], sizes = [1, 1, 3, 8], strides = [1, 1, 1, 1]} : vector<3x3x3x8xf32> to vector<1x1x3x8xf32>
    %101 = vector.shape_cast %100 : vector<1x1x3x8xf32> to vector<3x8xf32>
    %102 = vector.shape_cast %99 : vector<16x16x8xf32> to vector<256x8xf32>
    %cst_84 = arith.constant dense<0.000000e+00> : vector<3x256xf32>
    %103 = tpu.matmul %101, %102, %cst_84 {dimension_numbers = #tpu.dot_dimension_numbers<[1], [1], [0], [0], [0, 0, 1, 0], [], []>} : vector<3x8xf32>, vector<256x8xf32>, vector<3x256xf32> -> vector<3x256xf32>
    %104 = arith.addf %98, %103 : vector<3x256xf32>
    %c1_85 = arith.constant 1 : index
    %c2_86 = arith.constant 2 : index
    %c0_87 = arith.constant 0 : index
    %105 = vector.load %arg10[%c1_85, %c2_86, %c0_87] : memref<18x18x8xf32, #tpu.memory_space<vmem>>, vector<16x16x8xf32>
    %106 = vector.extract_strided_slice %73 {offsets = [1, 2, 0, 0], sizes = [1, 1, 3, 8], strides = [1, 1, 1, 1]} : vector<3x3x3x8xf32> to vector<1x1x3x8xf32>
    %107 = vector.shape_cast %106 : vector<1x1x3x8xf32> to vector<3x8xf32>
    %108 = vector.shape_cast %105 : vector<16x16x8xf32> to vector<256x8xf32>
    %cst_88 = arith.constant dense<0.000000e+00> : vector<3x256xf32>
    %109 = tpu.matmul %107, %108, %cst_88 {dimension_numbers = #tpu.dot_dimension_numbers<[1], [1], [0], [0], [0, 0, 1, 0], [], []>} : vector<3x8xf32>, vector<256x8xf32>, vector<3x256xf32> -> vector<3x256xf32>
    %110 = arith.addf %104, %109 : vector<3x256xf32>
    %c2_89 = arith.constant 2 : index
    %c0_90 = arith.constant 0 : index
    %c0_91 = arith.constant 0 : index
    %111 = vector.load %arg10[%c2_89, %c0_90, %c0_91] : memref<18x18x8xf32, #tpu.memory_space<vmem>>, vector<16x16x8xf32>
    %112 = vector.extract_strided_slice %73 {offsets = [2, 0, 0, 0], sizes = [1, 1, 3, 8], strides = [1, 1, 1, 1]} : vector<3x3x3x8xf32> to vector<1x1x3x8xf32>
    %113 = vector.shape_cast %112 : vector<1x1x3x8xf32> to vector<3x8xf32>
    %114 = vector.shape_cast %111 : vector<16x16x8xf32> to vector<256x8xf32>
    %cst_92 = arith.constant dense<0.000000e+00> : vector<3x256xf32>
    %115 = tpu.matmul %113, %114, %cst_92 {dimension_numbers = #tpu.dot_dimension_numbers<[1], [1], [0], [0], [0, 0, 1, 0], [], []>} : vector<3x8xf32>, vector<256x8xf32>, vector<3x256xf32> -> vector<3x256xf32>
    %116 = arith.addf %110, %115 : vector<3x256xf32>
    %c2_93 = arith.constant 2 : index
    %c1_94 = arith.constant 1 : index
    %c0_95 = arith.constant 0 : index
    %117 = vector.load %arg10[%c2_93, %c1_94, %c0_95] : memref<18x18x8xf32, #tpu.memory_space<vmem>>, vector<16x16x8xf32>
    %118 = vector.extract_strided_slice %73 {offsets = [2, 1, 0, 0], sizes = [1, 1, 3, 8], strides = [1, 1, 1, 1]} : vector<3x3x3x8xf32> to vector<1x1x3x8xf32>
    %119 = vector.shape_cast %118 : vector<1x1x3x8xf32> to vector<3x8xf32>
    %120 = vector.shape_cast %117 : vector<16x16x8xf32> to vector<256x8xf32>
    %cst_96 = arith.constant dense<0.000000e+00> : vector<3x256xf32>
    %121 = tpu.matmul %119, %120, %cst_96 {dimension_numbers = #tpu.dot_dimension_numbers<[1], [1], [0], [0], [0, 0, 1, 0], [], []>} : vector<3x8xf32>, vector<256x8xf32>, vector<3x256xf32> -> vector<3x256xf32>
    %122 = arith.addf %116, %121 : vector<3x256xf32>
    %c2_97 = arith.constant 2 : index
    %c2_98 = arith.constant 2 : index
    %c0_99 = arith.constant 0 : index
    %123 = vector.load %arg10[%c2_97, %c2_98, %c0_99] : memref<18x18x8xf32, #tpu.memory_space<vmem>>, vector<16x16x8xf32>
    %124 = vector.extract_strided_slice %73 {offsets = [2, 2, 0, 0], sizes = [1, 1, 3, 8], strides = [1, 1, 1, 1]} : vector<3x3x3x8xf32> to vector<1x1x3x8xf32>
    %125 = vector.shape_cast %124 : vector<1x1x3x8xf32> to vector<3x8xf32>
    %126 = vector.shape_cast %123 : vector<16x16x8xf32> to vector<256x8xf32>
    %cst_100 = arith.constant dense<0.000000e+00> : vector<3x256xf32>
    %127 = tpu.matmul %125, %126, %cst_100 {dimension_numbers = #tpu.dot_dimension_numbers<[1], [1], [0], [0], [0, 0, 1, 0], [], []>} : vector<3x8xf32>, vector<256x8xf32>, vector<3x256xf32> -> vector<3x256xf32>
    %128 = arith.addf %122, %127 : vector<3x256xf32>
    %c0_101 = arith.constant 0 : index
    %c0_102 = arith.constant 0 : index
    %129 = vector.load %arg6[%c0_101, %c0_102] : memref<3x1xf32, #tpu.memory_space<vmem>>, vector<3x1xf32>
    %130 = vector.broadcast %129 : vector<3x1xf32> to vector<3x256xf32>
    %131 = arith.mulf %128, %130 : vector<3x256xf32>
    %c0_103 = arith.constant 0 : index
    %c0_104 = arith.constant 0 : index
    %132 = vector.load %arg7[%c0_103, %c0_104] : memref<3x1xf32, #tpu.memory_space<vmem>>, vector<3x1xf32>
    %133 = vector.broadcast %132 : vector<3x1xf32> to vector<3x256xf32>
    %134 = arith.addf %131, %133 : vector<3x256xf32>
    %c0_105 = arith.constant 0 : index
    %c0_106 = arith.constant 0 : index
    %c0_107 = arith.constant 0 : index
    %135 = vector.load %arg8[%c0_105, %c0_106, %c0_107] : memref<1x3x256xf32, #tpu.memory_space<vmem>>, vector<1x3x256xf32>
    %136 = vector.shape_cast %135 : vector<1x3x256xf32> to vector<3x256xf32>
    %137 = vector.shape_cast %134 : vector<3x256xf32> to vector<1x3x256xf32>
    tpu.vector_store %arg8[%c0_105, %c0_106, %c0_107], %137 {strides = array<i32>} : memref<1x3x256xf32, #tpu.memory_space<vmem>>, vector<1x3x256xf32>,
    return
  }
  func.func @transform_0(%arg0: i32) -> (i32, i32, i32, i32) {
    %c0_i32 = arith.constant 0 : i32
    %c0_i32_0 = arith.constant 0 : i32
    %c0_i32_1 = arith.constant 0 : i32
    %c0_i32_2 = arith.constant 0 : i32
    return %arg0, %c0_i32, %c0_i32_0, %c0_i32_1 : i32, i32, i32, i32
  }
  func.func @transform_1(%arg0: i32) -> (i32, i32, i32, i32) {
    %c0_i32 = arith.constant 0 : i32
    %c0_i32_0 = arith.constant 0 : i32
    %c0_i32_1 = arith.constant 0 : i32
    %c0_i32_2 = arith.constant 0 : i32
    %c0_i32_3 = arith.constant 0 : i32
    return %c0_i32, %c0_i32_0, %c0_i32_1, %c0_i32_2 : i32, i32, i32, i32
  }
  func.func @transform_2(%arg0: i32) -> (i32, i32) {
    %c0_i32 = arith.constant 0 : i32
    %c0_i32_0 = arith.constant 0 : i32
    %c0_i32_1 = arith.constant 0 : i32
    return %c0_i32, %c0_i32_0 : i32, i32
  }
  func.func @transform_3(%arg0: i32) -> (i32, i32) {
    %c0_i32 = arith.constant 0 : i32
    %c0_i32_0 = arith.constant 0 : i32
    %c0_i32_1 = arith.constant 0 : i32
    return %c0_i32, %c0_i32_0 : i32, i32
  }
  func.func @transform_4(%arg0: i32) -> (i32, i32, i32, i32) {
    %c0_i32 = arith.constant 0 : i32
    %c0_i32_0 = arith.constant 0 : i32
    %c0_i32_1 = arith.constant 0 : i32
    %c0_i32_2 = arith.constant 0 : i32
    %c0_i32_3 = arith.constant 0 : i32
    return %c0_i32, %c0_i32_0, %c0_i32_1, %c0_i32_2 : i32, i32, i32, i32
  }
  func.func @transform_5(%arg0: i32) -> (i32, i32) {
    %c0_i32 = arith.constant 0 : i32
    %c0_i32_0 = arith.constant 0 : i32
    %c0_i32_1 = arith.constant 0 : i32
    return %c0_i32, %c0_i32_0 : i32, i32
  }
  func.func @transform_6(%arg0: i32) -> (i32, i32) {
    %c0_i32 = arith.constant 0 : i32
    %c0_i32_0 = arith.constant 0 : i32
    %c0_i32_1 = arith.constant 0 : i32
    return %c0_i32, %c0_i32_0 : i32, i32
  }
  func.func @transform_7(%arg0: i32) -> (i32, i32, i32) {
    %c0_i32 = arith.constant 0 : i32
    %c0_i32_0 = arith.constant 0 : i32
    %c0_i32_1 = arith.constant 0 : i32
    return %arg0, %c0_i32, %c0_i32_0 : i32, i32, i32
  }
}

</mosaic_0001>

<llo_original>
// kernel: tpu_custom_call.1
$region0: #{tpu_custom_call.1}
  #allocation0 [shape = 'u32[]', space=smem, size = 0x4, offset = 0x4, fixed_abs, tag = 'smem constant byte address 0x4 - core index']
  #allocation1 [shape = 'u32[144,128]{1,0:T(1,128)}', space=vmem, size = 0x12000, scoped, tag = 'internal scratch']
  #allocation2 [shape = 'f32[18,18,1]{2,1,0:T(8,128)}', space=vmem, size = 0x36000, scoped, tag = 'scratch operand']
  #allocation3 [shape = 'f32[18,18,8]{2,1,0:T(8,128)}', space=vmem, size = 0x36000, scoped, tag = 'scratch operand']
  %s0 = inlined_call_operand.vmem [shape: f32[2,16,16,1], index: 0, kind: input, shape index: {}]
  %s1 = inlined_call_operand.vmem [shape: f32[3,3,1,8], index: 1, kind: input, shape index: {}]
  %s2 = inlined_call_operand.vmem [shape: f32[1,8], index: 2, kind: input, shape index: {}]
  %s3 = inlined_call_operand.vmem [shape: f32[1,8], index: 3, kind: input, shape index: {}]
  %s4 = inlined_call_operand.vmem [shape: f32[3,3,3,8], index: 4, kind: input, shape index: {}]
  %s5 = inlined_call_operand.vmem [shape: f32[3,1], index: 5, kind: input, shape index: {}]
  %s6 = inlined_call_operand.vmem [shape: f32[3,1], index: 6, kind: input, shape index: {}]
  %s7 = inlined_call_operand.vmem [shape: f32[2,3,256], index: 7, kind: output, shape index: {}]
  %s8 = sld [smem:[#allocation0]]
  $region61: #{tpu_custom_call.1} parent=0
    _
  %s10 = ssub.s32 1, %s8
  %s11 = scalar_select 0, %s10, %s8
  loop: start=0, step=1, limit=4
  $region2: #{tpu_custom_call.1} parent=0 // loop_pre_header
    _
  $region3: #{tpu_custom_call.1} parent=0 // loop_header
    %s13 = sphi 0, %s17
    %p14 = scmp.ge.s32.totalorder %s13, 4
    %s23 = sphi 0, %s25
    %s26 = sphi 0, %s23
    %s27 = sphi 0, %s26
    %s43 = sphi 0, %s27
    %s47 = sphi 0, %s47
    %s49 = sphi 0, %s47
    %s50 = sphi 0, %s49
    %s64 = sphi 0, %s50
    %s68 = sphi 0, %s68
    %s70 = sphi 0, %s68
    %s71 = sphi 0, %s70
    %s85 = sphi 0, %s71
    %s89 = sphi 0, %s89
    %s91 = sphi 0, %s89
    %s92 = sphi 0, %s91
    %s106 = sphi 0, %s92
    %s110 = sphi 0, %s110
    %s112 = sphi 0, %s110
    %s113 = sphi 0, %s112
    %s127 = sphi 0, %s113
    %s131 = sphi 0, %s131
    %s133 = sphi 0, %s131
    %s134 = sphi 0, %s133
    %s148 = sphi 0, %s134
    %s152 = sphi 0, %s152
    %s154 = sphi 0, %s152
    %s155 = sphi 0, %s154
    %s169 = sphi 0, %s155
    %s175 = sphi 0, %s177
    %s178 = sphi 0, %s175
    %s179 = sphi 0, %s178
    %s195 = sphi 0, %s179
  $region4: #{tpu_custom_call.1} parent=0 // loop_header_branch
    %16 = sbr.rel (%p14) target = $region8
  $region5: #{tpu_custom_call.1} parent=0 // loop_body
    %s18 = ssub.s32 %s13, 1
    %s19 = ssub.s32 %s13, 2
    %s20 = sadd.s32 %s13, 1
    %s21 = ssub.s32 %s13, %s20
    %p22 = scmp.eq.s32.totalorder %s21, 0
    %s24 = sadd.s32 %s23, 1
    %s25 = scalar_select %p22, %s23, %s24
    %p28 = pneg %p22
    %p29 = scmp.eq.s32.totalorder %s13, 1
    %p30 = por %p28, %p29
    %p31 = scmp.ne.s32.totalorder %s23, %s26
    %p32 = scmp.eq.s32.totalorder %s13, 0
    %p33 = por %p31, %p32
    %p34 = scmp.ne.s32.totalorder %s23, %s26
    %p35 = scmp.eq.s32.totalorder %s18, 1
    %p36 = por %p34, %p35
    %p37 = scmp.ne.s32.totalorder %s26, %s27
    %p38 = scmp.eq.s32.totalorder %s18, 0
    %p39 = por %p37, %p38
    %p40 = scmp.ne.s32.totalorder %s26, %s27
    %p41 = scmp.eq.s32.totalorder %s19, 1
    %p42 = por %p40, %p41
    %p44 = scmp.ne.s32.totalorder %s27, %s43
    %p45 = scmp.eq.s32.totalorder %s19, 0
    %p46 = por %p44, %p45
    %s48 = sadd.s32 %s47, 1
    %p51 = scmp.eq.s32.totalorder %s13, 1
    %p52 = scmp.ne.s32.totalorder %s47, %s49
    %p53 = scmp.eq.s32.totalorder %s13, 0
    %p54 = por %p52, %p53
    %p55 = scmp.ne.s32.totalorder %s47, %s49
    %p56 = scmp.eq.s32.totalorder %s18, 1
    %p57 = por %p55, %p56
    %p58 = scmp.ne.s32.totalorder %s49, %s50
    %p59 = scmp.eq.s32.totalorder %s18, 0
    %p60 = por %p58, %p59
    %p61 = scmp.ne.s32.totalorder %s49, %s50
    %p62 = scmp.eq.s32.totalorder %s19, 1
    %p63 = por %p61, %p62
    %p65 = scmp.ne.s32.totalorder %s50, %s64
    %p66 = scmp.eq.s32.totalorder %s19, 0
    %p67 = por %p65, %p66
    %s69 = sadd.s32 %s68, 1
    %p72 = scmp.eq.s32.totalorder %s13, 1
    %p73 = scmp.ne.s32.totalorder %s68, %s70
    %p74 = scmp.eq.s32.totalorder %s13, 0
    %p75 = por %p73, %p74
    %p76 = scmp.ne.s32.totalorder %s68, %s70
    %p77 = scmp.eq.s32.totalorder %s18, 1
    %p78 = por %p76, %p77
    %p79 = scmp.ne.s32.totalorder %s70, %s71
    %p80 = scmp.eq.s32.totalorder %s18, 0
    %p81 = por %p79, %p80
    %p82 = scmp.ne.s32.totalorder %s70, %s71
    %p83 = scmp.eq.s32.totalorder %s19, 1
    %p84 = por %p82, %p83
    %p86 = scmp.ne.s32.totalorder %s71, %s85
    %p87 = scmp.eq.s32.totalorder %s19, 0
    %p88 = por %p86, %p87
    %s90 = sadd.s32 %s89, 1
    %p93 = scmp.eq.s32.totalorder %s13, 1
    %p94 = scmp.ne.s32.totalorder %s89, %s91
    %p95 = scmp.eq.s32.totalorder %s13, 0
    %p96 = por %p94, %p95
    %p97 = scmp.ne.s32.totalorder %s89, %s91
    %p98 = scmp.eq.s32.totalorder %s18, 1
    %p99 = por %p97, %p98
    %p100 = scmp.ne.s32.totalorder %s91, %s92
    %p101 = scmp.eq.s32.totalorder %s18, 0
    %p102 = por %p100, %p101
    %p103 = scmp.ne.s32.totalorder %s91, %s92
    %p104 = scmp.eq.s32.totalorder %s19, 1
    %p105 = por %p103, %p104
    %p107 = scmp.ne.s32.totalorder %s92, %s106
    %p108 = scmp.eq.s32.totalorder %s19, 0
    %p109 = por %p107, %p108
    %s111 = sadd.s32 %s110, 1
    %p114 = scmp.eq.s32.totalorder %s13, 1
    %p115 = scmp.ne.s32.totalorder %s110, %s112
    %p116 = scmp.eq.s32.totalorder %s13, 0
    %p117 = por %p115, %p116
    %p118 = scmp.ne.s32.totalorder %s110, %s112
    %p119 = scmp.eq.s32.totalorder %s18, 1
    %p120 = por %p118, %p119
    %p121 = scmp.ne.s32.totalorder %s112, %s113
    %p122 = scmp.eq.s32.totalorder %s18, 0
    %p123 = por %p121, %p122
    %p124 = scmp.ne.s32.totalorder %s112, %s113
    %p125 = scmp.eq.s32.totalorder %s19, 1
    %p126 = por %p124, %p125
    %p128 = scmp.ne.s32.totalorder %s113, %s127
    %p129 = scmp.eq.s32.totalorder %s19, 0
    %p130 = por %p128, %p129
    %s132 = sadd.s32 %s131, 1
    %p135 = scmp.eq.s32.totalorder %s13, 1
    %p136 = scmp.ne.s32.totalorder %s131, %s133
    %p137 = scmp.eq.s32.totalorder %s13, 0
    %p138 = por %p136, %p137
    %p139 = scmp.ne.s32.totalorder %s131, %s133
    %p140 = scmp.eq.s32.totalorder %s18, 1
    %p141 = por %p139, %p140
    %p142 = scmp.ne.s32.totalorder %s133, %s134
    %p143 = scmp.eq.s32.totalorder %s18, 0
    %p144 = por %p142, %p143
    %p145 = scmp.ne.s32.totalorder %s133, %s134
    %p146 = scmp.eq.s32.totalorder %s19, 1
    %p147 = por %p145, %p146
    %p149 = scmp.ne.s32.totalorder %s134, %s148
    %p150 = scmp.eq.s32.totalorder %s19, 0
    %p151 = por %p149, %p150
    %s153 = sadd.s32 %s152, 1
    %p156 = scmp.eq.s32.totalorder %s13, 1
    %p157 = scmp.ne.s32.totalorder %s152, %s154
    %p158 = scmp.eq.s32.totalorder %s13, 0
    %p159 = por %p157, %p158
    %p160 = scmp.ne.s32.totalorder %s152, %s154
    %p161 = scmp.eq.s32.totalorder %s18, 1
    %p162 = por %p160, %p161
    %p163 = scmp.ne.s32.totalorder %s154, %s155
    %p164 = scmp.eq.s32.totalorder %s18, 0
    %p165 = por %p163, %p164
    %p166 = scmp.ne.s32.totalorder %s154, %s155
    %p167 = scmp.eq.s32.totalorder %s19, 1
    %p168 = por %p166, %p167
    %p170 = scmp.ne.s32.totalorder %s155, %s169
    %p171 = scmp.eq.s32.totalorder %s19, 0
    %p172 = por %p170, %p171
    %s173 = ssub.s32 %s13, %s20
    %p174 = scmp.eq.s32.totalorder %s173, 0
    %s176 = sadd.s32 %s175, 1
    %s177 = scalar_select %p174, %s175, %s176
    %p180 = pneg %p174
    %p181 = scmp.eq.s32.totalorder %s13, 1
    %p182 = por %p180, %p181
    %p183 = scmp.ne.s32.totalorder %s175, %s178
    %p184 = scmp.eq.s32.totalorder %s13, 0
    %p185 = por %p183, %p184
    %p186 = scmp.ne.s32.totalorder %s175, %s178
    %p187 = scmp.eq.s32.totalorder %s18, 1
    %p188 = por %p186, %p187
    %p189 = scmp.ne.s32.totalorder %s178, %s179
    %p190 = scmp.eq.s32.totalorder %s18, 0
    %p191 = por %p189, %p190
    %p192 = scmp.ne.s32.totalorder %s178, %s179
    %p193 = scmp.eq.s32.totalorder %s19, 1
    %p194 = por %p192, %p193
    %p196 = scmp.ne.s32.totalorder %s179, %s195
    %p197 = scmp.eq.s32.totalorder %s19, 0
    %p198 = por %p196, %p197
    %p199 = scmp.le.s32.totalorder 1, %s13
    %p200 = scmp.lt.s32.totalorder %s13, 3
    %p201 = pnand %p199, %p200
    %p202 = pneg %p201
    // Predicated region
    $region9: #{tpu_custom_call.1} parent=5 // pred_check
      _
    $region10: #{tpu_custom_call.1} parent=5 // pred_check_branch
      %204 = sbr.rel (%p201) target = $region12
    $region11: #{tpu_custom_call.1} parent=5 // pred_region
      %s205 = ssub.s32 %s13, 1
      // Predicated region
      $region13: #{tpu_custom_call.1} parent=11 // pred_check
        %p206 = pneg %p60
      $region14: #{tpu_custom_call.1} parent=11 // pred_check_branch
        %208 = sbr.rel (%p206) target = $region16
      $region15: #{tpu_custom_call.1} parent=11 // pred_region
        _
      $region16: #{tpu_custom_call.1} parent=11 // pred_fallthru
        _
      // Predicated region
      $region17: #{tpu_custom_call.1} parent=11 // pred_check
        %p209 = pneg %p81
      $region18: #{tpu_custom_call.1} parent=11 // pred_check_branch
        %211 = sbr.rel (%p209) target = $region20
      $region19: #{tpu_custom_call.1} parent=11 // pred_region
        _
      $region20: #{tpu_custom_call.1} parent=11 // pred_fallthru
        _
      // Predicated region
      $region21: #{tpu_custom_call.1} parent=11 // pred_check
        %p212 = pneg %p102
      $region22: #{tpu_custom_call.1} parent=11 // pred_check_branch
        %214 = sbr.rel (%p212) target = $region24
      $region23: #{tpu_custom_call.1} parent=11 // pred_region
        _
      $region24: #{tpu_custom_call.1} parent=11 // pred_fallthru
        _
      // Predicated region
      $region25: #{tpu_custom_call.1} parent=11 // pred_check
        %p215 = pneg %p123
      $region26: #{tpu_custom_call.1} parent=11 // pred_check_branch
        %217 = sbr.rel (%p215) target = $region28
      $region27: #{tpu_custom_call.1} parent=11 // pred_region
        _
      $region28: #{tpu_custom_call.1} parent=11 // pred_fallthru
        _
      // Predicated region
      $region29: #{tpu_custom_call.1} parent=11 // pred_check
        %p218 = pneg %p144
      $region30: #{tpu_custom_call.1} parent=11 // pred_check_branch
        %220 = sbr.rel (%p218) target = $region32
      $region31: #{tpu_custom_call.1} parent=11 // pred_region
        _
      $region32: #{tpu_custom_call.1} parent=11 // pred_fallthru
        _
      // Predicated region
      $region33: #{tpu_custom_call.1} parent=11 // pred_check
        %p221 = pneg %p165
      $region34: #{tpu_custom_call.1} parent=11 // pred_check_branch
        %223 = sbr.rel (%p221) target = $region36
      $region35: #{tpu_custom_call.1} parent=11 // pred_region
        _
      $region36: #{tpu_custom_call.1} parent=11 // pred_fallthru
        _
    $region12: #{tpu_custom_call.1} parent=5 // pred_fallthru
      _
    %p224 = scmp.lt.s32.totalorder %s13, 2
    // Predicated region
    $region37: #{tpu_custom_call.1} parent=5 // pred_check
      %p225 = pneg %p224
    $region38: #{tpu_custom_call.1} parent=5 // pred_check_branch
      %227 = sbr.rel (%p225) target = $region40
    $region39: #{tpu_custom_call.1} parent=5 // pred_region
      // Predicated region
      $region41: #{tpu_custom_call.1} parent=39 // pred_check
        %p228 = pneg %p33
      $region42: #{tpu_custom_call.1} parent=39 // pred_check_branch
        %230 = sbr.rel (%p228) target = $region44
      $region43: #{tpu_custom_call.1} parent=39 // pred_region
        %p231 = scmp.lt.s32.totalorder %s13, 1
        %s232 = scalar_select %p231, %s13, 1
        %s233 = smul.addr %s232, 32
        %s234 = smul.addr %s233, 8
        %s235 = scalar_lea.vmem %s0, %s234
      $region44: #{tpu_custom_call.1} parent=39 // pred_fallthru
        _
    $region40: #{tpu_custom_call.1} parent=5 // pred_fallthru
      _
    %p236 = scmp.le.s32.totalorder 1, %s13
    %p237 = scmp.lt.s32.totalorder %s13, 3
    %p238 = pnand %p236, %p237
    %p239 = pneg %p238
    // Predicated region
    $region45: #{tpu_custom_call.1} parent=5 // pred_check
      _
    $region46: #{tpu_custom_call.1} parent=5 // pred_check_branch
      %241 = sbr.rel (%p238) target = $region48
    $region47: #{tpu_custom_call.1} parent=5 // pred_region
      %s242 = ssub.s32 %s13, 1
      %p243 = scmp.lt.s32.totalorder %s18, 1
      %s244 = scalar_select %p243, %s18, 1
      %s245 = smul.addr %s244, 32
      %s246 = smul.addr %s245, 8
      %s247 = scalar_lea.vmem %s0, %s246
      %p248 = pneg %p39
      %p249 = pneg %p36
      %p250 = pneg %p60
      %p251 = pneg %p57
      %p252 = pneg %p81
      %p253 = pneg %p78
      %p254 = pneg %p102
      %p255 = pneg %p99
      %p256 = pneg %p123
      %p257 = pneg %p120
      %p258 = pneg %p144
      %p259 = pneg %p141
      %p260 = pneg %p165
      %p261 = pneg %p162
      %p262 = pneg %p191
      %p263 = pneg %p188
      %p264 = scmp.lt.s32.totalorder %s18, 1
      %s265 = scalar_select %p264, %s18, 1
      %s266 = smul.addr %s265, 2
      %s267 = smul.addr %s266, 4
      %s268 = scalar_lea.vmem %s7, %s267
      %p269 = scmp.lt.s32.totalorder %s18, 1
      %s270 = scalar_select %p269, %s18, 1
      %s271 = smul.addr %s270, 32
      %s272 = smul.addr %s271, 8
      %s273 = scalar_lea.vmem %s0, %s272
      %p274 = scmp.lt.s32.totalorder %s18, 1
      %s275 = scalar_select %p274, %s18, 1
      %s276 = smul.addr %s275, 2
      %s277 = smul.addr %s276, 4
      %s278 = scalar_lea.vmem %s7, %s277
      %vm279 = vcmask 7168
      %280 = vst.msk [vmem:[#allocation2] sm:$0xff] %vm279, 0.0
      %281 = vst.msk [vmem:[#allocation2 + $0x8] sm:$0xff] %vm279, 0.0
      %vm282 = vcmask 1024
      %283 = vst.msk [vmem:[#allocation2 + $0x10] sm:$0x3] %vm282, 0.0
      %284 = vst.msk [vmem:[#allocation2 + $0x18] sm:$0xff] %vm279, 0.0
      %285 = vst.msk [vmem:[#allocation2 + $0x20] sm:$0xff] %vm279, 0.0
      %286 = vst.msk [vmem:[#allocation2 + $0x28] sm:$0x3] %vm282, 0.0
      %287 = vst.msk [vmem:[#allocation2 + $0x30] sm:$0xff] %vm279, 0.0
      %288 = vst.msk [vmem:[#allocation2 + $0x38] sm:$0xff] %vm279, 0.0
      %289 = vst.msk [vmem:[#allocation2 + $0x40] sm:$0x3] %vm282, 0.0
      %290 = vst.msk [vmem:[#allocation2 + $0x48] sm:$0xff] %vm279, 0.0
      %291 = vst.msk [vmem:[#allocation2 + $0x50] sm:$0xff] %vm279, 0.0
      %292 = vst.msk [vmem:[#allocation2 + $0x58] sm:$0x3] %vm282, 0.0
      %293 = vst.msk [vmem:[#allocation2 + $0x60] sm:$0xff] %vm279, 0.0
      %294 = vst.msk [vmem:[#allocation2 + $0x68] sm:$0xff] %vm279, 0.0
      %295 = vst.msk [vmem:[#allocation2 + $0x70] sm:$0x3] %vm282, 0.0
      %296 = vst.msk [vmem:[#allocation2 + $0x78] sm:$0xff] %vm279, 0.0
      %297 = vst.msk [vmem:[#allocation2 + $0x80] sm:$0xff] %vm279, 0.0
      %298 = vst.msk [vmem:[#allocation2 + $0x88] sm:$0x3] %vm282, 0.0
      %299 = vst.msk [vmem:[#allocation2 + $0x90] sm:$0xff] %vm279, 0.0
      %300 = vst.msk [vmem:[#allocation2 + $0x98] sm:$0xff] %vm279, 0.0
      %301 = vst.msk [vmem:[#allocation2 + $0xa0] sm:$0x3] %vm282, 0.0
      %302 = vst.msk [vmem:[#allocation2 + $0xa8] sm:$0xff] %vm279, 0.0
      %303 = vst.msk [vmem:[#allocation2 + $0xb0] sm:$0xff] %vm279, 0.0
      %304 = vst.msk [vmem:[#allocation2 + $0xb8] sm:$0x3] %vm282, 0.0
      %305 = vst.msk [vmem:[#allocation2 + $0xc0] sm:$0xff] %vm279, 0.0
      %306 = vst.msk [vmem:[#allocation2 + $0xc8] sm:$0xff] %vm279, 0.0
      %307 = vst.msk [vmem:[#allocation2 + $0xd0] sm:$0x3] %vm282, 0.0
      %308 = vst.msk [vmem:[#allocation2 + $0xd8] sm:$0xff] %vm279, 0.0
      %309 = vst.msk [vmem:[#allocation2 + $0xe0] sm:$0xff] %vm279, 0.0
      %310 = vst.msk [vmem:[#allocation2 + $0xe8] sm:$0x3] %vm282, 0.0
      %311 = vst.msk [vmem:[#allocation2 + $0xf0] sm:$0xff] %vm279, 0.0
      %312 = vst.msk [vmem:[#allocation2 + $0xf8] sm:$0xff] %vm279, 0.0
      %313 = vst.msk [vmem:[#allocation2 + $0x100] sm:$0x3] %vm282, 0.0
      %314 = vst.msk [vmem:[#allocation2 + $0x108] sm:$0xff] %vm279, 0.0
      %315 = vst.msk [vmem:[#allocation2 + $0x110] sm:$0xff] %vm279, 0.0
      %316 = vst.msk [vmem:[#allocation2 + $0x118] sm:$0x3] %vm282, 0.0
      %317 = vst.msk [vmem:[#allocation2 + $0x120] sm:$0xff] %vm279, 0.0
      %318 = vst.msk [vmem:[#allocation2 + $0x128] sm:$0xff] %vm279, 0.0
      %319 = vst.msk [vmem:[#allocation2 + $0x130] sm:$0x3] %vm282, 0.0
      %320 = vst.msk [vmem:[#allocation2 + $0x138] sm:$0xff] %vm279, 0.0
      %321 = vst.msk [vmem:[#allocation2 + $0x140] sm:$0xff] %vm279, 0.0
      %322 = vst.msk [vmem:[#allocation2 + $0x148] sm:$0x3] %vm282, 0.0
      %323 = vst.msk [vmem:[#allocation2 + $0x150] sm:$0xff] %vm279, 0.0
      %324 = vst.msk [vmem:[#allocation2 + $0x158] sm:$0xff] %vm279, 0.0
      %325 = vst.msk [vmem:[#allocation2 + $0x160] sm:$0x3] %vm282, 0.0
      %326 = vst.msk [vmem:[#allocation2 + $0x168] sm:$0xff] %vm279, 0.0
      %327 = vst.msk [vmem:[#allocation2 + $0x170] sm:$0xff] %vm279, 0.0
      %328 = vst.msk [vmem:[#allocation2 + $0x178] sm:$0x3] %vm282, 0.0
      %329 = vst.msk [vmem:[#allocation2 + $0x180] sm:$0xff] %vm279, 0.0
      %330 = vst.msk [vmem:[#allocation2 + $0x188] sm:$0xff] %vm279, 0.0
      %331 = vst.msk [vmem:[#allocation2 + $0x190] sm:$0x3] %vm282, 0.0
      %332 = vst.msk [vmem:[#allocation2 + $0x198] sm:$0xff] %vm279, 0.0
      %333 = vst.msk [vmem:[#allocation2 + $0x1a0] sm:$0xff] %vm279, 0.0
      %334 = vst.msk [vmem:[#allocation2 + $0x1a8] sm:$0x3] %vm282, 0.0
      %v335 = vld [vmem:[%s273] sm:$0xff]
      %v336 = vld [vmem:[%s273 + $0x8] sm:$0xff]
      %v337 = vld [vmem:[%s273 + $0x10] sm:$0xff]
      %v338 = vld [vmem:[%s273 + $0x18] sm:$0xff]
      %v339 = vld [vmem:[%s273 + $0x20] sm:$0xff]
      %v340 = vld [vmem:[%s273 + $0x28] sm:$0xff]
      %v341 = vld [vmem:[%s273 + $0x30] sm:$0xff]
      %v342 = vld [vmem:[%s273 + $0x38] sm:$0xff]
      %v343 = vld [vmem:[%s273 + $0x40] sm:$0xff]
      %v344 = vld [vmem:[%s273 + $0x48] sm:$0xff]
      %v345 = vld [vmem:[%s273 + $0x50] sm:$0xff]
      %v346 = vld [vmem:[%s273 + $0x58] sm:$0xff]
      %v347 = vld [vmem:[%s273 + $0x60] sm:$0xff]
      %v348 = vld [vmem:[%s273 + $0x68] sm:$0xff]
      %v349 = vld [vmem:[%s273 + $0x70] sm:$0xff]
      %v350 = vld [vmem:[%s273 + $0x78] sm:$0xff]
      %v351 = vld [vmem:[%s273 + $0x80] sm:$0xff]
      %v352 = vld [vmem:[%s273 + $0x88] sm:$0xff]
      %v353 = vld [vmem:[%s273 + $0x90] sm:$0xff]
      %v354 = vld [vmem:[%s273 + $0x98] sm:$0xff]
      %v355 = vld [vmem:[%s273 + $0xa0] sm:$0xff]
      %v356 = vld [vmem:[%s273 + $0xa8] sm:$0xff]
      %v357 = vld [vmem:[%s273 + $0xb0] sm:$0xff]
      %v358 = vld [vmem:[%s273 + $0xb8] sm:$0xff]
      %v359 = vld [vmem:[%s273 + $0xc0] sm:$0xff]
      %v360 = vld [vmem:[%s273 + $0xc8] sm:$0xff]
      %v361 = vld [vmem:[%s273 + $0xd0] sm:$0xff]
      %v362 = vld [vmem:[%s273 + $0xd8] sm:$0xff]
      %v363 = vld [vmem:[%s273 + $0xe0] sm:$0xff]
      %v364 = vld [vmem:[%s273 + $0xe8] sm:$0xff]
      %v365 = vld [vmem:[%s273 + $0xf0] sm:$0xff]
      %v366 = vld [vmem:[%s273 + $0xf8] sm:$0xff]
      %s367 = scalar_lea.vmem [#allocation2], 24
      %368 = vst.msk [vmem:[%s367 + $0x1] sm:$0xff] %vm279, %v335
      %369 = vst.msk [vmem:[%s367 + $0x9] sm:$0xff] %vm279, %v336
      %370 = vst.msk [vmem:[%s367 + $0x19] sm:$0xff] %vm279, %v337
      %371 = vst.msk [vmem:[%s367 + $0x21] sm:$0xff] %vm279, %v338
      %372 = vst.msk [vmem:[%s367 + $0x31] sm:$0xff] %vm279, %v339
      %373 = vst.msk [vmem:[%s367 + $0x39] sm:$0xff] %vm279, %v340
      %374 = vst.msk [vmem:[%s367 + $0x49] sm:$0xff] %vm279, %v341
      %375 = vst.msk [vmem:[%s367 + $0x51] sm:$0xff] %vm279, %v342
      %376 = vst.msk [vmem:[%s367 + $0x61] sm:$0xff] %vm279, %v343
      %377 = vst.msk [vmem:[%s367 + $0x69] sm:$0xff] %vm279, %v344
      %378 = vst.msk [vmem:[%s367 + $0x79] sm:$0xff] %vm279, %v345
      %379 = vst.msk [vmem:[%s367 + $0x81] sm:$0xff] %vm279, %v346
      %380 = vst.msk [vmem:[%s367 + $0x91] sm:$0xff] %vm279, %v347
      %381 = vst.msk [vmem:[%s367 + $0x99] sm:$0xff] %vm279, %v348
      %382 = vst.msk [vmem:[%s367 + $0xa9] sm:$0xff] %vm279, %v349
      %383 = vst.msk [vmem:[%s367 + $0xb1] sm:$0xff] %vm279, %v350
      %384 = vst.msk [vmem:[%s367 + $0xc1] sm:$0xff] %vm279, %v351
      %385 = vst.msk [vmem:[%s367 + $0xc9] sm:$0xff] %vm279, %v352
      %386 = vst.msk [vmem:[%s367 + $0xd9] sm:$0xff] %vm279, %v353
      %387 = vst.msk [vmem:[%s367 + $0xe1] sm:$0xff] %vm279, %v354
      %388 = vst.msk [vmem:[%s367 + $0xf1] sm:$0xff] %vm279, %v355
      %389 = vst.msk [vmem:[%s367 + $0xf9] sm:$0xff] %vm279, %v356
      %390 = vst.msk [vmem:[%s367 + $0x109] sm:$0xff] %vm279, %v357
      %391 = vst.msk [vmem:[%s367 + $0x111] sm:$0xff] %vm279, %v358
      %392 = vst.msk [vmem:[%s367 + $0x121] sm:$0xff] %vm279, %v359
      %393 = vst.msk [vmem:[%s367 + $0x129] sm:$0xff] %vm279, %v360
      %394 = vst.msk [vmem:[%s367 + $0x139] sm:$0xff] %vm279, %v361
      %395 = vst.msk [vmem:[%s367 + $0x141] sm:$0xff] %vm279, %v362
      %396 = vst.msk [vmem:[%s367 + $0x151] sm:$0xff] %vm279, %v363
      %397 = vst.msk [vmem:[%s367 + $0x159] sm:$0xff] %vm279, %v364
      %398 = vst.msk [vmem:[%s367 + $0x169] sm:$0xff] %vm279, %v365
      %399 = vst.msk [vmem:[%s367 + $0x171] sm:$0xff] %vm279, %v366
      %v400 = vld [vmem:[%s1] sm:$0x1]
      %v401 = vld [vmem:[%s1 + $0x1] sm:$0x1]
      %v402 = vld [vmem:[%s1 + $0x2] sm:$0x1]
      %v403 = vld [vmem:[%s1 + $0x3] sm:$0x1]
      %v404 = vld [vmem:[%s1 + $0x4] sm:$0x1]
      %v405 = vld [vmem:[%s1 + $0x5] sm:$0x1]
      %v406 = vld [vmem:[%s1 + $0x6] sm:$0x1]
      %v407 = vld [vmem:[%s1 + $0x7] sm:$0x1]
      %v408 = vld [vmem:[%s1 + $0x8] sm:$0x1]
      %v409 = vld [vmem:[#allocation2] sm:$0xff]
      %v410 = vld [vmem:[#allocation2 + $0x8] sm:$0xff]
      %v411 = vld [vmem:[#allocation2 + $0x18] sm:$0xff]
      %v412 = vld [vmem:[#allocation2 + $0x20] sm:$0xff]
      %v413 = vld [vmem:[#allocation2 + $0x30] sm:$0xff]
      %v414 = vld [vmem:[#allocation2 + $0x38] sm:$0xff]
      %v415 = vld [vmem:[#allocation2 + $0x48] sm:$0xff]
      %v416 = vld [vmem:[#allocation2 + $0x50] sm:$0xff]
      %v417 = vld [vmem:[#allocation2 + $0x60] sm:$0xff]
      %v418 = vld [vmem:[#allocation2 + $0x68] sm:$0xff]
      %v419 = vld [vmem:[#allocation2 + $0x78] sm:$0xff]
      %v420 = vld [vmem:[#allocation2 + $0x80] sm:$0xff]
      %v421 = vld [vmem:[#allocation2 + $0x90] sm:$0xff]
      %v422 = vld [vmem:[#allocation2 + $0x98] sm:$0xff]
      %v423 = vld [vmem:[#allocation2 + $0xa8] sm:$0xff]
      %v424 = vld [vmem:[#allocation2 + $0xb0] sm:$0xff]
      %v425 = vld [vmem:[#allocation2 + $0xc0] sm:$0xff]
      %v426 = vld [vmem:[#allocation2 + $0xc8] sm:$0xff]
      %v427 = vld [vmem:[#allocation2 + $0xd8] sm:$0xff]
      %v428 = vld [vmem:[#allocation2 + $0xe0] sm:$0xff]
      %v429 = vld [vmem:[#allocation2 + $0xf0] sm:$0xff]
      %v430 = vld [vmem:[#allocation2 + $0xf8] sm:$0xff]
      %v431 = vld [vmem:[#allocation2 + $0x108] sm:$0xff]
      %v432 = vld [vmem:[#allocation2 + $0x110] sm:$0xff]
      %v433 = vld [vmem:[#allocation2 + $0x120] sm:$0xff]
      %v434 = vld [vmem:[#allocation2 + $0x128] sm:$0xff]
      %v435 = vld [vmem:[#allocation2 + $0x138] sm:$0xff]
      %v436 = vld [vmem:[#allocation2 + $0x140] sm:$0xff]
      %v437 = vld [vmem:[#allocation2 + $0x150] sm:$0xff]
      %v438 = vld [vmem:[#allocation2 + $0x158] sm:$0xff]
      %v439 = vld [vmem:[#allocation2 + $0x168] sm:$0xff]
      %v440 = vld [vmem:[#allocation2 + $0x170] sm:$0xff]
      %v441 = vld [vmem:[#allocation2 + $0x1] sm:$0xff]
      %v442 = vld [vmem:[#allocation2 + $0x9] sm:$0xff]
      %v443 = vld [vmem:[#allocation2 + $0x19] sm:$0xff]
      %v444 = vld [vmem:[#allocation2 + $0x21] sm:$0xff]
      %v445 = vld [vmem:[#allocation2 + $0x31] sm:$0xff]
      %v446 = vld [vmem:[#allocation2 + $0x39] sm:$0xff]
      %v447 = vld [vmem:[#allocation2 + $0x49] sm:$0xff]
      %v448 = vld [vmem:[#allocation2 + $0x51] sm:$0xff]
      %v449 = vld [vmem:[#allocation2 + $0x61] sm:$0xff]
      %v450 = vld [vmem:[#allocation2 + $0x69] sm:$0xff]
      %v451 = vld [vmem:[#allocation2 + $0x79] sm:$0xff]
      %v452 = vld [vmem:[#allocation2 + $0x81] sm:$0xff]
      %v453 = vld [vmem:[#allocation2 + $0x91] sm:$0xff]
      %v454 = vld [vmem:[#allocation2 + $0x99] sm:$0xff]
      %v455 = vld [vmem:[#allocation2 + $0xa9] sm:$0xff]
      %v456 = vld [vmem:[#allocation2 + $0xb1] sm:$0xff]
      %v457 = vld [vmem:[#allocation2 + $0xc1] sm:$0xff]
      %v458 = vld [vmem:[#allocation2 + $0xc9] sm:$0xff]
      %v459 = vld [vmem:[#allocation2 + $0xd9] sm:$0xff]
      %v460 = vld [vmem:[#allocation2 + $0xe1] sm:$0xff]
      %v461 = vld [vmem:[#allocation2 + $0xf1] sm:$0xff]
      %v462 = vld [vmem:[#allocation2 + $0xf9] sm:$0xff]
      %v463 = vld [vmem:[#allocation2 + $0x109] sm:$0xff]
      %v464 = vld [vmem:[#allocation2 + $0x111] sm:$0xff]
      %v465 = vld [vmem:[#allocation2 + $0x121] sm:$0xff]
      %v466 = vld [vmem:[#allocation2 + $0x129] sm:$0xff]
      %v467 = vld [vmem:[#allocation2 + $0x139] sm:$0xff]
      %v468 = vld [vmem:[#allocation2 + $0x141] sm:$0xff]
      %v469 = vld [vmem:[#allocation2 + $0x151] sm:$0xff]
      %v470 = vld [vmem:[#allocation2 + $0x159] sm:$0xff]
      %v471 = vld [vmem:[#allocation2 + $0x169] sm:$0xff]
      %v472 = vld [vmem:[#allocation2 + $0x171] sm:$0xff]
      %v474 = vsel %vm279, %v441, 0
      %v477 = vsel %vm279, %v442, 0
      %v480 = vsel %vm279, %v443, 0
      %v483 = vsel %vm279, %v444, 0
      %v486 = vsel %vm279, %v445, 0
      %v489 = vsel %vm279, %v446, 0
      %v492 = vsel %vm279, %v447, 0
      %v495 = vsel %vm279, %v448, 0
      %v498 = vsel %vm279, %v449, 0
      %v501 = vsel %vm279, %v450, 0
      %v504 = vsel %vm279, %v451, 0
      %v507 = vsel %vm279, %v452, 0
      %v510 = vsel %vm279, %v453, 0
      %v513 = vsel %vm279, %v454, 0
      %v516 = vsel %vm279, %v455, 0
      %v519 = vsel %vm279, %v456, 0
      %v522 = vsel %vm279, %v457, 0
      %v525 = vsel %vm279, %v458, 0
      %v528 = vsel %vm279, %v459, 0
      %v531 = vsel %vm279, %v460, 0
      %v534 = vsel %vm279, %v461, 0
      %v537 = vsel %vm279, %v462, 0
      %v540 = vsel %vm279, %v463, 0
      %v543 = vsel %vm279, %v464, 0
      %v546 = vsel %vm279, %v465, 0
      %v549 = vsel %vm279, %v466, 0
      %v552 = vsel %vm279, %v467, 0
      %v555 = vsel %vm279, %v468, 0
      %v558 = vsel %vm279, %v469, 0
      %v561 = vsel %vm279, %v470, 0
      %v564 = vsel %vm279, %v471, 0
      %v567 = vsel %vm279, %v472, 0
      %vm569 = vcmask 1040384
      %v571 = vsel %vm569, %v401, 0
      %573 = vmatprep.subr.mxu0 0.0
      %574 = vmatpush1.msra.mxu0 %v571
      %575 = vmatprep.subr.mxu0 0.0
      %576 = vmatpush1.msra.mxu0 0.0
      %577 = vmatprep.subr.mxu0 0.0
      %578 = vmatpush1.msra.mxu0 0.0
      %579 = vmatprep.subr.mxu0 0.0
      %580 = vmatpush1.msra.mxu0 0.0
      %581 = vmatprep.subr.mxu0 0.0
      %582 = vmatpush1.msra.mxu0 0.0
      %583 = vmatprep.subr.mxu0 0.0
      %584 = vmatpush1.msra.mxu0 0.0
      %585 = vmatprep.subr.mxu0 0.0
      %586 = vmatpush1.msra.mxu0 0.0
      %587 = vmatprep.subr.mxu0 0.0
      %588 = vmatpush1.msra.mxu0 0.0
      %589 = vmatprep.subr.mxu0 0.0
      %590 = vmatpush1.msra.mxu0 0.0
      %591 = vmatprep.subr.mxu0 0.0
      %592 = vmatpush1.msra.mxu0 0.0
      %593 = vmatprep.subr.mxu0 0.0
      %594 = vmatpush1.msra.mxu0 0.0
      %595 = vmatprep.subr.mxu0 0.0
      %596 = vmatpush1.msra.mxu0 0.0
      %597 = vmatprep.subr.mxu0 0.0
      %598 = vmatpush1.msra.mxu0 0.0
      %599 = vmatprep.subr.mxu0 0.0
      %600 = vmatpush1.msra.mxu0 0.0
      %601 = vmatprep.subr.mxu0 0.0
      %602 = vmatpush1.msra.mxu0 0.0
      %603 = vmatprep.subr.mxu0 0.0
      %604 = vmatpush1.msra.mxu0 0.0
      %605 = vmatprep.subr.mxu0 0.0
      %606 = vmatpush1.msra.mxu0 0.0
      %607 = vmatprep.subr.mxu0 0.0
      %608 = vmatpush1.msra.mxu0 0.0
      %609 = vmatprep.subr.mxu0 0.0
      %610 = vmatpush1.msra.mxu0 0.0
      %611 = vmatprep.subr.mxu0 0.0
      %612 = vmatpush1.msra.mxu0 0.0
      %613 = vmatprep.subr.mxu0 0.0
      %614 = vmatpush1.msra.mxu0 0.0
      %615 = vmatprep.subr.mxu0 0.0
      %616 = vmatpush1.msra.mxu0 0.0
      %617 = vmatprep.subr.mxu0 0.0
      %618 = vmatpush1.msra.mxu0 0.0
      %619 = vmatprep.subr.mxu0 0.0
      %620 = vmatpush1.msra.mxu0 0.0
      %621 = vmatprep.subr.mxu0 0.0
      %622 = vmatpush1.msra.mxu0 0.0
      %623 = vmatprep.subr.mxu0 0.0
      %624 = vmatpush1.msra.mxu0 0.0
      %625 = vmatprep.subr.mxu0 0.0
      %626 = vmatpush1.msra.mxu0 0.0
      %627 = vmatprep.subr.mxu0 0.0
      %628 = vmatpush1.msra.mxu0 0.0
      %629 = vmatprep.subr.mxu0 0.0
      %630 = vmatpush1.msra.mxu0 0.0
      %631 = vmatprep.subr.mxu0 0.0
      %632 = vmatpush1.msra.mxu0 0.0
      %633 = vmatprep.subr.mxu0 0.0
      %634 = vmatpush1.msra.mxu0 0.0
      %635 = vmatprep.subr.mxu0 0.0
      %636 = vmatpush1.msra.mxu0 0.0
      %637 = vmatprep.mubr.f32.mxu0 0.0
      %638 = vmatmul.mubr.f32.gmra.mrb[0].mxu0 %v474
      %v639 = vpop.f32.mrb[0].mxu0
      %v640 = vadd.f32 0.0, %v639
      %v641 = vpop.f32.mrb[0].mxu0
      %642 = vmatprep.mubr.f32.mxu0 0.0
      %643 = vmatmul.mubr.f32.gmra.mrb[0].mxu0 %v477
      %v644 = vpop.f32.mrb[0].mxu0
      %v645 = vadd.f32 0.0, %v644
      %v646 = vpop.f32.mrb[0].mxu0
      %647 = vmatprep.mubr.f32.mxu0 0.0
      %648 = vmatmul.mubr.f32.gmra.mrb[0].mxu0 %v480
      %v649 = vpop.f32.mrb[0].mxu0
      %v650 = vadd.f32 0.0, %v649
      %v651 = vpop.f32.mrb[0].mxu0
      %652 = vmatprep.mubr.f32.mxu0 0.0
      %653 = vmatmul.mubr.f32.gmra.mrb[0].mxu0 %v483
      %v654 = vpop.f32.mrb[0].mxu0
      %v655 = vadd.f32 0.0, %v654
      %v656 = vpop.f32.mrb[0].mxu0
      %657 = vmatprep.mubr.f32.mxu0 0.0
      %658 = vmatmul.mubr.f32.gmra.mrb[0].mxu0 %v486
      %v659 = vpop.f32.mrb[0].mxu0
      %v660 = vadd.f32 0.0, %v659
      %v661 = vpop.f32.mrb[0].mxu0
      %662 = vmatprep.mubr.f32.mxu0 0.0
      %663 = vmatmul.mubr.f32.gmra.mrb[0].mxu0 %v489
      %v664 = vpop.f32.mrb[0].mxu0
      %v665 = vadd.f32 0.0, %v664
      %v666 = vpop.f32.mrb[0].mxu0
      %667 = vmatprep.mubr.f32.mxu0 0.0
      %668 = vmatmul.mubr.f32.gmra.mrb[0].mxu0 %v492
      %v669 = vpop.f32.mrb[0].mxu0
      %v670 = vadd.f32 0.0, %v669
      %v671 = vpop.f32.mrb[0].mxu0
      %672 = vmatprep.mubr.f32.mxu0 0.0
      %673 = vmatmul.mubr.f32.gmra.mrb[0].mxu0 %v495
      %v674 = vpop.f32.mrb[0].mxu0
      %v675 = vadd.f32 0.0, %v674
      %v676 = vpop.f32.mrb[0].mxu0
      %677 = vmatprep.mubr.f32.mxu0 0.0
      %678 = vmatmul.mubr.f32.gmra.mrb[0].mxu0 %v498
      %v679 = vpop.f32.mrb[0].mxu0
      %v680 = vadd.f32 0.0, %v679
      %v681 = vpop.f32.mrb[0].mxu0
      %682 = vmatprep.mubr.f32.mxu0 0.0
      %683 = vmatmul.mubr.f32.gmra.mrb[0].mxu0 %v501
      %v684 = vpop.f32.mrb[0].mxu0
      %v685 = vadd.f32 0.0, %v684
      %v686 = vpop.f32.mrb[0].mxu0
      %687 = vmatprep.mubr.f32.mxu0 0.0
      %688 = vmatmul.mubr.f32.gmra.mrb[0].mxu0 %v504
      %v689 = vpop.f32.mrb[0].mxu0
      %v690 = vadd.f32 0.0, %v689
      %v691 = vpop.f32.mrb[0].mxu0
      %692 = vmatprep.mubr.f32.mxu0 0.0
      %693 = vmatmul.mubr.f32.gmra.mrb[0].mxu0 %v507
      %v694 = vpop.f32.mrb[0].mxu0
      %v695 = vadd.f32 0.0, %v694
      %v696 = vpop.f32.mrb[0].mxu0
      %697 = vmatprep.mubr.f32.mxu0 0.0
      %698 = vmatmul.mubr.f32.gmra.mrb[0].mxu0 %v510
      %v699 = vpop.f32.mrb[0].mxu0
      %v700 = vadd.f32 0.0, %v699
      %v701 = vpop.f32.mrb[0].mxu0
      %702 = vmatprep.mubr.f32.mxu0 0.0
      %703 = vmatmul.mubr.f32.gmra.mrb[0].mxu0 %v513
      %v704 = vpop.f32.mrb[0].mxu0
      %v705 = vadd.f32 0.0, %v704
      %v706 = vpop.f32.mrb[0].mxu0
      %707 = vmatprep.mubr.f32.mxu0 0.0
      %708 = vmatmul.mubr.f32.gmra.mrb[0].mxu0 %v516
      %v709 = vpop.f32.mrb[0].mxu0
      %v710 = vadd.f32 0.0, %v709
      %v711 = vpop.f32.mrb[0].mxu0
      %712 = vmatprep.mubr.f32.mxu0 0.0
      %713 = vmatmul.mubr.f32.gmra.mrb[0].mxu0 %v519
      %v714 = vpop.f32.mrb[0].mxu0
      %v715 = vadd.f32 0.0, %v714
      %v716 = vpop.f32.mrb[0].mxu0
      %717 = vmatprep.mubr.f32.mxu0 0.0
      %718 = vmatmul.mubr.f32.gmra.mrb[0].mxu0 %v522
      %v719 = vpop.f32.mrb[0].mxu0
      %v720 = vadd.f32 0.0, %v719
      %v721 = vpop.f32.mrb[0].mxu0
      %722 = vmatprep.mubr.f32.mxu0 0.0
      %723 = vmatmul.mubr.f32.gmra.mrb[0].mxu0 %v525
      %v724 = vpop.f32.mrb[0].mxu0
      %v725 = vadd.f32 0.0, %v724
      %v726 = vpop.f32.mrb[0].mxu0
      %727 = vmatprep.mubr.f32.mxu0 0.0
      %728 = vmatmul.mubr.f32.gmra.mrb[0].mxu0 %v528
      %v729 = vpop.f32.mrb[0].mxu0
      %v730 = vadd.f32 0.0, %v729
      %v731 = vpop.f32.mrb[0].mxu0
      %732 = vmatprep.mubr.f32.mxu0 0.0
      %733 = vmatmul.mubr.f32.gmra.mrb[0].mxu0 %v531
      %v734 = vpop.f32.mrb[0].mxu0
      %v735 = vadd.f32 0.0, %v734
      %v736 = vpop.f32.mrb[0].mxu0
      %737 = vmatprep.mubr.f32.mxu0 0.0
      %738 = vmatmul.mubr.f32.gmra.mrb[0].mxu0 %v534
      %v739 = vpop.f32.mrb[0].mxu0
      %v740 = vadd.f32 0.0, %v739
      %v741 = vpop.f32.mrb[0].mxu0
      %742 = vmatprep.mubr.f32.mxu0 0.0
      %743 = vmatmul.mubr.f32.gmra.mrb[0].mxu0 %v537
      %v744 = vpop.f32.mrb[0].mxu0
      %v745 = vadd.f32 0.0, %v744
      %v746 = vpop.f32.mrb[0].mxu0
      %747 = vmatprep.mubr.f32.mxu0 0.0
      %748 = vmatmul.mubr.f32.gmra.mrb[0].mxu0 %v540
      %v749 = vpop.f32.mrb[0].mxu0
      %v750 = vadd.f32 0.0, %v749
      %v751 = vpop.f32.mrb[0].mxu0
      %752 = vmatprep.mubr.f32.mxu0 0.0
      %753 = vmatmul.mubr.f32.gmra.mrb[0].mxu0 %v543
      %v754 = vpop.f32.mrb[0].mxu0
      %v755 = vadd.f32 0.0, %v754
      %v756 = vpop.f32.mrb[0].mxu0
      %757 = vmatprep.mubr.f32.mxu0 0.0
      %758 = vmatmul.mubr.f32.gmra.mrb[0].mxu0 %v546
      %v759 = vpop.f32.mrb[0].mxu0
      %v760 = vadd.f32 0.0, %v759
      %v761 = vpop.f32.mrb[0].mxu0
      %762 = vmatprep.mubr.f32.mxu0 0.0
      %763 = vmatmul.mubr.f32.gmra.mrb[0].mxu0 %v549
      %v764 = vpop.f32.mrb[0].mxu0
      %v765 = vadd.f32 0.0, %v764
      %v766 = vpop.f32.mrb[0].mxu0
      %767 = vmatprep.mubr.f32.mxu0 0.0
      %768 = vmatmul.mubr.f32.gmra.mrb[0].mxu0 %v552
      %v769 = vpop.f32.mrb[0].mxu0
      %v770 = vadd.f32 0.0, %v769
      %v771 = vpop.f32.mrb[0].mxu0
      %772 = vmatprep.mubr.f32.mxu0 0.0
      %773 = vmatmul.mubr.f32.gmra.mrb[0].mxu0 %v555
      %v774 = vpop.f32.mrb[0].mxu0
      %v775 = vadd.f32 0.0, %v774
      %v776 = vpop.f32.mrb[0].mxu0
      %777 = vmatprep.mubr.f32.mxu0 0.0
      %778 = vmatmul.mubr.f32.gmra.mrb[0].mxu0 %v558
      %v779 = vpop.f32.mrb[0].mxu0
      %v780 = vadd.f32 0.0, %v779
      %v781 = vpop.f32.mrb[0].mxu0
      %782 = vmatprep.mubr.f32.mxu0 0.0
      %783 = vmatmul.mubr.f32.gmra.mrb[0].mxu0 %v561
      %v784 = vpop.f32.mrb[0].mxu0
      %v785 = vadd.f32 0.0, %v784
      %v786 = vpop.f32.mrb[0].mxu0
      %787 = vmatprep.mubr.f32.mxu0 0.0
      %788 = vmatmul.mubr.f32.gmra.mrb[0].mxu0 %v564
      %v789 = vpop.f32.mrb[0].mxu0
      %v790 = vadd.f32 0.0, %v789
      %v791 = vpop.f32.mrb[0].mxu0
      %792 = vmatprep.mubr.f32.mxu0 0.0
      %793 = vmatmul.mubr.f32.gmra.mrb[0].mxu0 %v567
      %v794 = vpop.f32.mrb[0].mxu0
      %v795 = vadd.f32 0.0, %v794
      %v796 = vpop.f32.mrb[0].mxu0
      %797 = vdwg.mxu0
      %v799 = vsel %vm279, %v409, 0
      %v802 = vsel %vm279, %v410, 0
      %v805 = vsel %vm279, %v411, 0
      %v808 = vsel %vm279, %v412, 0
      %v811 = vsel %vm279, %v413, 0
      %v814 = vsel %vm279, %v414, 0
      %v817 = vsel %vm279, %v415, 0
      %v820 = vsel %vm279, %v416, 0
      %v823 = vsel %vm279, %v417, 0
      %v826 = vsel %vm279, %v418, 0
      %v829 = vsel %vm279, %v419, 0
      %v832 = vsel %vm279, %v420, 0
      %v835 = vsel %vm279, %v421, 0
      %v838 = vsel %vm279, %v422, 0
      %v841 = vsel %vm279, %v423, 0
      %v844 = vsel %vm279, %v424, 0
      %v847 = vsel %vm279, %v425, 0
      %v850 = vsel %vm279, %v426, 0
      %v853 = vsel %vm279, %v427, 0
      %v856 = vsel %vm279, %v428, 0
      %v859 = vsel %vm279, %v429, 0
      %v862 = vsel %vm279, %v430, 0
      %v865 = vsel %vm279, %v431, 0
      %v868 = vsel %vm279, %v432, 0
      %v871 = vsel %vm279, %v433, 0
      %v874 = vsel %vm279, %v434, 0
      %v877 = vsel %vm279, %v435, 0
      %v880 = vsel %vm279, %v436, 0
      %v883 = vsel %vm279, %v437, 0
      %v886 = vsel %vm279, %v438, 0
      %v889 = vsel %vm279, %v439, 0
      %v892 = vsel %vm279, %v440, 0
      %v895 = vsel %vm569, %v400, 0
      %897 = vmatprep.subr.mxu0 0.0
      %898 = vmatpush1.msra.mxu0 %v895
      %899 = vmatprep.subr.mxu0 0.0
      %900 = vmatpush1.msra.mxu0 0.0
      %901 = vmatprep.subr.mxu0 0.0
      %902 = vmatpush1.msra.mxu0 0.0
      %903 = vmatprep.subr.mxu0 0.0
      %904 = vmatpush1.msra.mxu0 0.0
      %905 = vmatprep.subr.mxu0 0.0
      %906 = vmatpush1.msra.mxu0 0.0
      %907 = vmatprep.subr.mxu0 0.0
      %908 = vmatpush1.msra.mxu0 0.0
      %909 = vmatprep.subr.mxu0 0.0
      %910 = vmatpush1.msra.mxu0 0.0
      %911 = vmatprep.subr.mxu0 0.0
      %912 = vmatpush1.msra.mxu0 0.0
      %913 = vmatprep.subr.mxu0 0.0
      %914 = vmatpush1.msra.mxu0 0.0
      %915 = vmatprep.subr.mxu0 0.0
      %916 = vmatpush1.msra.mxu0 0.0
      %917 = vmatprep.subr.mxu0 0.0
      %918 = vmatpush1.msra.mxu0 0.0
      %919 = vmatprep.subr.mxu0 0.0
      %920 = vmatpush1.msra.mxu0 0.0
      %921 = vmatprep.subr.mxu0 0.0
      %922 = vmatpush1.msra.mxu0 0.0
      %923 = vmatprep.subr.mxu0 0.0
      %924 = vmatpush1.msra.mxu0 0.0
      %925 = vmatprep.subr.mxu0 0.0
      %926 = vmatpush1.msra.mxu0 0.0
      %927 = vmatprep.subr.mxu0 0.0
      %928 = vmatpush1.msra.mxu0 0.0
      %929 = vmatprep.subr.mxu0 0.0
      %930 = vmatpush1.msra.mxu0 0.0
      %931 = vmatprep.subr.mxu0 0.0
      %932 = vmatpush1.msra.mxu0 0.0
      %933 = vmatprep.subr.mxu0 0.0
      %934 = vmatpush1.msra.mxu0 0.0
      %935 = vmatprep.subr.mxu0 0.0
      %936 = vmatpush1.msra.mxu0 0.0
      %937 = vmatprep.subr.mxu0 0.0
      %938 = vmatpush1.msra.mxu0 0.0
      %939 = vmatprep.subr.mxu0 0.0
      %940 = vmatpush1.msra.mxu0 0.0
      %941 = vmatprep.subr.mxu0 0.0
      %942 = vmatpush1.msra.mxu0 0.0
      %943 = vmatprep.subr.mxu0 0.0
      %944 = vmatpush1.msra.mxu0 0.0
      %945 = vmatprep.subr.mxu0 0.0
      %946 = vmatpush1.msra.mxu0 0.0
      %947 = vmatprep.subr.mxu0 0.0
      %948 = vmatpush1.msra.mxu0 0.0
      %949 = vmatprep.subr.mxu0 0.0
      %950 = vmatpush1.msra.mxu0 0.0
      %951 = vmatprep.subr.mxu0 0.0
      %952 = vmatpush1.msra.mxu0 0.0
      %953 = vmatprep.subr.mxu0 0.0
      %954 = vmatpush1.msra.mxu0 0.0
      %955 = vmatprep.subr.mxu0 0.0
      %956 = vmatpush1.msra.mxu0 0.0
      %957 = vmatprep.subr.mxu0 0.0
      %958 = vmatpush1.msra.mxu0 0.0
      %959 = vmatprep.subr.mxu0 0.0
      %960 = vmatpush1.msra.mxu0 0.0
      %961 = vmatprep.mubr.f32.mxu0 0.0
      %962 = vmatmul.mubr.f32.gmra.mrb[0].mxu0 %v799
      %v963 = vpop.f32.mrb[0].mxu0
      %v964 = vadd.f32 %v640, %v963
      %v965 = vpop.f32.mrb[0].mxu0
      %966 = vmatprep.mubr.f32.mxu0 0.0
      %967 = vmatmul.mubr.f32.gmra.mrb[0].mxu0 %v802
      %v968 = vpop.f32.mrb[0].mxu0
      %v969 = vadd.f32 %v645, %v968
      %v970 = vpop.f32.mrb[0].mxu0
      %971 = vmatprep.mubr.f32.mxu0 0.0
      %972 = vmatmul.mubr.f32.gmra.mrb[0].mxu0 %v805
      %v973 = vpop.f32.mrb[0].mxu0
      %v974 = vadd.f32 %v650, %v973
      %v975 = vpop.f32.mrb[0].mxu0
      %976 = vmatprep.mubr.f32.mxu0 0.0
      %977 = vmatmul.mubr.f32.gmra.mrb[0].mxu0 %v808
      %v978 = vpop.f32.mrb[0].mxu0
      %v979 = vadd.f32 %v655, %v978
      %v980 = vpop.f32.mrb[0].mxu0
      %981 = vmatprep.mubr.f32.mxu0 0.0
      %982 = vmatmul.mubr.f32.gmra.mrb[0].mxu0 %v811
      %v983 = vpop.f32.mrb[0].mxu0
      %v984 = vadd.f32 %v660, %v983
      %v985 = vpop.f32.mrb[0].mxu0
      %986 = vmatprep.mubr.f32.mxu0 0.0
      %987 = vmatmul.mubr.f32.gmra.mrb[0].mxu0 %v814
      %v988 = vpop.f32.mrb[0].mxu0
      %v989 = vadd.f32 %v665, %v988
      %v990 = vpop.f32.mrb[0].mxu0
      %991 = vmatprep.mubr.f32.mxu0 0.0
      %992 = vmatmul.mubr.f32.gmra.mrb[0].mxu0 %v817
      %v993 = vpop.f32.mrb[0].mxu0
      %v994 = vadd.f32 %v670, %v993
      %v995 = vpop.f32.mrb[0].mxu0
      %996 = vmatprep.mubr.f32.mxu0 0.0
      %997 = vmatmul.mubr.f32.gmra.mrb[0].mxu0 %v820
      %v998 = vpop.f32.mrb[0].mxu0
      %v999 = vadd.f32 %v675, %v998
      %v1000 = vpop.f32.mrb[0].mxu0
      %1001 = vmatprep.mubr.f32.mxu0 0.0
      %1002 = vmatmul.mubr.f32.gmra.mrb[0].mxu0 %v823
      %v1003 = vpop.f32.mrb[0].mxu0
      %v1004 = vadd.f32 %v680, %v1003
      %v1005 = vpop.f32.mrb[0].mxu0
      %1006 = vmatprep.mubr.f32.mxu0 0.0
      %1007 = vmatmul.mubr.f32.gmra.mrb[0].mxu0 %v826
      %v1008 = vpop.f32.mrb[0].mxu0
      %v1009 = vadd.f32 %v685, %v1008
      %v1010 = vpop.f32.mrb[0].mxu0
      %1011 = vmatprep.mubr.f32.mxu0 0.0
      %1012 = vmatmul.mubr.f32.gmra.mrb[0].mxu0 %v829
      %v1013 = vpop.f32.mrb[0].mxu0
      %v1014 = vadd.f32 %v690, %v1013
      %v1015 = vpop.f32.mrb[0].mxu0
      %1016 = vmatprep.mubr.f32.mxu0 0.0
      %1017 = vmatmul.mubr.f32.gmra.mrb[0].mxu0 %v832
      %v1018 = vpop.f32.mrb[0].mxu0
      %v1019 = vadd.f32 %v695, %v1018
      %v1020 = vpop.f32.mrb[0].mxu0
      %1021 = vmatprep.mubr.f32.mxu0 0.0
      %1022 = vmatmul.mubr.f32.gmra.mrb[0].mxu0 %v835
      %v1023 = vpop.f32.mrb[0].mxu0
      %v1024 = vadd.f32 %v700, %v1023
      %v1025 = vpop.f32.mrb[0].mxu0
      %1026 = vmatprep.mubr.f32.mxu0 0.0
      %1027 = vmatmul.mubr.f32.gmra.mrb[0].mxu0 %v838
      %v1028 = vpop.f32.mrb[0].mxu0
      %v1029 = vadd.f32 %v705, %v1028
      %v1030 = vpop.f32.mrb[0].mxu0
      %1031 = vmatprep.mubr.f32.mxu0 0.0
      %1032 = vmatmul.mubr.f32.gmra.mrb[0].mxu0 %v841
      %v1033 = vpop.f32.mrb[0].mxu0
      %v1034 = vadd.f32 %v710, %v1033
      %v1035 = vpop.f32.mrb[0].mxu0
      %1036 = vmatprep.mubr.f32.mxu0 0.0
      %1037 = vmatmul.mubr.f32.gmra.mrb[0].mxu0 %v844
      %v1038 = vpop.f32.mrb[0].mxu0
      %v1039 = vadd.f32 %v715, %v1038
      %v1040 = vpop.f32.mrb[0].mxu0
      %1041 = vmatprep.mubr.f32.mxu0 0.0
      %1042 = vmatmul.mubr.f32.gmra.mrb[0].mxu0 %v847
      %v1043 = vpop.f32.mrb[0].mxu0
      %v1044 = vadd.f32 %v720, %v1043
      %v1045 = vpop.f32.mrb[0].mxu0
      %1046 = vmatprep.mubr.f32.mxu0 0.0
      %1047 = vmatmul.mubr.f32.gmra.mrb[0].mxu0 %v850
      %v1048 = vpop.f32.mrb[0].mxu0
      %v1049 = vadd.f32 %v725, %v1048
      %v1050 = vpop.f32.mrb[0].mxu0
      %1051 = vmatprep.mubr.f32.mxu0 0.0
      %1052 = vmatmul.mubr.f32.gmra.mrb[0].mxu0 %v853
      %v1053 = vpop.f32.mrb[0].mxu0
      %v1054 = vadd.f32 %v730, %v1053
      %v1055 = vpop.f32.mrb[0].mxu0
      %1056 = vmatprep.mubr.f32.mxu0 0.0
      %1057 = vmatmul.mubr.f32.gmra.mrb[0].mxu0 %v856
      %v1058 = vpop.f32.mrb[0].mxu0
      %v1059 = vadd.f32 %v735, %v1058
      %v1060 = vpop.f32.mrb[0].mxu0
      %1061 = vmatprep.mubr.f32.mxu0 0.0
      %1062 = vmatmul.mubr.f32.gmra.mrb[0].mxu0 %v859
      %v1063 = vpop.f32.mrb[0].mxu0
      %v1064 = vadd.f32 %v740, %v1063
      %v1065 = vpop.f32.mrb[0].mxu0
      %1066 = vmatprep.mubr.f32.mxu0 0.0
      %1067 = vmatmul.mubr.f32.gmra.mrb[0].mxu0 %v862
      %v1068 = vpop.f32.mrb[0].mxu0
      %v1069 = vadd.f32 %v745, %v1068
      %v1070 = vpop.f32.mrb[0].mxu0
      %1071 = vmatprep.mubr.f32.mxu0 0.0
      %1072 = vmatmul.mubr.f32.gmra.mrb[0].mxu0 %v865
      %v1073 = vpop.f32.mrb[0].mxu0
      %v1074 = vadd.f32 %v750, %v1073
      %v1075 = vpop.f32.mrb[0].mxu0
      %1076 = vmatprep.mubr.f32.mxu0 0.0
      %1077 = vmatmul.mubr.f32.gmra.mrb[0].mxu0 %v868
      %v1078 = vpop.f32.mrb[0].mxu0
      %v1079 = vadd.f32 %v755, %v1078
      %v1080 = vpop.f32.mrb[0].mxu0
      %1081 = vmatprep.mubr.f32.mxu0 0.0
      %1082 = vmatmul.mubr.f32.gmra.mrb[0].mxu0 %v871
      %v1083 = vpop.f32.mrb[0].mxu0
      %v1084 = vadd.f32 %v760, %v1083
      %v1085 = vpop.f32.mrb[0].mxu0
      %1086 = vmatprep.mubr.f32.mxu0 0.0
      %1087 = vmatmul.mubr.f32.gmra.mrb[0].mxu0 %v874
      %v1088 = vpop.f32.mrb[0].mxu0
      %v1089 = vadd.f32 %v765, %v1088
      %v1090 = vpop.f32.mrb[0].mxu0
      %1091 = vmatprep.mubr.f32.mxu0 0.0
      %1092 = vmatmul.mubr.f32.gmra.mrb[0].mxu0 %v877
      %v1093 = vpop.f32.mrb[0].mxu0
      %v1094 = vadd.f32 %v770, %v1093
      %v1095 = vpop.f32.mrb[0].mxu0
      %1096 = vmatprep.mubr.f32.mxu0 0.0
      %1097 = vmatmul.mubr.f32.gmra.mrb[0].mxu0 %v880
      %v1098 = vpop.f32.mrb[0].mxu0
      %v1099 = vadd.f32 %v775, %v1098
      %v1100 = vpop.f32.mrb[0].mxu0
      %1101 = vmatprep.mubr.f32.mxu0 0.0
      %1102 = vmatmul.mubr.f32.gmra.mrb[0].mxu0 %v883
      %v1103 = vpop.f32.mrb[0].mxu0
      %v1104 = vadd.f32 %v780, %v1103
      %v1105 = vpop.f32.mrb[0].mxu0
      %1106 = vmatprep.mubr.f32.mxu0 0.0
      %1107 = vmatmul.mubr.f32.gmra.mrb[0].mxu0 %v886
      %v1108 = vpop.f32.mrb[0].mxu0
      %v1109 = vadd.f32 %v785, %v1108
      %v1110 = vpop.f32.mrb[0].mxu0
      %1111 = vmatprep.mubr.f32.mxu0 0.0
      %1112 = vmatmul.mubr.f32.gmra.mrb[0].mxu0 %v889
      %v1113 = vpop.f32.mrb[0].mxu0
      %v1114 = vadd.f32 %v790, %v1113
      %v1115 = vpop.f32.mrb[0].mxu0
      %1116 = vmatprep.mubr.f32.mxu0 0.0
      %1117 = vmatmul.mubr.f32.gmra.mrb[0].mxu0 %v892
      %v1118 = vpop.f32.mrb[0].mxu0
      %v1119 = vadd.f32 %v795, %v1118
      %v1120 = vpop.f32.mrb[0].mxu0
      %1121 = vdwg.mxu0
      %v1122 = vld [vmem:[#allocation2 + $0x2] sm:$0xff]
      %v1123 = vld [vmem:[#allocation2 + $0xa] sm:$0xff]
      %v1124 = vld [vmem:[#allocation2 + $0x1a] sm:$0xff]
      %v1125 = vld [vmem:[#allocation2 + $0x22] sm:$0xff]
      %v1126 = vld [vmem:[#allocation2 + $0x32] sm:$0xff]
      %v1127 = vld [vmem:[#allocation2 + $0x3a] sm:$0xff]
      %v1128 = vld [vmem:[#allocation2 + $0x4a] sm:$0xff]
      %v1129 = vld [vmem:[#allocation2 + $0x52] sm:$0xff]
      %v1130 = vld [vmem:[#allocation2 + $0x62] sm:$0xff]
      %v1131 = vld [vmem:[#allocation2 + $0x6a] sm:$0xff]
      %v1132 = vld [vmem:[#allocation2 + $0x7a] sm:$0xff]
      %v1133 = vld [vmem:[#allocation2 + $0x82] sm:$0xff]
      %v1134 = vld [vmem:[#allocation2 + $0x92] sm:$0xff]
      %v1135 = vld [vmem:[#allocation2 + $0x9a] sm:$0xff]
      %v1136 = vld [vmem:[#allocation2 + $0xaa] sm:$0xff]
      %v1137 = vld [vmem:[#allocation2 + $0xb2] sm:$0xff]
      %v1138 = vld [vmem:[#allocation2 + $0xc2] sm:$0xff]
      %v1139 = vld [vmem:[#allocation2 + $0xca] sm:$0xff]
      %v1140 = vld [vmem:[#allocation2 + $0xda] sm:$0xff]
      %v1141 = vld [vmem:[#allocation2 + $0xe2] sm:$0xff]
      %v1142 = vld [vmem:[#allocation2 + $0xf2] sm:$0xff]
      %v1143 = vld [vmem:[#allocation2 + $0xfa] sm:$0xff]
      %v1144 = vld [vmem:[#allocation2 + $0x10a] sm:$0xff]
      %v1145 = vld [vmem:[#allocation2 + $0x112] sm:$0xff]
      %v1146 = vld [vmem:[#allocation2 + $0x122] sm:$0xff]
      %v1147 = vld [vmem:[#allocation2 + $0x12a] sm:$0xff]
      %v1148 = vld [vmem:[#allocation2 + $0x13a] sm:$0xff]
      %v1149 = vld [vmem:[#allocation2 + $0x142] sm:$0xff]
      %v1150 = vld [vmem:[#allocation2 + $0x152] sm:$0xff]
      %v1151 = vld [vmem:[#allocation2 + $0x15a] sm:$0xff]
      %v1152 = vld [vmem:[#allocation2 + $0x16a] sm:$0xff]
      %v1153 = vld [vmem:[#allocation2 + $0x172] sm:$0xff]
      %v1155 = vsel %vm279, %v1122, 0
      %v1158 = vsel %vm279, %v1123, 0
      %v1161 = vsel %vm279, %v1124, 0
      %v1164 = vsel %vm279, %v1125, 0
      %v1167 = vsel %vm279, %v1126, 0
      %v1170 = vsel %vm279, %v1127, 0
      %v1173 = vsel %vm279, %v1128, 0
      %v1176 = vsel %vm279, %v1129, 0
      %v1179 = vsel %vm279, %v1130, 0
      %v1182 = vsel %vm279, %v1131, 0
      %v1185 = vsel %vm279, %v1132, 0
      %v1188 = vsel %vm279, %v1133, 0
      %v1191 = vsel %vm279, %v1134, 0
      %v1194 = vsel %vm279, %v1135, 0
      %v1197 = vsel %vm279, %v1136, 0
      %v1200 = vsel %vm279, %v1137, 0
      %v1203 = vsel %vm279, %v1138, 0
      %v1206 = vsel %vm279, %v1139, 0
      %v1209 = vsel %vm279, %v1140, 0
      %v1212 = vsel %vm279, %v1141, 0
      %v1215 = vsel %vm279, %v1142, 0
      %v1218 = vsel %vm279, %v1143, 0
      %v1221 = vsel %vm279, %v1144, 0
      %v1224 = vsel %vm279, %v1145, 0
      %v1227 = vsel %vm279, %v1146, 0
      %v1230 = vsel %vm279, %v1147, 0
      %v1233 = vsel %vm279, %v1148, 0
      %v1236 = vsel %vm279, %v1149, 0
      %v1239 = vsel %vm279, %v1150, 0
      %v1242 = vsel %vm279, %v1151, 0
      %v1245 = vsel %vm279, %v1152, 0
      %v1248 = vsel %vm279, %v1153, 0
      %v1251 = vsel %vm569, %v402, 0
      %1253 = vmatprep.subr.mxu0 0.0
      %1254 = vmatpush1.msra.mxu0 %v1251
      %1255 = vmatprep.subr.mxu0 0.0
      %1256 = vmatpush1.msra.mxu0 0.0
      %1257 = vmatprep.subr.mxu0 0.0
      %1258 = vmatpush1.msra.mxu0 0.0
      %1259 = vmatprep.subr.mxu0 0.0
      %1260 = vmatpush1.msra.mxu0 0.0
      %1261 = vmatprep.subr.mxu0 0.0
      %1262 = vmatpush1.msra.mxu0 0.0
      %1263 = vmatprep.subr.mxu0 0.0
      %1264 = vmatpush1.msra.mxu0 0.0
      %1265 = vmatprep.subr.mxu0 0.0
      %1266 = vmatpush1.msra.mxu0 0.0
      %1267 = vmatprep.subr.mxu0 0.0
      %1268 = vmatpush1.msra.mxu0 0.0
      %1269 = vmatprep.subr.mxu0 0.0
      %1270 = vmatpush1.msra.mxu0 0.0
      %1271 = vmatprep.subr.mxu0 0.0
      %1272 = vmatpush1.msra.mxu0 0.0
      %1273 = vmatprep.subr.mxu0 0.0
      %1274 = vmatpush1.msra.mxu0 0.0
      %1275 = vmatprep.subr.mxu0 0.0
      %1276 = vmatpush1.msra.mxu0 0.0
      %1277 = vmatprep.subr.mxu0 0.0
      %1278 = vmatpush1.msra.mxu0 0.0
      %1279 = vmatprep.subr.mxu0 0.0
      %1280 = vmatpush1.msra.mxu0 0.0
      %1281 = vmatprep.subr.mxu0 0.0
      %1282 = vmatpush1.msra.mxu0 0.0
      %1283 = vmatprep.subr.mxu0 0.0
      %1284 = vmatpush1.msra.mxu0 0.0
      %1285 = vmatprep.subr.mxu0 0.0
      %1286 = vmatpush1.msra.mxu0 0.0
      %1287 = vmatprep.subr.mxu0 0.0
      %1288 = vmatpush1.msra.mxu0 0.0
      %1289 = vmatprep.subr.mxu0 0.0
      %1290 = vmatpush1.msra.mxu0 0.0
      %1291 = vmatprep.subr.mxu0 0.0
      %1292 = vmatpush1.msra.mxu0 0.0
      %1293 = vmatprep.subr.mxu0 0.0
      %1294 = vmatpush1.msra.mxu0 0.0
      %1295 = vmatprep.subr.mxu0 0.0
      %1296 = vmatpush1.msra.mxu0 0.0
      %1297 = vmatprep.subr.mxu0 0.0
      %1298 = vmatpush1.msra.mxu0 0.0
      %1299 = vmatprep.subr.mxu0 0.0
      %1300 = vmatpush1.msra.mxu0 0.0
      %1301 = vmatprep.subr.mxu0 0.0
      %1302 = vmatpush1.msra.mxu0 0.0
      %1303 = vmatprep.subr.mxu0 0.0
      %1304 = vmatpush1.msra.mxu0 0.0
      %1305 = vmatprep.subr.mxu0 0.0
      %1306 = vmatpush1.msra.mxu0 0.0
      %1307 = vmatprep.subr.mxu0 0.0
      %1308 = vmatpush1.msra.mxu0 0.0
      %1309 = vmatprep.subr.mxu0 0.0
      %1310 = vmatpush1.msra.mxu0 0.0
      %1311 = vmatprep.subr.mxu0 0.0
      %1312 = vmatpush1.msra.mxu0 0.0
      %1313 = vmatprep.subr.mxu0 0.0
      %1314 = vmatpush1.msra.mxu0 0.0
      %1315 = vmatprep.subr.mxu0 0.0
      %1316 = vmatpush1.msra.mxu0 0.0
      %1317 = vmatprep.mubr.f32.mxu0 0.0
      %1318 = vmatmul.mubr.f32.gmra.mrb[0].mxu0 %v1155
      %v1319 = vpop.f32.mrb[0].mxu0
      %v1320 = vadd.f32 0.0, %v1319
      %v1321 = vpop.f32.mrb[0].mxu0
      %1322 = vmatprep.mubr.f32.mxu0 0.0
      %1323 = vmatmul.mubr.f32.gmra.mrb[0].mxu0 %v1158
      %v1324 = vpop.f32.mrb[0].mxu0
      %v1325 = vadd.f32 0.0, %v1324
      %v1326 = vpop.f32.mrb[0].mxu0
      %1327 = vmatprep.mubr.f32.mxu0 0.0
      %1328 = vmatmul.mubr.f32.gmra.mrb[0].mxu0 %v1161
      %v1329 = vpop.f32.mrb[0].mxu0
      %v1330 = vadd.f32 0.0, %v1329
      %v1331 = vpop.f32.mrb[0].mxu0
      %1332 = vmatprep.mubr.f32.mxu0 0.0
      %1333 = vmatmul.mubr.f32.gmra.mrb[0].mxu0 %v1164
      %v1334 = vpop.f32.mrb[0].mxu0
      %v1335 = vadd.f32 0.0, %v1334
      %v1336 = vpop.f32.mrb[0].mxu0
      %1337 = vmatprep.mubr.f32.mxu0 0.0
      %1338 = vmatmul.mubr.f32.gmra.mrb[0].mxu0 %v1167
      %v1339 = vpop.f32.mrb[0].mxu0
      %v1340 = vadd.f32 0.0, %v1339
      %v1341 = vpop.f32.mrb[0].mxu0
      %1342 = vmatprep.mubr.f32.mxu0 0.0
      %1343 = vmatmul.mubr.f32.gmra.mrb[0].mxu0 %v1170
      %v1344 = vpop.f32.mrb[0].mxu0
      %v1345 = vadd.f32 0.0, %v1344
      %v1346 = vpop.f32.mrb[0].mxu0
      %1347 = vmatprep.mubr.f32.mxu0 0.0
      %1348 = vmatmul.mubr.f32.gmra.mrb[0].mxu0 %v1173
      %v1349 = vpop.f32.mrb[0].mxu0
      %v1350 = vadd.f32 0.0, %v1349
      %v1351 = vpop.f32.mrb[0].mxu0
      %1352 = vmatprep.mubr.f32.mxu0 0.0
      %1353 = vmatmul.mubr.f32.gmra.mrb[0].mxu0 %v1176
      %v1354 = vpop.f32.mrb[0].mxu0
      %v1355 = vadd.f32 0.0, %v1354
      %v1356 = vpop.f32.mrb[0].mxu0
      %1357 = vmatprep.mubr.f32.mxu0 0.0
      %1358 = vmatmul.mubr.f32.gmra.mrb[0].mxu0 %v1179
      %v1359 = vpop.f32.mrb[0].mxu0
      %v1360 = vadd.f32 0.0, %v1359
      %v1361 = vpop.f32.mrb[0].mxu0
      %1362 = vmatprep.mubr.f32.mxu0 0.0
      %1363 = vmatmul.mubr.f32.gmra.mrb[0].mxu0 %v1182
      %v1364 = vpop.f32.mrb[0].mxu0
      %v1365 = vadd.f32 0.0, %v1364
      %v1366 = vpop.f32.mrb[0].mxu0
      %1367 = vmatprep.mubr.f32.mxu0 0.0
      %1368 = vmatmul.mubr.f32.gmra.mrb[0].mxu0 %v1185
      %v1369 = vpop.f32.mrb[0].mxu0
      %v1370 = vadd.f32 0.0, %v1369
      %v1371 = vpop.f32.mrb[0].mxu0
      %1372 = vmatprep.mubr.f32.mxu0 0.0
      %1373 = vmatmul.mubr.f32.gmra.mrb[0].mxu0 %v1188
      %v1374 = vpop.f32.mrb[0].mxu0
      %v1375 = vadd.f32 0.0, %v1374
      %v1376 = vpop.f32.mrb[0].mxu0
      %1377 = vmatprep.mubr.f32.mxu0 0.0
      %1378 = vmatmul.mubr.f32.gmra.mrb[0].mxu0 %v1191
      %v1379 = vpop.f32.mrb[0].mxu0
      %v1380 = vadd.f32 0.0, %v1379
      %v1381 = vpop.f32.mrb[0].mxu0
      %1382 = vmatprep.mubr.f32.mxu0 0.0
      %1383 = vmatmul.mubr.f32.gmra.mrb[0].mxu0 %v1194
      %v1384 = vpop.f32.mrb[0].mxu0
      %v1385 = vadd.f32 0.0, %v1384
      %v1386 = vpop.f32.mrb[0].mxu0
      %1387 = vmatprep.mubr.f32.mxu0 0.0
      %1388 = vmatmul.mubr.f32.gmra.mrb[0].mxu0 %v1197
      %v1389 = vpop.f32.mrb[0].mxu0
      %v1390 = vadd.f32 0.0, %v1389
      %v1391 = vpop.f32.mrb[0].mxu0
      %1392 = vmatprep.mubr.f32.mxu0 0.0
      %1393 = vmatmul.mubr.f32.gmra.mrb[0].mxu0 %v1200
      %v1394 = vpop.f32.mrb[0].mxu0
      %v1395 = vadd.f32 0.0, %v1394
      %v1396 = vpop.f32.mrb[0].mxu0
      %1397 = vmatprep.mubr.f32.mxu0 0.0
      %1398 = vmatmul.mubr.f32.gmra.mrb[0].mxu0 %v1203
      %v1399 = vpop.f32.mrb[0].mxu0
      %v1400 = vadd.f32 0.0, %v1399
      %v1401 = vpop.f32.mrb[0].mxu0
      %1402 = vmatprep.mubr.f32.mxu0 0.0
      %1403 = vmatmul.mubr.f32.gmra.mrb[0].mxu0 %v1206
      %v1404 = vpop.f32.mrb[0].mxu0
      %v1405 = vadd.f32 0.0, %v1404
      %v1406 = vpop.f32.mrb[0].mxu0
      %1407 = vmatprep.mubr.f32.mxu0 0.0
      %1408 = vmatmul.mubr.f32.gmra.mrb[0].mxu0 %v1209
      %v1409 = vpop.f32.mrb[0].mxu0
      %v1410 = vadd.f32 0.0, %v1409
      %v1411 = vpop.f32.mrb[0].mxu0
      %1412 = vmatprep.mubr.f32.mxu0 0.0
      %1413 = vmatmul.mubr.f32.gmra.mrb[0].mxu0 %v1212
      %v1414 = vpop.f32.mrb[0].mxu0
      %v1415 = vadd.f32 0.0, %v1414
      %v1416 = vpop.f32.mrb[0].mxu0
      %1417 = vmatprep.mubr.f32.mxu0 0.0
      %1418 = vmatmul.mubr.f32.gmra.mrb[0].mxu0 %v1215
      %v1419 = vpop.f32.mrb[0].mxu0
      %v1420 = vadd.f32 0.0, %v1419
      %v1421 = vpop.f32.mrb[0].mxu0
      %1422 = vmatprep.mubr.f32.mxu0 0.0
      %1423 = vmatmul.mubr.f32.gmra.mrb[0].mxu0 %v1218
      %v1424 = vpop.f32.mrb[0].mxu0
      %v1425 = vadd.f32 0.0, %v1424
      %v1426 = vpop.f32.mrb[0].mxu0
      %1427 = vmatprep.mubr.f32.mxu0 0.0
      %1428 = vmatmul.mubr.f32.gmra.mrb[0].mxu0 %v1221
      %v1429 = vpop.f32.mrb[0].mxu0
      %v1430 = vadd.f32 0.0, %v1429
      %v1431 = vpop.f32.mrb[0].mxu0
      %1432 = vmatprep.mubr.f32.mxu0 0.0
      %1433 = vmatmul.mubr.f32.gmra.mrb[0].mxu0 %v1224
      %v1434 = vpop.f32.mrb[0].mxu0
      %v1435 = vadd.f32 0.0, %v1434
      %v1436 = vpop.f32.mrb[0].mxu0
      %1437 = vmatprep.mubr.f32.mxu0 0.0
      %1438 = vmatmul.mubr.f32.gmra.mrb[0].mxu0 %v1227
      %v1439 = vpop.f32.mrb[0].mxu0
      %v1440 = vadd.f32 0.0, %v1439
      %v1441 = vpop.f32.mrb[0].mxu0
      %1442 = vmatprep.mubr.f32.mxu0 0.0
      %1443 = vmatmul.mubr.f32.gmra.mrb[0].mxu0 %v1230
      %v1444 = vpop.f32.mrb[0].mxu0
      %v1445 = vadd.f32 0.0, %v1444
      %v1446 = vpop.f32.mrb[0].mxu0
      %1447 = vmatprep.mubr.f32.mxu0 0.0
      %1448 = vmatmul.mubr.f32.gmra.mrb[0].mxu0 %v1233
      %v1449 = vpop.f32.mrb[0].mxu0
      %v1450 = vadd.f32 0.0, %v1449
      %v1451 = vpop.f32.mrb[0].mxu0
      %1452 = vmatprep.mubr.f32.mxu0 0.0
      %1453 = vmatmul.mubr.f32.gmra.mrb[0].mxu0 %v1236
      %v1454 = vpop.f32.mrb[0].mxu0
      %v1455 = vadd.f32 0.0, %v1454
      %v1456 = vpop.f32.mrb[0].mxu0
      %1457 = vmatprep.mubr.f32.mxu0 0.0
      %1458 = vmatmul.mubr.f32.gmra.mrb[0].mxu0 %v1239
      %v1459 = vpop.f32.mrb[0].mxu0
      %v1460 = vadd.f32 0.0, %v1459
      %v1461 = vpop.f32.mrb[0].mxu0
      %1462 = vmatprep.mubr.f32.mxu0 0.0
      %1463 = vmatmul.mubr.f32.gmra.mrb[0].mxu0 %v1242
      %v1464 = vpop.f32.mrb[0].mxu0
      %v1465 = vadd.f32 0.0, %v1464
      %v1466 = vpop.f32.mrb[0].mxu0
      %1467 = vmatprep.mubr.f32.mxu0 0.0
      %1468 = vmatmul.mubr.f32.gmra.mrb[0].mxu0 %v1245
      %v1469 = vpop.f32.mrb[0].mxu0
      %v1470 = vadd.f32 0.0, %v1469
      %v1471 = vpop.f32.mrb[0].mxu0
      %1472 = vmatprep.mubr.f32.mxu0 0.0
      %1473 = vmatmul.mubr.f32.gmra.mrb[0].mxu0 %v1248
      %v1474 = vpop.f32.mrb[0].mxu0
      %v1475 = vadd.f32 0.0, %v1474
      %v1476 = vpop.f32.mrb[0].mxu0
      %1477 = vdwg.mxu0
      %v1478 = vadd.f32 %v964, %v1320
      %v1479 = vadd.f32 %v969, %v1325
      %v1480 = vadd.f32 %v974, %v1330
      %v1481 = vadd.f32 %v979, %v1335
      %v1482 = vadd.f32 %v984, %v1340
      %v1483 = vadd.f32 %v989, %v1345
      %v1484 = vadd.f32 %v994, %v1350
      %v1485 = vadd.f32 %v999, %v1355
      %v1486 = vadd.f32 %v1004, %v1360
      %v1487 = vadd.f32 %v1009, %v1365
      %v1488 = vadd.f32 %v1014, %v1370
      %v1489 = vadd.f32 %v1019, %v1375
      %v1490 = vadd.f32 %v1024, %v1380
      %v1491 = vadd.f32 %v1029, %v1385
      %v1492 = vadd.f32 %v1034, %v1390
      %v1493 = vadd.f32 %v1039, %v1395
      %v1494 = vadd.f32 %v1044, %v1400
      %v1495 = vadd.f32 %v1049, %v1405
      %v1496 = vadd.f32 %v1054, %v1410
      %v1497 = vadd.f32 %v1059, %v1415
      %v1498 = vadd.f32 %v1064, %v1420
      %v1499 = vadd.f32 %v1069, %v1425
      %v1500 = vadd.f32 %v1074, %v1430
      %v1501 = vadd.f32 %v1079, %v1435
      %v1502 = vadd.f32 %v1084, %v1440
      %v1503 = vadd.f32 %v1089, %v1445
      %v1504 = vadd.f32 %v1094, %v1450
      %v1505 = vadd.f32 %v1099, %v1455
      %v1506 = vadd.f32 %v1104, %v1460
      %v1507 = vadd.f32 %v1109, %v1465
      %v1508 = vadd.f32 %v1114, %v1470
      %v1509 = vadd.f32 %v1119, %v1475
      %v1510 = vld [vmem:[%s367] sm:$0xff]
      %v1511 = vld [vmem:[%s367 + $0x8] sm:$0xff]
      %v1512 = vld [vmem:[%s367 + $0x18] sm:$0xff]
      %v1513 = vld [vmem:[%s367 + $0x20] sm:$0xff]
      %v1514 = vld [vmem:[%s367 + $0x30] sm:$0xff]
      %v1515 = vld [vmem:[%s367 + $0x38] sm:$0xff]
      %v1516 = vld [vmem:[%s367 + $0x48] sm:$0xff]
      %v1517 = vld [vmem:[%s367 + $0x50] sm:$0xff]
      %v1518 = vld [vmem:[%s367 + $0x60] sm:$0xff]
      %v1519 = vld [vmem:[%s367 + $0x68] sm:$0xff]
      %v1520 = vld [vmem:[%s367 + $0x78] sm:$0xff]
      %v1521 = vld [vmem:[%s367 + $0x80] sm:$0xff]
      %v1522 = vld [vmem:[%s367 + $0x90] sm:$0xff]
      %v1523 = vld [vmem:[%s367 + $0x98] sm:$0xff]
      %v1524 = vld [vmem:[%s367 + $0xa8] sm:$0xff]
      %v1525 = vld [vmem:[%s367 + $0xb0] sm:$0xff]
      %v1526 = vld [vmem:[%s367 + $0xc0] sm:$0xff]
      %v1527 = vld [vmem:[%s367 + $0xc8] sm:$0xff]
      %v1528 = vld [vmem:[%s367 + $0xd8] sm:$0xff]
      %v1529 = vld [vmem:[%s367 + $0xe0] sm:$0xff]
      %v1530 = vld [vmem:[%s367 + $0xf0] sm:$0xff]
      %v1531 = vld [vmem:[%s367 + $0xf8] sm:$0xff]
      %v1532 = vld [vmem:[%s367 + $0x108] sm:$0xff]
      %v1533 = vld [vmem:[%s367 + $0x110] sm:$0xff]
      %v1534 = vld [vmem:[%s367 + $0x120] sm:$0xff]
      %v1535 = vld [vmem:[%s367 + $0x128] sm:$0xff]
      %v1536 = vld [vmem:[%s367 + $0x138] sm:$0xff]
      %v1537 = vld [vmem:[%s367 + $0x140] sm:$0xff]
      %v1538 = vld [vmem:[%s367 + $0x150] sm:$0xff]
      %v1539 = vld [vmem:[%s367 + $0x158] sm:$0xff]
      %v1540 = vld [vmem:[%s367 + $0x168] sm:$0xff]
      %v1541 = vld [vmem:[%s367 + $0x170] sm:$0xff]
      %v1543 = vsel %vm279, %v1510, 0
      %v1546 = vsel %vm279, %v1511, 0
      %v1549 = vsel %vm279, %v1512, 0
      %v1552 = vsel %vm279, %v1513, 0
      %v1555 = vsel %vm279, %v1514, 0
      %v1558 = vsel %vm279, %v1515, 0
      %v1561 = vsel %vm279, %v1516, 0
      %v1564 = vsel %vm279, %v1517, 0
      %v1567 = vsel %vm279, %v1518, 0
      %v1570 = vsel %vm279, %v1519, 0
      %v1573 = vsel %vm279, %v1520, 0
      %v1576 = vsel %vm279, %v1521, 0
      %v1579 = vsel %vm279, %v1522, 0
      %v1582 = vsel %vm279, %v1523, 0
      %v1585 = vsel %vm279, %v1524, 0
      %v1588 = vsel %vm279, %v1525, 0
      %v1591 = vsel %vm279, %v1526, 0
      %v1594 = vsel %vm279, %v1527, 0
      %v1597 = vsel %vm279, %v1528, 0
      %v1600 = vsel %vm279, %v1529, 0
      %v1603 = vsel %vm279, %v1530, 0
      %v1606 = vsel %vm279, %v1531, 0
      %v1609 = vsel %vm279, %v1532, 0
      %v1612 = vsel %vm279, %v1533, 0
      %v1615 = vsel %vm279, %v1534, 0
      %v1618 = vsel %vm279, %v1535, 0
      %v1621 = vsel %vm279, %v1536, 0
      %v1624 = vsel %vm279, %v1537, 0
      %v1627 = vsel %vm279, %v1538, 0
      %v1630 = vsel %vm279, %v1539, 0
      %v1633 = vsel %vm279, %v1540, 0
      %v1636 = vsel %vm279, %v1541, 0
      %v1639 = vsel %vm569, %v403, 0
      %1641 = vmatprep.subr.mxu0 0.0
      %1642 = vmatpush1.msra.mxu0 %v1639
      %1643 = vmatprep.subr.mxu0 0.0
      %1644 = vmatpush1.msra.mxu0 0.0
      %1645 = vmatprep.subr.mxu0 0.0
      %1646 = vmatpush1.msra.mxu0 0.0
      %1647 = vmatprep.subr.mxu0 0.0
      %1648 = vmatpush1.msra.mxu0 0.0
      %1649 = vmatprep.subr.mxu0 0.0
      %1650 = vmatpush1.msra.mxu0 0.0
      %1651 = vmatprep.subr.mxu0 0.0
      %1652 = vmatpush1.msra.mxu0 0.0
      %1653 = vmatprep.subr.mxu0 0.0
      %1654 = vmatpush1.msra.mxu0 0.0
      %1655 = vmatprep.subr.mxu0 0.0
      %1656 = vmatpush1.msra.mxu0 0.0
      %1657 = vmatprep.subr.mxu0 0.0
      %1658 = vmatpush1.msra.mxu0 0.0
      %1659 = vmatprep.subr.mxu0 0.0
      %1660 = vmatpush1.msra.mxu0 0.0
      %1661 = vmatprep.subr.mxu0 0.0
      %1662 = vmatpush1.msra.mxu0 0.0
      %1663 = vmatprep.subr.mxu0 0.0
      %1664 = vmatpush1.msra.mxu0 0.0
      %1665 = vmatprep.subr.mxu0 0.0
      %1666 = vmatpush1.msra.mxu0 0.0
      %1667 = vmatprep.subr.mxu0 0.0
      %1668 = vmatpush1.msra.mxu0 0.0
      %1669 = vmatprep.subr.mxu0 0.0
      %1670 = vmatpush1.msra.mxu0 0.0
      %1671 = vmatprep.subr.mxu0 0.0
      %1672 = vmatpush1.msra.mxu0 0.0
      %1673 = vmatprep.subr.mxu0 0.0
      %1674 = vmatpush1.msra.mxu0 0.0
      %1675 = vmatprep.subr.mxu0 0.0
      %1676 = vmatpush1.msra.mxu0 0.0
      %1677 = vmatprep.subr.mxu0 0.0
      %1678 = vmatpush1.msra.mxu0 0.0
      %1679 = vmatprep.subr.mxu0 0.0
      %1680 = vmatpush1.msra.mxu0 0.0
      %1681 = vmatprep.subr.mxu0 0.0
      %1682 = vmatpush1.msra.mxu0 0.0
      %1683 = vmatprep.subr.mxu0 0.0
      %1684 = vmatpush1.msra.mxu0 0.0
      %1685 = vmatprep.subr.mxu0 0.0
      %1686 = vmatpush1.msra.mxu0 0.0
      %1687 = vmatprep.subr.mxu0 0.0
      %1688 = vmatpush1.msra.mxu0 0.0
      %1689 = vmatprep.subr.mxu0 0.0
      %1690 = vmatpush1.msra.mxu0 0.0
      %1691 = vmatprep.subr.mxu0 0.0
      %1692 = vmatpush1.msra.mxu0 0.0
      %1693 = vmatprep.subr.mxu0 0.0
      %1694 = vmatpush1.msra.mxu0 0.0
      %1695 = vmatprep.subr.mxu0 0.0
      %1696 = vmatpush1.msra.mxu0 0.0
      %1697 = vmatprep.subr.mxu0 0.0
      %1698 = vmatpush1.msra.mxu0 0.0
      %1699 = vmatprep.subr.mxu0 0.0
      %1700 = vmatpush1.msra.mxu0 0.0
      %1701 = vmatprep.subr.mxu0 0.0
      %1702 = vmatpush1.msra.mxu0 0.0
      %1703 = vmatprep.subr.mxu0 0.0
      %1704 = vmatpush1.msra.mxu0 0.0
      %1705 = vmatprep.mubr.f32.mxu0 0.0
      %1706 = vmatmul.mubr.f32.gmra.mrb[0].mxu0 %v1543
      %v1707 = vpop.f32.mrb[0].mxu0
      %v1708 = vadd.f32 0.0, %v1707
      %v1709 = vpop.f32.mrb[0].mxu0
      %1710 = vmatprep.mubr.f32.mxu0 0.0
      %1711 = vmatmul.mubr.f32.gmra.mrb[0].mxu0 %v1546
      %v1712 = vpop.f32.mrb[0].mxu0
      %v1713 = vadd.f32 0.0, %v1712
      %v1714 = vpop.f32.mrb[0].mxu0
      %1715 = vmatprep.mubr.f32.mxu0 0.0
      %1716 = vmatmul.mubr.f32.gmra.mrb[0].mxu0 %v1549
      %v1717 = vpop.f32.mrb[0].mxu0
      %v1718 = vadd.f32 0.0, %v1717
      %v1719 = vpop.f32.mrb[0].mxu0
      %1720 = vmatprep.mubr.f32.mxu0 0.0
      %1721 = vmatmul.mubr.f32.gmra.mrb[0].mxu0 %v1552
      %v1722 = vpop.f32.mrb[0].mxu0
      %v1723 = vadd.f32 0.0, %v1722
      %v1724 = vpop.f32.mrb[0].mxu0
      %1725 = vmatprep.mubr.f32.mxu0 0.0
      %1726 = vmatmul.mubr.f32.gmra.mrb[0].mxu0 %v1555
      %v1727 = vpop.f32.mrb[0].mxu0
      %v1728 = vadd.f32 0.0, %v1727
      %v1729 = vpop.f32.mrb[0].mxu0
      %1730 = vmatprep.mubr.f32.mxu0 0.0
      %1731 = vmatmul.mubr.f32.gmra.mrb[0].mxu0 %v1558
      %v1732 = vpop.f32.mrb[0].mxu0
      %v1733 = vadd.f32 0.0, %v1732
      %v1734 = vpop.f32.mrb[0].mxu0
      %1735 = vmatprep.mubr.f32.mxu0 0.0
      %1736 = vmatmul.mubr.f32.gmra.mrb[0].mxu0 %v1561
      %v1737 = vpop.f32.mrb[0].mxu0
      %v1738 = vadd.f32 0.0, %v1737
      %v1739 = vpop.f32.mrb[0].mxu0
      %1740 = vmatprep.mubr.f32.mxu0 0.0
      %1741 = vmatmul.mubr.f32.gmra.mrb[0].mxu0 %v1564
      %v1742 = vpop.f32.mrb[0].mxu0
      %v1743 = vadd.f32 0.0, %v1742
      %v1744 = vpop.f32.mrb[0].mxu0
      %1745 = vmatprep.mubr.f32.mxu0 0.0
      %1746 = vmatmul.mubr.f32.gmra.mrb[0].mxu0 %v1567
      %v1747 = vpop.f32.mrb[0].mxu0
      %v1748 = vadd.f32 0.0, %v1747
      %v1749 = vpop.f32.mrb[0].mxu0
      %1750 = vmatprep.mubr.f32.mxu0 0.0
      %1751 = vmatmul.mubr.f32.gmra.mrb[0].mxu0 %v1570
      %v1752 = vpop.f32.mrb[0].mxu0
      %v1753 = vadd.f32 0.0, %v1752
      %v1754 = vpop.f32.mrb[0].mxu0
      %1755 = vmatprep.mubr.f32.mxu0 0.0
      %1756 = vmatmul.mubr.f32.gmra.mrb[0].mxu0 %v1573
      %v1757 = vpop.f32.mrb[0].mxu0
      %v1758 = vadd.f32 0.0, %v1757
      %v1759 = vpop.f32.mrb[0].mxu0
      %1760 = vmatprep.mubr.f32.mxu0 0.0
      %1761 = vmatmul.mubr.f32.gmra.mrb[0].mxu0 %v1576
      %v1762 = vpop.f32.mrb[0].mxu0
      %v1763 = vadd.f32 0.0, %v1762
      %v1764 = vpop.f32.mrb[0].mxu0
      %1765 = vmatprep.mubr.f32.mxu0 0.0
      %1766 = vmatmul.mubr.f32.gmra.mrb[0].mxu0 %v1579
      %v1767 = vpop.f32.mrb[0].mxu0
      %v1768 = vadd.f32 0.0, %v1767
      %v1769 = vpop.f32.mrb[0].mxu0
      %1770 = vmatprep.mubr.f32.mxu0 0.0
      %1771 = vmatmul.mubr.f32.gmra.mrb[0].mxu0 %v1582
      %v1772 = vpop.f32.mrb[0].mxu0
      %v1773 = vadd.f32 0.0, %v1772
      %v1774 = vpop.f32.mrb[0].mxu0
      %1775 = vmatprep.mubr.f32.mxu0 0.0
      %1776 = vmatmul.mubr.f32.gmra.mrb[0].mxu0 %v1585
      %v1777 = vpop.f32.mrb[0].mxu0
      %v1778 = vadd.f32 0.0, %v1777
      %v1779 = vpop.f32.mrb[0].mxu0
      %1780 = vmatprep.mubr.f32.mxu0 0.0
      %1781 = vmatmul.mubr.f32.gmra.mrb[0].mxu0 %v1588
      %v1782 = vpop.f32.mrb[0].mxu0
      %v1783 = vadd.f32 0.0, %v1782
      %v1784 = vpop.f32.mrb[0].mxu0
      %1785 = vmatprep.mubr.f32.mxu0 0.0
      %1786 = vmatmul.mubr.f32.gmra.mrb[0].mxu0 %v1591
      %v1787 = vpop.f32.mrb[0].mxu0
      %v1788 = vadd.f32 0.0, %v1787
      %v1789 = vpop.f32.mrb[0].mxu0
      %1790 = vmatprep.mubr.f32.mxu0 0.0
      %1791 = vmatmul.mubr.f32.gmra.mrb[0].mxu0 %v1594
      %v1792 = vpop.f32.mrb[0].mxu0
      %v1793 = vadd.f32 0.0, %v1792
      %v1794 = vpop.f32.mrb[0].mxu0
      %1795 = vmatprep.mubr.f32.mxu0 0.0
      %1796 = vmatmul.mubr.f32.gmra.mrb[0].mxu0 %v1597
      %v1797 = vpop.f32.mrb[0].mxu0
      %v1798 = vadd.f32 0.0, %v1797
      %v1799 = vpop.f32.mrb[0].mxu0
      %1800 = vmatprep.mubr.f32.mxu0 0.0
      %1801 = vmatmul.mubr.f32.gmra.mrb[0].mxu0 %v1600
      %v1802 = vpop.f32.mrb[0].mxu0
      %v1803 = vadd.f32 0.0, %v1802
      %v1804 = vpop.f32.mrb[0].mxu0
      %1805 = vmatprep.mubr.f32.mxu0 0.0
      %1806 = vmatmul.mubr.f32.gmra.mrb[0].mxu0 %v1603
      %v1807 = vpop.f32.mrb[0].mxu0
      %v1808 = vadd.f32 0.0, %v1807
      %v1809 = vpop.f32.mrb[0].mxu0
      %1810 = vmatprep.mubr.f32.mxu0 0.0
      %1811 = vmatmul.mubr.f32.gmra.mrb[0].mxu0 %v1606
      %v1812 = vpop.f32.mrb[0].mxu0
      %v1813 = vadd.f32 0.0, %v1812
      %v1814 = vpop.f32.mrb[0].mxu0
      %1815 = vmatprep.mubr.f32.mxu0 0.0
      %1816 = vmatmul.mubr.f32.gmra.mrb[0].mxu0 %v1609
      %v1817 = vpop.f32.mrb[0].mxu0
      %v1818 = vadd.f32 0.0, %v1817
      %v1819 = vpop.f32.mrb[0].mxu0
      %1820 = vmatprep.mubr.f32.mxu0 0.0
      %1821 = vmatmul.mubr.f32.gmra.mrb[0].mxu0 %v1612
      %v1822 = vpop.f32.mrb[0].mxu0
      %v1823 = vadd.f32 0.0, %v1822
      %v1824 = vpop.f32.mrb[0].mxu0
      %1825 = vmatprep.mubr.f32.mxu0 0.0
      %1826 = vmatmul.mubr.f32.gmra.mrb[0].mxu0 %v1615
      %v1827 = vpop.f32.mrb[0].mxu0
      %v1828 = vadd.f32 0.0, %v1827
      %v1829 = vpop.f32.mrb[0].mxu0
      %1830 = vmatprep.mubr.f32.mxu0 0.0
      %1831 = vmatmul.mubr.f32.gmra.mrb[0].mxu0 %v1618
      %v1832 = vpop.f32.mrb[0].mxu0
      %v1833 = vadd.f32 0.0, %v1832
      %v1834 = vpop.f32.mrb[0].mxu0
      %1835 = vmatprep.mubr.f32.mxu0 0.0
      %1836 = vmatmul.mubr.f32.gmra.mrb[0].mxu0 %v1621
      %v1837 = vpop.f32.mrb[0].mxu0
      %v1838 = vadd.f32 0.0, %v1837
      %v1839 = vpop.f32.mrb[0].mxu0
      %1840 = vmatprep.mubr.f32.mxu0 0.0
      %1841 = vmatmul.mubr.f32.gmra.mrb[0].mxu0 %v1624
      %v1842 = vpop.f32.mrb[0].mxu0
      %v1843 = vadd.f32 0.0, %v1842
      %v1844 = vpop.f32.mrb[0].mxu0
      %1845 = vmatprep.mubr.f32.mxu0 0.0
      %1846 = vmatmul.mubr.f32.gmra.mrb[0].mxu0 %v1627
      %v1847 = vpop.f32.mrb[0].mxu0
      %v1848 = vadd.f32 0.0, %v1847
      %v1849 = vpop.f32.mrb[0].mxu0
      %1850 = vmatprep.mubr.f32.mxu0 0.0
      %1851 = vmatmul.mubr.f32.gmra.mrb[0].mxu0 %v1630
      %v1852 = vpop.f32.mrb[0].mxu0
      %v1853 = vadd.f32 0.0, %v1852
      %v1854 = vpop.f32.mrb[0].mxu0
      %1855 = vmatprep.mubr.f32.mxu0 0.0
      %1856 = vmatmul.mubr.f32.gmra.mrb[0].mxu0 %v1633
      %v1857 = vpop.f32.mrb[0].mxu0
      %v1858 = vadd.f32 0.0, %v1857
      %v1859 = vpop.f32.mrb[0].mxu0
      %1860 = vmatprep.mubr.f32.mxu0 0.0
      %1861 = vmatmul.mubr.f32.gmra.mrb[0].mxu0 %v1636
      %v1862 = vpop.f32.mrb[0].mxu0
      %v1863 = vadd.f32 0.0, %v1862
      %v1864 = vpop.f32.mrb[0].mxu0
      %1865 = vdwg.mxu0
      %v1866 = vadd.f32 %v1478, %v1708
      %v1867 = vadd.f32 %v1479, %v1713
      %v1868 = vadd.f32 %v1480, %v1718
      %v1869 = vadd.f32 %v1481, %v1723
      %v1870 = vadd.f32 %v1482, %v1728
      %v1871 = vadd.f32 %v1483, %v1733
      %v1872 = vadd.f32 %v1484, %v1738
      %v1873 = vadd.f32 %v1485, %v1743
      %v1874 = vadd.f32 %v1486, %v1748
      %v1875 = vadd.f32 %v1487, %v1753
      %v1876 = vadd.f32 %v1488, %v1758
      %v1877 = vadd.f32 %v1489, %v1763
      %v1878 = vadd.f32 %v1490, %v1768
      %v1879 = vadd.f32 %v1491, %v1773
      %v1880 = vadd.f32 %v1492, %v1778
      %v1881 = vadd.f32 %v1493, %v1783
      %v1882 = vadd.f32 %v1494, %v1788
      %v1883 = vadd.f32 %v1495, %v1793
      %v1884 = vadd.f32 %v1496, %v1798
      %v1885 = vadd.f32 %v1497, %v1803
      %v1886 = vadd.f32 %v1498, %v1808
      %v1887 = vadd.f32 %v1499, %v1813
      %v1888 = vadd.f32 %v1500, %v1818
      %v1889 = vadd.f32 %v1501, %v1823
      %v1890 = vadd.f32 %v1502, %v1828
      %v1891 = vadd.f32 %v1503, %v1833
      %v1892 = vadd.f32 %v1504, %v1838
      %v1893 = vadd.f32 %v1505, %v1843
      %v1894 = vadd.f32 %v1506, %v1848
      %v1895 = vadd.f32 %v1507, %v1853
      %v1896 = vadd.f32 %v1508, %v1858
      %v1897 = vadd.f32 %v1509, %v1863
      %v1898 = vld [vmem:[%s367 + $0x1] sm:$0xff]
      %v1899 = vld [vmem:[%s367 + $0x9] sm:$0xff]
      %v1900 = vld [vmem:[%s367 + $0x19] sm:$0xff]
      %v1901 = vld [vmem:[%s367 + $0x21] sm:$0xff]
      %v1902 = vld [vmem:[%s367 + $0x31] sm:$0xff]
      %v1903 = vld [vmem:[%s367 + $0x39] sm:$0xff]
      %v1904 = vld [vmem:[%s367 + $0x49] sm:$0xff]
      %v1905 = vld [vmem:[%s367 + $0x51] sm:$0xff]
      %v1906 = vld [vmem:[%s367 + $0x61] sm:$0xff]
      %v1907 = vld [vmem:[%s367 + $0x69] sm:$0xff]
      %v1908 = vld [vmem:[%s367 + $0x79] sm:$0xff]
      %v1909 = vld [vmem:[%s367 + $0x81] sm:$0xff]
      %v1910 = vld [vmem:[%s367 + $0x91] sm:$0xff]
      %v1911 = vld [vmem:[%s367 + $0x99] sm:$0xff]
      %v1912 = vld [vmem:[%s367 + $0xa9] sm:$0xff]
      %v1913 = vld [vmem:[%s367 + $0xb1] sm:$0xff]
      %v1914 = vld [vmem:[%s367 + $0xc1] sm:$0xff]
      %v1915 = vld [vmem:[%s367 + $0xc9] sm:$0xff]
      %v1916 = vld [vmem:[%s367 + $0xd9] sm:$0xff]
      %v1917 = vld [vmem:[%s367 + $0xe1] sm:$0xff]
      %v1918 = vld [vmem:[%s367 + $0xf1] sm:$0xff]
      %v1919 = vld [vmem:[%s367 + $0xf9] sm:$0xff]
      %v1920 = vld [vmem:[%s367 + $0x109] sm:$0xff]
      %v1921 = vld [vmem:[%s367 + $0x111] sm:$0xff]
      %v1922 = vld [vmem:[%s367 + $0x121] sm:$0xff]
      %v1923 = vld [vmem:[%s367 + $0x129] sm:$0xff]
      %v1924 = vld [vmem:[%s367 + $0x139] sm:$0xff]
      %v1925 = vld [vmem:[%s367 + $0x141] sm:$0xff]
      %v1926 = vld [vmem:[%s367 + $0x151] sm:$0xff]
      %v1927 = vld [vmem:[%s367 + $0x159] sm:$0xff]
      %v1928 = vld [vmem:[%s367 + $0x169] sm:$0xff]
      %v1929 = vld [vmem:[%s367 + $0x171] sm:$0xff]
      %v1931 = vsel %vm279, %v1898, 0
      %v1934 = vsel %vm279, %v1899, 0
      %v1937 = vsel %vm279, %v1900, 0
      %v1940 = vsel %vm279, %v1901, 0
      %v1943 = vsel %vm279, %v1902, 0
      %v1946 = vsel %vm279, %v1903, 0
      %v1949 = vsel %vm279, %v1904, 0
      %v1952 = vsel %vm279, %v1905, 0
      %v1955 = vsel %vm279, %v1906, 0
      %v1958 = vsel %vm279, %v1907, 0
      %v1961 = vsel %vm279, %v1908, 0
      %v1964 = vsel %vm279, %v1909, 0
      %v1967 = vsel %vm279, %v1910, 0
      %v1970 = vsel %vm279, %v1911, 0
      %v1973 = vsel %vm279, %v1912, 0
      %v1976 = vsel %vm279, %v1913, 0
      %v1979 = vsel %vm279, %v1914, 0
      %v1982 = vsel %vm279, %v1915, 0
      %v1985 = vsel %vm279, %v1916, 0
      %v1988 = vsel %vm279, %v1917, 0
      %v1991 = vsel %vm279, %v1918, 0
      %v1994 = vsel %vm279, %v1919, 0
      %v1997 = vsel %vm279, %v1920, 0
      %v2000 = vsel %vm279, %v1921, 0
      %v2003 = vsel %vm279, %v1922, 0
      %v2006 = vsel %vm279, %v1923, 0
      %v2009 = vsel %vm279, %v1924, 0
      %v2012 = vsel %vm279, %v1925, 0
      %v2015 = vsel %vm279, %v1926, 0
      %v2018 = vsel %vm279, %v1927, 0
      %v2021 = vsel %vm279, %v1928, 0
      %v2024 = vsel %vm279, %v1929, 0
      %v2027 = vsel %vm569, %v404, 0
      %2029 = vmatprep.subr.mxu0 0.0
      %2030 = vmatpush1.msra.mxu0 %v2027
      %2031 = vmatprep.subr.mxu0 0.0
      %2032 = vmatpush1.msra.mxu0 0.0
      %2033 = vmatprep.subr.mxu0 0.0
      %2034 = vmatpush1.msra.mxu0 0.0
      %2035 = vmatprep.subr.mxu0 0.0
      %2036 = vmatpush1.msra.mxu0 0.0
      %2037 = vmatprep.subr.mxu0 0.0
      %2038 = vmatpush1.msra.mxu0 0.0
      %2039 = vmatprep.subr.mxu0 0.0
      %2040 = vmatpush1.msra.mxu0 0.0
      %2041 = vmatprep.subr.mxu0 0.0
      %2042 = vmatpush1.msra.mxu0 0.0
      %2043 = vmatprep.subr.mxu0 0.0
      %2044 = vmatpush1.msra.mxu0 0.0
      %2045 = vmatprep.subr.mxu0 0.0
      %2046 = vmatpush1.msra.mxu0 0.0
      %2047 = vmatprep.subr.mxu0 0.0
      %2048 = vmatpush1.msra.mxu0 0.0
      %2049 = vmatprep.subr.mxu0 0.0
      %2050 = vmatpush1.msra.mxu0 0.0
      %2051 = vmatprep.subr.mxu0 0.0
      %2052 = vmatpush1.msra.mxu0 0.0
      %2053 = vmatprep.subr.mxu0 0.0
      %2054 = vmatpush1.msra.mxu0 0.0
      %2055 = vmatprep.subr.mxu0 0.0
      %2056 = vmatpush1.msra.mxu0 0.0
      %2057 = vmatprep.subr.mxu0 0.0
      %2058 = vmatpush1.msra.mxu0 0.0
      %2059 = vmatprep.subr.mxu0 0.0
      %2060 = vmatpush1.msra.mxu0 0.0
      %2061 = vmatprep.subr.mxu0 0.0
      %2062 = vmatpush1.msra.mxu0 0.0
      %2063 = vmatprep.subr.mxu0 0.0
      %2064 = vmatpush1.msra.mxu0 0.0
      %2065 = vmatprep.subr.mxu0 0.0
      %2066 = vmatpush1.msra.mxu0 0.0
      %2067 = vmatprep.subr.mxu0 0.0
      %2068 = vmatpush1.msra.mxu0 0.0
      %2069 = vmatprep.subr.mxu0 0.0
      %2070 = vmatpush1.msra.mxu0 0.0
      %2071 = vmatprep.subr.mxu0 0.0
      %2072 = vmatpush1.msra.mxu0 0.0
      %2073 = vmatprep.subr.mxu0 0.0
      %2074 = vmatpush1.msra.mxu0 0.0
      %2075 = vmatprep.subr.mxu0 0.0
      %2076 = vmatpush1.msra.mxu0 0.0
      %2077 = vmatprep.subr.mxu0 0.0
      %2078 = vmatpush1.msra.mxu0 0.0
      %2079 = vmatprep.subr.mxu0 0.0
      %2080 = vmatpush1.msra.mxu0 0.0
      %2081 = vmatprep.subr.mxu0 0.0
      %2082 = vmatpush1.msra.mxu0 0.0
      %2083 = vmatprep.subr.mxu0 0.0
      %2084 = vmatpush1.msra.mxu0 0.0
      %2085 = vmatprep.subr.mxu0 0.0
      %2086 = vmatpush1.msra.mxu0 0.0
      %2087 = vmatprep.subr.mxu0 0.0
      %2088 = vmatpush1.msra.mxu0 0.0
      %2089 = vmatprep.subr.mxu0 0.0
      %2090 = vmatpush1.msra.mxu0 0.0
      %2091 = vmatprep.subr.mxu0 0.0
      %2092 = vmatpush1.msra.mxu0 0.0
      %2093 = vmatprep.mubr.f32.mxu0 0.0
      %2094 = vmatmul.mubr.f32.gmra.mrb[0].mxu0 %v1931
      %v2095 = vpop.f32.mrb[0].mxu0
      %v2096 = vadd.f32 0.0, %v2095
      %v2097 = vpop.f32.mrb[0].mxu0
      %2098 = vmatprep.mubr.f32.mxu0 0.0
      %2099 = vmatmul.mubr.f32.gmra.mrb[0].mxu0 %v1934
      %v2100 = vpop.f32.mrb[0].mxu0
      %v2101 = vadd.f32 0.0, %v2100
      %v2102 = vpop.f32.mrb[0].mxu0
      %2103 = vmatprep.mubr.f32.mxu0 0.0
      %2104 = vmatmul.mubr.f32.gmra.mrb[0].mxu0 %v1937
      %v2105 = vpop.f32.mrb[0].mxu0
      %v2106 = vadd.f32 0.0, %v2105
      %v2107 = vpop.f32.mrb[0].mxu0
      %2108 = vmatprep.mubr.f32.mxu0 0.0
      %2109 = vmatmul.mubr.f32.gmra.mrb[0].mxu0 %v1940
      %v2110 = vpop.f32.mrb[0].mxu0
      %v2111 = vadd.f32 0.0, %v2110
      %v2112 = vpop.f32.mrb[0].mxu0
      %2113 = vmatprep.mubr.f32.mxu0 0.0
      %2114 = vmatmul.mubr.f32.gmra.mrb[0].mxu0 %v1943
      %v2115 = vpop.f32.mrb[0].mxu0
      %v2116 = vadd.f32 0.0, %v2115
      %v2117 = vpop.f32.mrb[0].mxu0
      %2118 = vmatprep.mubr.f32.mxu0 0.0
      %2119 = vmatmul.mubr.f32.gmra.mrb[0].mxu0 %v1946
      %v2120 = vpop.f32.mrb[0].mxu0
      %v2121 = vadd.f32 0.0, %v2120
      %v2122 = vpop.f32.mrb[0].mxu0
      %2123 = vmatprep.mubr.f32.mxu0 0.0
      %2124 = vmatmul.mubr.f32.gmra.mrb[0].mxu0 %v1949
      %v2125 = vpop.f32.mrb[0].mxu0
      %v2126 = vadd.f32 0.0, %v2125
      %v2127 = vpop.f32.mrb[0].mxu0
      %2128 = vmatprep.mubr.f32.mxu0 0.0
      %2129 = vmatmul.mubr.f32.gmra.mrb[0].mxu0 %v1952
      %v2130 = vpop.f32.mrb[0].mxu0
      %v2131 = vadd.f32 0.0, %v2130
      %v2132 = vpop.f32.mrb[0].mxu0
      %2133 = vmatprep.mubr.f32.mxu0 0.0
      %2134 = vmatmul.mubr.f32.gmra.mrb[0].mxu0 %v1955
      %v2135 = vpop.f32.mrb[0].mxu0
      %v2136 = vadd.f32 0.0, %v2135
      %v2137 = vpop.f32.mrb[0].mxu0
      %2138 = vmatprep.mubr.f32.mxu0 0.0
      %2139 = vmatmul.mubr.f32.gmra.mrb[0].mxu0 %v1958
      %v2140 = vpop.f32.mrb[0].mxu0
      %v2141 = vadd.f32 0.0, %v2140
      %v2142 = vpop.f32.mrb[0].mxu0
      %2143 = vmatprep.mubr.f32.mxu0 0.0
      %2144 = vmatmul.mubr.f32.gmra.mrb[0].mxu0 %v1961
      %v2145 = vpop.f32.mrb[0].mxu0
      %v2146 = vadd.f32 0.0, %v2145
      %v2147 = vpop.f32.mrb[0].mxu0
      %2148 = vmatprep.mubr.f32.mxu0 0.0
      %2149 = vmatmul.mubr.f32.gmra.mrb[0].mxu0 %v1964
      %v2150 = vpop.f32.mrb[0].mxu0
      %v2151 = vadd.f32 0.0, %v2150
      %v2152 = vpop.f32.mrb[0].mxu0
      %2153 = vmatprep.mubr.f32.mxu0 0.0
      %2154 = vmatmul.mubr.f32.gmra.mrb[0].mxu0 %v1967
      %v2155 = vpop.f32.mrb[0].mxu0
      %v2156 = vadd.f32 0.0, %v2155
      %v2157 = vpop.f32.mrb[0].mxu0
      %2158 = vmatprep.mubr.f32.mxu0 0.0
      %2159 = vmatmul.mubr.f32.gmra.mrb[0].mxu0 %v1970
      %v2160 = vpop.f32.mrb[0].mxu0
      %v2161 = vadd.f32 0.0, %v2160
      %v2162 = vpop.f32.mrb[0].mxu0
      %2163 = vmatprep.mubr.f32.mxu0 0.0
      %2164 = vmatmul.mubr.f32.gmra.mrb[0].mxu0 %v1973
      %v2165 = vpop.f32.mrb[0].mxu0
      %v2166 = vadd.f32 0.0, %v2165
      %v2167 = vpop.f32.mrb[0].mxu0
      %2168 = vmatprep.mubr.f32.mxu0 0.0
      %2169 = vmatmul.mubr.f32.gmra.mrb[0].mxu0 %v1976
      %v2170 = vpop.f32.mrb[0].mxu0
      %v2171 = vadd.f32 0.0, %v2170
      %v2172 = vpop.f32.mrb[0].mxu0
      %2173 = vmatprep.mubr.f32.mxu0 0.0
      %2174 = vmatmul.mubr.f32.gmra.mrb[0].mxu0 %v1979
      %v2175 = vpop.f32.mrb[0].mxu0
      %v2176 = vadd.f32 0.0, %v2175
      %v2177 = vpop.f32.mrb[0].mxu0
      %2178 = vmatprep.mubr.f32.mxu0 0.0
      %2179 = vmatmul.mubr.f32.gmra.mrb[0].mxu0 %v1982
      %v2180 = vpop.f32.mrb[0].mxu0
      %v2181 = vadd.f32 0.0, %v2180
      %v2182 = vpop.f32.mrb[0].mxu0
      %2183 = vmatprep.mubr.f32.mxu0 0.0
      %2184 = vmatmul.mubr.f32.gmra.mrb[0].mxu0 %v1985
      %v2185 = vpop.f32.mrb[0].mxu0
      %v2186 = vadd.f32 0.0, %v2185
      %v2187 = vpop.f32.mrb[0].mxu0
      %2188 = vmatprep.mubr.f32.mxu0 0.0
      %2189 = vmatmul.mubr.f32.gmra.mrb[0].mxu0 %v1988
      %v2190 = vpop.f32.mrb[0].mxu0
      %v2191 = vadd.f32 0.0, %v2190
      %v2192 = vpop.f32.mrb[0].mxu0
      %2193 = vmatprep.mubr.f32.mxu0 0.0
      %2194 = vmatmul.mubr.f32.gmra.mrb[0].mxu0 %v1991
      %v2195 = vpop.f32.mrb[0].mxu0
      %v2196 = vadd.f32 0.0, %v2195
      %v2197 = vpop.f32.mrb[0].mxu0
      %2198 = vmatprep.mubr.f32.mxu0 0.0
      %2199 = vmatmul.mubr.f32.gmra.mrb[0].mxu0 %v1994
      %v2200 = vpop.f32.mrb[0].mxu0
      %v2201 = vadd.f32 0.0, %v2200
      %v2202 = vpop.f32.mrb[0].mxu0
      %2203 = vmatprep.mubr.f32.mxu0 0.0
      %2204 = vmatmul.mubr.f32.gmra.mrb[0].mxu0 %v1997
      %v2205 = vpop.f32.mrb[0].mxu0
      %v2206 = vadd.f32 0.0, %v2205
      %v2207 = vpop.f32.mrb[0].mxu0
      %2208 = vmatprep.mubr.f32.mxu0 0.0
      %2209 = vmatmul.mubr.f32.gmra.mrb[0].mxu0 %v2000
      %v2210 = vpop.f32.mrb[0].mxu0
      %v2211 = vadd.f32 0.0, %v2210
      %v2212 = vpop.f32.mrb[0].mxu0
      %2213 = vmatprep.mubr.f32.mxu0 0.0
      %2214 = vmatmul.mubr.f32.gmra.mrb[0].mxu0 %v2003
      %v2215 = vpop.f32.mrb[0].mxu0
      %v2216 = vadd.f32 0.0, %v2215
      %v2217 = vpop.f32.mrb[0].mxu0
      %2218 = vmatprep.mubr.f32.mxu0 0.0
      %2219 = vmatmul.mubr.f32.gmra.mrb[0].mxu0 %v2006
      %v2220 = vpop.f32.mrb[0].mxu0
      %v2221 = vadd.f32 0.0, %v2220
      %v2222 = vpop.f32.mrb[0].mxu0
      %2223 = vmatprep.mubr.f32.mxu0 0.0
      %2224 = vmatmul.mubr.f32.gmra.mrb[0].mxu0 %v2009
      %v2225 = vpop.f32.mrb[0].mxu0
      %v2226 = vadd.f32 0.0, %v2225
      %v2227 = vpop.f32.mrb[0].mxu0
      %2228 = vmatprep.mubr.f32.mxu0 0.0
      %2229 = vmatmul.mubr.f32.gmra.mrb[0].mxu0 %v2012
      %v2230 = vpop.f32.mrb[0].mxu0
      %v2231 = vadd.f32 0.0, %v2230
      %v2232 = vpop.f32.mrb[0].mxu0
      %2233 = vmatprep.mubr.f32.mxu0 0.0
      %2234 = vmatmul.mubr.f32.gmra.mrb[0].mxu0 %v2015
      %v2235 = vpop.f32.mrb[0].mxu0
      %v2236 = vadd.f32 0.0, %v2235
      %v2237 = vpop.f32.mrb[0].mxu0
      %2238 = vmatprep.mubr.f32.mxu0 0.0
      %2239 = vmatmul.mubr.f32.gmra.mrb[0].mxu0 %v2018
      %v2240 = vpop.f32.mrb[0].mxu0
      %v2241 = vadd.f32 0.0, %v2240
      %v2242 = vpop.f32.mrb[0].mxu0
      %2243 = vmatprep.mubr.f32.mxu0 0.0
      %2244 = vmatmul.mubr.f32.gmra.mrb[0].mxu0 %v2021
      %v2245 = vpop.f32.mrb[0].mxu0
      %v2246 = vadd.f32 0.0, %v2245
      %v2247 = vpop.f32.mrb[0].mxu0
      %2248 = vmatprep.mubr.f32.mxu0 0.0
      %2249 = vmatmul.mubr.f32.gmra.mrb[0].mxu0 %v2024
      %v2250 = vpop.f32.mrb[0].mxu0
      %v2251 = vadd.f32 0.0, %v2250
      %v2252 = vpop.f32.mrb[0].mxu0
      %2253 = vdwg.mxu0
      %v2254 = vadd.f32 %v1866, %v2096
      %v2255 = vadd.f32 %v1867, %v2101
      %v2256 = vadd.f32 %v1868, %v2106
      %v2257 = vadd.f32 %v1869, %v2111
      %v2258 = vadd.f32 %v1870, %v2116
      %v2259 = vadd.f32 %v1871, %v2121
      %v2260 = vadd.f32 %v1872, %v2126
      %v2261 = vadd.f32 %v1873, %v2131
      %v2262 = vadd.f32 %v1874, %v2136
      %v2263 = vadd.f32 %v1875, %v2141
      %v2264 = vadd.f32 %v1876, %v2146
      %v2265 = vadd.f32 %v1877, %v2151
      %v2266 = vadd.f32 %v1878, %v2156
      %v2267 = vadd.f32 %v1879, %v2161
      %v2268 = vadd.f32 %v1880, %v2166
      %v2269 = vadd.f32 %v1881, %v2171
      %v2270 = vadd.f32 %v1882, %v2176
      %v2271 = vadd.f32 %v1883, %v2181
      %v2272 = vadd.f32 %v1884, %v2186
      %v2273 = vadd.f32 %v1885, %v2191
      %v2274 = vadd.f32 %v1886, %v2196
      %v2275 = vadd.f32 %v1887, %v2201
      %v2276 = vadd.f32 %v1888, %v2206
      %v2277 = vadd.f32 %v1889, %v2211
      %v2278 = vadd.f32 %v1890, %v2216
      %v2279 = vadd.f32 %v1891, %v2221
      %v2280 = vadd.f32 %v1892, %v2226
      %v2281 = vadd.f32 %v1893, %v2231
      %v2282 = vadd.f32 %v1894, %v2236
      %v2283 = vadd.f32 %v1895, %v2241
      %v2284 = vadd.f32 %v1896, %v2246
      %v2285 = vadd.f32 %v1897, %v2251
      %v2286 = vld [vmem:[%s367 + $0x2] sm:$0xff]
      %v2287 = vld [vmem:[%s367 + $0xa] sm:$0xff]
      %v2288 = vld [vmem:[%s367 + $0x1a] sm:$0xff]
      %v2289 = vld [vmem:[%s367 + $0x22] sm:$0xff]
      %v2290 = vld [vmem:[%s367 + $0x32] sm:$0xff]
      %v2291 = vld [vmem:[%s367 + $0x3a] sm:$0xff]
      %v2292 = vld [vmem:[%s367 + $0x4a] sm:$0xff]
      %v2293 = vld [vmem:[%s367 + $0x52] sm:$0xff]
      %v2294 = vld [vmem:[%s367 + $0x62] sm:$0xff]
      %v2295 = vld [vmem:[%s367 + $0x6a] sm:$0xff]
      %v2296 = vld [vmem:[%s367 + $0x7a] sm:$0xff]
      %v2297 = vld [vmem:[%s367 + $0x82] sm:$0xff]
      %v2298 = vld [vmem:[%s367 + $0x92] sm:$0xff]
      %v2299 = vld [vmem:[%s367 + $0x9a] sm:$0xff]
      %v2300 = vld [vmem:[%s367 + $0xaa] sm:$0xff]
      %v2301 = vld [vmem:[%s367 + $0xb2] sm:$0xff]
      %v2302 = vld [vmem:[%s367 + $0xc2] sm:$0xff]
      %v2303 = vld [vmem:[%s367 + $0xca] sm:$0xff]
      %v2304 = vld [vmem:[%s367 + $0xda] sm:$0xff]
      %v2305 = vld [vmem:[%s367 + $0xe2] sm:$0xff]
      %v2306 = vld [vmem:[%s367 + $0xf2] sm:$0xff]
      %v2307 = vld [vmem:[%s367 + $0xfa] sm:$0xff]
      %v2308 = vld [vmem:[%s367 + $0x10a] sm:$0xff]
      %v2309 = vld [vmem:[%s367 + $0x112] sm:$0xff]
      %v2310 = vld [vmem:[%s367 + $0x122] sm:$0xff]
      %v2311 = vld [vmem:[%s367 + $0x12a] sm:$0xff]
      %v2312 = vld [vmem:[%s367 + $0x13a] sm:$0xff]
      %v2313 = vld [vmem:[%s367 + $0x142] sm:$0xff]
      %v2314 = vld [vmem:[%s367 + $0x152] sm:$0xff]
      %v2315 = vld [vmem:[%s367 + $0x15a] sm:$0xff]
      %v2316 = vld [vmem:[%s367 + $0x16a] sm:$0xff]
      %v2317 = vld [vmem:[%s367 + $0x172] sm:$0xff]
      %v2319 = vsel %vm279, %v2286, 0
      %v2322 = vsel %vm279, %v2287, 0
      %v2325 = vsel %vm279, %v2288, 0
      %v2328 = vsel %vm279, %v2289, 0
      %v2331 = vsel %vm279, %v2290, 0
      %v2334 = vsel %vm279, %v2291, 0
      %v2337 = vsel %vm279, %v2292, 0
      %v2340 = vsel %vm279, %v2293, 0
      %v2343 = vsel %vm279, %v2294, 0
      %v2346 = vsel %vm279, %v2295, 0
      %v2349 = vsel %vm279, %v2296, 0
      %v2352 = vsel %vm279, %v2297, 0
      %v2355 = vsel %vm279, %v2298, 0
      %v2358 = vsel %vm279, %v2299, 0
      %v2361 = vsel %vm279, %v2300, 0
      %v2364 = vsel %vm279, %v2301, 0
      %v2367 = vsel %vm279, %v2302, 0
      %v2370 = vsel %vm279, %v2303, 0
      %v2373 = vsel %vm279, %v2304, 0
      %v2376 = vsel %vm279, %v2305, 0
      %v2379 = vsel %vm279, %v2306, 0
      %v2382 = vsel %vm279, %v2307, 0
      %v2385 = vsel %vm279, %v2308, 0
      %v2388 = vsel %vm279, %v2309, 0
      %v2391 = vsel %vm279, %v2310, 0
      %v2394 = vsel %vm279, %v2311, 0
      %v2397 = vsel %vm279, %v2312, 0
      %v2400 = vsel %vm279, %v2313, 0
      %v2403 = vsel %vm279, %v2314, 0
      %v2406 = vsel %vm279, %v2315, 0
      %v2409 = vsel %vm279, %v2316, 0
      %v2412 = vsel %vm279, %v2317, 0
      %v2415 = vsel %vm569, %v405, 0
      %2417 = vmatprep.subr.mxu0 0.0
      %2418 = vmatpush1.msra.mxu0 %v2415
      %2419 = vmatprep.subr.mxu0 0.0
      %2420 = vmatpush1.msra.mxu0 0.0
      %2421 = vmatprep.subr.mxu0 0.0
      %2422 = vmatpush1.msra.mxu0 0.0
      %2423 = vmatprep.subr.mxu0 0.0
      %2424 = vmatpush1.msra.mxu0 0.0
      %2425 = vmatprep.subr.mxu0 0.0
      %2426 = vmatpush1.msra.mxu0 0.0
      %2427 = vmatprep.subr.mxu0 0.0
      %2428 = vmatpush1.msra.mxu0 0.0
      %2429 = vmatprep.subr.mxu0 0.0
      %2430 = vmatpush1.msra.mxu0 0.0
      %2431 = vmatprep.subr.mxu0 0.0
      %2432 = vmatpush1.msra.mxu0 0.0
      %2433 = vmatprep.subr.mxu0 0.0
      %2434 = vmatpush1.msra.mxu0 0.0
      %2435 = vmatprep.subr.mxu0 0.0
      %2436 = vmatpush1.msra.mxu0 0.0
      %2437 = vmatprep.subr.mxu0 0.0
      %2438 = vmatpush1.msra.mxu0 0.0
      %2439 = vmatprep.subr.mxu0 0.0
      %2440 = vmatpush1.msra.mxu0 0.0
      %2441 = vmatprep.subr.mxu0 0.0
      %2442 = vmatpush1.msra.mxu0 0.0
      %2443 = vmatprep.subr.mxu0 0.0
      %2444 = vmatpush1.msra.mxu0 0.0
      %2445 = vmatprep.subr.mxu0 0.0
      %2446 = vmatpush1.msra.mxu0 0.0
      %2447 = vmatprep.subr.mxu0 0.0
      %2448 = vmatpush1.msra.mxu0 0.0
      %2449 = vmatprep.subr.mxu0 0.0
      %2450 = vmatpush1.msra.mxu0 0.0
      %2451 = vmatprep.subr.mxu0 0.0
      %2452 = vmatpush1.msra.mxu0 0.0
      %2453 = vmatprep.subr.mxu0 0.0
      %2454 = vmatpush1.msra.mxu0 0.0
      %2455 = vmatprep.subr.mxu0 0.0
      %2456 = vmatpush1.msra.mxu0 0.0
      %2457 = vmatprep.subr.mxu0 0.0
      %2458 = vmatpush1.msra.mxu0 0.0
      %2459 = vmatprep.subr.mxu0 0.0
      %2460 = vmatpush1.msra.mxu0 0.0
      %2461 = vmatprep.subr.mxu0 0.0
      %2462 = vmatpush1.msra.mxu0 0.0
      %2463 = vmatprep.subr.mxu0 0.0
      %2464 = vmatpush1.msra.mxu0 0.0
      %2465 = vmatprep.subr.mxu0 0.0
      %2466 = vmatpush1.msra.mxu0 0.0
      %2467 = vmatprep.subr.mxu0 0.0
      %2468 = vmatpush1.msra.mxu0 0.0
      %2469 = vmatprep.subr.mxu0 0.0
      %2470 = vmatpush1.msra.mxu0 0.0
      %2471 = vmatprep.subr.mxu0 0.0
      %2472 = vmatpush1.msra.mxu0 0.0
      %2473 = vmatprep.subr.mxu0 0.0
      %2474 = vmatpush1.msra.mxu0 0.0
      %2475 = vmatprep.subr.mxu0 0.0
      %2476 = vmatpush1.msra.mxu0 0.0
      %2477 = vmatprep.subr.mxu0 0.0
      %2478 = vmatpush1.msra.mxu0 0.0
      %2479 = vmatprep.subr.mxu0 0.0
      %2480 = vmatpush1.msra.mxu0 0.0
      %2481 = vmatprep.mubr.f32.mxu0 0.0
      %2482 = vmatmul.mubr.f32.gmra.mrb[0].mxu0 %v2319
      %v2483 = vpop.f32.mrb[0].mxu0
      %v2484 = vadd.f32 0.0, %v2483
      %v2485 = vpop.f32.mrb[0].mxu0
      %2486 = vmatprep.mubr.f32.mxu0 0.0
      %2487 = vmatmul.mubr.f32.gmra.mrb[0].mxu0 %v2322
      %v2488 = vpop.f32.mrb[0].mxu0
      %v2489 = vadd.f32 0.0, %v2488
      %v2490 = vpop.f32.mrb[0].mxu0
      %2491 = vmatprep.mubr.f32.mxu0 0.0
      %2492 = vmatmul.mubr.f32.gmra.mrb[0].mxu0 %v2325
      %v2493 = vpop.f32.mrb[0].mxu0
      %v2494 = vadd.f32 0.0, %v2493
      %v2495 = vpop.f32.mrb[0].mxu0
      %2496 = vmatprep.mubr.f32.mxu0 0.0
      %2497 = vmatmul.mubr.f32.gmra.mrb[0].mxu0 %v2328
      %v2498 = vpop.f32.mrb[0].mxu0
      %v2499 = vadd.f32 0.0, %v2498
      %v2500 = vpop.f32.mrb[0].mxu0
      %2501 = vmatprep.mubr.f32.mxu0 0.0
      %2502 = vmatmul.mubr.f32.gmra.mrb[0].mxu0 %v2331
      %v2503 = vpop.f32.mrb[0].mxu0
      %v2504 = vadd.f32 0.0, %v2503
      %v2505 = vpop.f32.mrb[0].mxu0
      %2506 = vmatprep.mubr.f32.mxu0 0.0
      %2507 = vmatmul.mubr.f32.gmra.mrb[0].mxu0 %v2334
      %v2508 = vpop.f32.mrb[0].mxu0
      %v2509 = vadd.f32 0.0, %v2508
      %v2510 = vpop.f32.mrb[0].mxu0
      %2511 = vmatprep.mubr.f32.mxu0 0.0
      %2512 = vmatmul.mubr.f32.gmra.mrb[0].mxu0 %v2337
      %v2513 = vpop.f32.mrb[0].mxu0
      %v2514 = vadd.f32 0.0, %v2513
      %v2515 = vpop.f32.mrb[0].mxu0
      %2516 = vmatprep.mubr.f32.mxu0 0.0
      %2517 = vmatmul.mubr.f32.gmra.mrb[0].mxu0 %v2340
      %v2518 = vpop.f32.mrb[0].mxu0
      %v2519 = vadd.f32 0.0, %v2518
      %v2520 = vpop.f32.mrb[0].mxu0
      %2521 = vmatprep.mubr.f32.mxu0 0.0
      %2522 = vmatmul.mubr.f32.gmra.mrb[0].mxu0 %v2343
      %v2523 = vpop.f32.mrb[0].mxu0
      %v2524 = vadd.f32 0.0, %v2523
      %v2525 = vpop.f32.mrb[0].mxu0
      %2526 = vmatprep.mubr.f32.mxu0 0.0
      %2527 = vmatmul.mubr.f32.gmra.mrb[0].mxu0 %v2346
      %v2528 = vpop.f32.mrb[0].mxu0
      %v2529 = vadd.f32 0.0, %v2528
      %v2530 = vpop.f32.mrb[0].mxu0
      %2531 = vmatprep.mubr.f32.mxu0 0.0
      %2532 = vmatmul.mubr.f32.gmra.mrb[0].mxu0 %v2349
      %v2533 = vpop.f32.mrb[0].mxu0
      %v2534 = vadd.f32 0.0, %v2533
      %v2535 = vpop.f32.mrb[0].mxu0
      %2536 = vmatprep.mubr.f32.mxu0 0.0
      %2537 = vmatmul.mubr.f32.gmra.mrb[0].mxu0 %v2352
      %v2538 = vpop.f32.mrb[0].mxu0
      %v2539 = vadd.f32 0.0, %v2538
      %v2540 = vpop.f32.mrb[0].mxu0
      %2541 = vmatprep.mubr.f32.mxu0 0.0
      %2542 = vmatmul.mubr.f32.gmra.mrb[0].mxu0 %v2355
      %v2543 = vpop.f32.mrb[0].mxu0
      %v2544 = vadd.f32 0.0, %v2543
      %v2545 = vpop.f32.mrb[0].mxu0
      %2546 = vmatprep.mubr.f32.mxu0 0.0
      %2547 = vmatmul.mubr.f32.gmra.mrb[0].mxu0 %v2358
      %v2548 = vpop.f32.mrb[0].mxu0
      %v2549 = vadd.f32 0.0, %v2548
      %v2550 = vpop.f32.mrb[0].mxu0
      %2551 = vmatprep.mubr.f32.mxu0 0.0
      %2552 = vmatmul.mubr.f32.gmra.mrb[0].mxu0 %v2361
      %v2553 = vpop.f32.mrb[0].mxu0
      %v2554 = vadd.f32 0.0, %v2553
      %v2555 = vpop.f32.mrb[0].mxu0
      %2556 = vmatprep.mubr.f32.mxu0 0.0
      %2557 = vmatmul.mubr.f32.gmra.mrb[0].mxu0 %v2364
      %v2558 = vpop.f32.mrb[0].mxu0
      %v2559 = vadd.f32 0.0, %v2558
      %v2560 = vpop.f32.mrb[0].mxu0
      %2561 = vmatprep.mubr.f32.mxu0 0.0
      %2562 = vmatmul.mubr.f32.gmra.mrb[0].mxu0 %v2367
      %v2563 = vpop.f32.mrb[0].mxu0
      %v2564 = vadd.f32 0.0, %v2563
      %v2565 = vpop.f32.mrb[0].mxu0
      %2566 = vmatprep.mubr.f32.mxu0 0.0
      %2567 = vmatmul.mubr.f32.gmra.mrb[0].mxu0 %v2370
      %v2568 = vpop.f32.mrb[0].mxu0
      %v2569 = vadd.f32 0.0, %v2568
      %v2570 = vpop.f32.mrb[0].mxu0
      %2571 = vmatprep.mubr.f32.mxu0 0.0
      %2572 = vmatmul.mubr.f32.gmra.mrb[0].mxu0 %v2373
      %v2573 = vpop.f32.mrb[0].mxu0
      %v2574 = vadd.f32 0.0, %v2573
      %v2575 = vpop.f32.mrb[0].mxu0
      %2576 = vmatprep.mubr.f32.mxu0 0.0
      %2577 = vmatmul.mubr.f32.gmra.mrb[0].mxu0 %v2376
      %v2578 = vpop.f32.mrb[0].mxu0
      %v2579 = vadd.f32 0.0, %v2578
      %v2580 = vpop.f32.mrb[0].mxu0
      %2581 = vmatprep.mubr.f32.mxu0 0.0
      %2582 = vmatmul.mubr.f32.gmra.mrb[0].mxu0 %v2379
      %v2583 = vpop.f32.mrb[0].mxu0
      %v2584 = vadd.f32 0.0, %v2583
      %v2585 = vpop.f32.mrb[0].mxu0
      %2586 = vmatprep.mubr.f32.mxu0 0.0
      %2587 = vmatmul.mubr.f32.gmra.mrb[0].mxu0 %v2382
      %v2588 = vpop.f32.mrb[0].mxu0
      %v2589 = vadd.f32 0.0, %v2588
      %v2590 = vpop.f32.mrb[0].mxu0
      %2591 = vmatprep.mubr.f32.mxu0 0.0
      %2592 = vmatmul.mubr.f32.gmra.mrb[0].mxu0 %v2385
      %v2593 = vpop.f32.mrb[0].mxu0
      %v2594 = vadd.f32 0.0, %v2593
      %v2595 = vpop.f32.mrb[0].mxu0
      %2596 = vmatprep.mubr.f32.mxu0 0.0
      %2597 = vmatmul.mubr.f32.gmra.mrb[0].mxu0 %v2388
      %v2598 = vpop.f32.mrb[0].mxu0
      %v2599 = vadd.f32 0.0, %v2598
      %v2600 = vpop.f32.mrb[0].mxu0
      %2601 = vmatprep.mubr.f32.mxu0 0.0
      %2602 = vmatmul.mubr.f32.gmra.mrb[0].mxu0 %v2391
      %v2603 = vpop.f32.mrb[0].mxu0
      %v2604 = vadd.f32 0.0, %v2603
      %v2605 = vpop.f32.mrb[0].mxu0
      %2606 = vmatprep.mubr.f32.mxu0 0.0
      %2607 = vmatmul.mubr.f32.gmra.mrb[0].mxu0 %v2394
      %v2608 = vpop.f32.mrb[0].mxu0
      %v2609 = vadd.f32 0.0, %v2608
      %v2610 = vpop.f32.mrb[0].mxu0
      %2611 = vmatprep.mubr.f32.mxu0 0.0
      %2612 = vmatmul.mubr.f32.gmra.mrb[0].mxu0 %v2397
      %v2613 = vpop.f32.mrb[0].mxu0
      %v2614 = vadd.f32 0.0, %v2613
      %v2615 = vpop.f32.mrb[0].mxu0
      %2616 = vmatprep.mubr.f32.mxu0 0.0
      %2617 = vmatmul.mubr.f32.gmra.mrb[0].mxu0 %v2400
      %v2618 = vpop.f32.mrb[0].mxu0
      %v2619 = vadd.f32 0.0, %v2618
      %v2620 = vpop.f32.mrb[0].mxu0
      %2621 = vmatprep.mubr.f32.mxu0 0.0
      %2622 = vmatmul.mubr.f32.gmra.mrb[0].mxu0 %v2403
      %v2623 = vpop.f32.mrb[0].mxu0
      %v2624 = vadd.f32 0.0, %v2623
      %v2625 = vpop.f32.mrb[0].mxu0
      %2626 = vmatprep.mubr.f32.mxu0 0.0
      %2627 = vmatmul.mubr.f32.gmra.mrb[0].mxu0 %v2406
      %v2628 = vpop.f32.mrb[0].mxu0
      %v2629 = vadd.f32 0.0, %v2628
      %v2630 = vpop.f32.mrb[0].mxu0
      %2631 = vmatprep.mubr.f32.mxu0 0.0
      %2632 = vmatmul.mubr.f32.gmra.mrb[0].mxu0 %v2409
      %v2633 = vpop.f32.mrb[0].mxu0
      %v2634 = vadd.f32 0.0, %v2633
      %v2635 = vpop.f32.mrb[0].mxu0
      %2636 = vmatprep.mubr.f32.mxu0 0.0
      %2637 = vmatmul.mubr.f32.gmra.mrb[0].mxu0 %v2412
      %v2638 = vpop.f32.mrb[0].mxu0
      %v2639 = vadd.f32 0.0, %v2638
      %v2640 = vpop.f32.mrb[0].mxu0
      %2641 = vdwg.mxu0
      %v2642 = vadd.f32 %v2254, %v2484
      %v2643 = vadd.f32 %v2255, %v2489
      %v2644 = vadd.f32 %v2256, %v2494
      %v2645 = vadd.f32 %v2257, %v2499
      %v2646 = vadd.f32 %v2258, %v2504
      %v2647 = vadd.f32 %v2259, %v2509
      %v2648 = vadd.f32 %v2260, %v2514
      %v2649 = vadd.f32 %v2261, %v2519
      %v2650 = vadd.f32 %v2262, %v2524
      %v2651 = vadd.f32 %v2263, %v2529
      %v2652 = vadd.f32 %v2264, %v2534
      %v2653 = vadd.f32 %v2265, %v2539
      %v2654 = vadd.f32 %v2266, %v2544
      %v2655 = vadd.f32 %v2267, %v2549
      %v2656 = vadd.f32 %v2268, %v2554
      %v2657 = vadd.f32 %v2269, %v2559
      %v2658 = vadd.f32 %v2270, %v2564
      %v2659 = vadd.f32 %v2271, %v2569
      %v2660 = vadd.f32 %v2272, %v2574
      %v2661 = vadd.f32 %v2273, %v2579
      %v2662 = vadd.f32 %v2274, %v2584
      %v2663 = vadd.f32 %v2275, %v2589
      %v2664 = vadd.f32 %v2276, %v2594
      %v2665 = vadd.f32 %v2277, %v2599
      %v2666 = vadd.f32 %v2278, %v2604
      %v2667 = vadd.f32 %v2279, %v2609
      %v2668 = vadd.f32 %v2280, %v2614
      %v2669 = vadd.f32 %v2281, %v2619
      %v2670 = vadd.f32 %v2282, %v2624
      %v2671 = vadd.f32 %v2283, %v2629
      %v2672 = vadd.f32 %v2284, %v2634
      %v2673 = vadd.f32 %v2285, %v2639
      %s2674 = scalar_lea.vmem [#allocation2], 48
      %v2675 = vld [vmem:[%s2674] sm:$0xff]
      %v2676 = vld [vmem:[%s2674 + $0x8] sm:$0xff]
      %v2677 = vld [vmem:[%s2674 + $0x18] sm:$0xff]
      %v2678 = vld [vmem:[%s2674 + $0x20] sm:$0xff]
      %v2679 = vld [vmem:[%s2674 + $0x30] sm:$0xff]
      %v2680 = vld [vmem:[%s2674 + $0x38] sm:$0xff]
      %v2681 = vld [vmem:[%s2674 + $0x48] sm:$0xff]
      %v2682 = vld [vmem:[%s2674 + $0x50] sm:$0xff]
      %v2683 = vld [vmem:[%s2674 + $0x60] sm:$0xff]
      %v2684 = vld [vmem:[%s2674 + $0x68] sm:$0xff]
      %v2685 = vld [vmem:[%s2674 + $0x78] sm:$0xff]
      %v2686 = vld [vmem:[%s2674 + $0x80] sm:$0xff]
      %v2687 = vld [vmem:[%s2674 + $0x90] sm:$0xff]
      %v2688 = vld [vmem:[%s2674 + $0x98] sm:$0xff]
      %v2689 = vld [vmem:[%s2674 + $0xa8] sm:$0xff]
      %v2690 = vld [vmem:[%s2674 + $0xb0] sm:$0xff]
      %v2691 = vld [vmem:[%s2674 + $0xc0] sm:$0xff]
      %v2692 = vld [vmem:[%s2674 + $0xc8] sm:$0xff]
      %v2693 = vld [vmem:[%s2674 + $0xd8] sm:$0xff]
      %v2694 = vld [vmem:[%s2674 + $0xe0] sm:$0xff]
      %v2695 = vld [vmem:[%s2674 + $0xf0] sm:$0xff]
      %v2696 = vld [vmem:[%s2674 + $0xf8] sm:$0xff]
      %v2697 = vld [vmem:[%s2674 + $0x108] sm:$0xff]
      %v2698 = vld [vmem:[%s2674 + $0x110] sm:$0xff]
      %v2699 = vld [vmem:[%s2674 + $0x120] sm:$0xff]
      %v2700 = vld [vmem:[%s2674 + $0x128] sm:$0xff]
      %v2701 = vld [vmem:[%s2674 + $0x138] sm:$0xff]
      %v2702 = vld [vmem:[%s2674 + $0x140] sm:$0xff]
      %v2703 = vld [vmem:[%s2674 + $0x150] sm:$0xff]
      %v2704 = vld [vmem:[%s2674 + $0x158] sm:$0xff]
      %v2705 = vld [vmem:[%s2674 + $0x168] sm:$0xff]
      %v2706 = vld [vmem:[%s2674 + $0x170] sm:$0xff]
      %v2708 = vsel %vm279, %v2675, 0
      %v2711 = vsel %vm279, %v2676, 0
      %v2714 = vsel %vm279, %v2677, 0
      %v2717 = vsel %vm279, %v2678, 0
      %v2720 = vsel %vm279, %v2679, 0
      %v2723 = vsel %vm279, %v2680, 0
      %v2726 = vsel %vm279, %v2681, 0
      %v2729 = vsel %vm279, %v2682, 0
      %v2732 = vsel %vm279, %v2683, 0
      %v2735 = vsel %vm279, %v2684, 0
      %v2738 = vsel %vm279, %v2685, 0
      %v2741 = vsel %vm279, %v2686, 0
      %v2744 = vsel %vm279, %v2687, 0
      %v2747 = vsel %vm279, %v2688, 0
      %v2750 = vsel %vm279, %v2689, 0
      %v2753 = vsel %vm279, %v2690, 0
      %v2756 = vsel %vm279, %v2691, 0
      %v2759 = vsel %vm279, %v2692, 0
      %v2762 = vsel %vm279, %v2693, 0
      %v2765 = vsel %vm279, %v2694, 0
      %v2768 = vsel %vm279, %v2695, 0
      %v2771 = vsel %vm279, %v2696, 0
      %v2774 = vsel %vm279, %v2697, 0
      %v2777 = vsel %vm279, %v2698, 0
      %v2780 = vsel %vm279, %v2699, 0
      %v2783 = vsel %vm279, %v2700, 0
      %v2786 = vsel %vm279, %v2701, 0
      %v2789 = vsel %vm279, %v2702, 0
      %v2792 = vsel %vm279, %v2703, 0
      %v2795 = vsel %vm279, %v2704, 0
      %v2798 = vsel %vm279, %v2705, 0
      %v2801 = vsel %vm279, %v2706, 0
      %v2804 = vsel %vm569, %v406, 0
      %2806 = vmatprep.subr.mxu0 0.0
      %2807 = vmatpush1.msra.mxu0 %v2804
      %2808 = vmatprep.subr.mxu0 0.0
      %2809 = vmatpush1.msra.mxu0 0.0
      %2810 = vmatprep.subr.mxu0 0.0
      %2811 = vmatpush1.msra.mxu0 0.0
      %2812 = vmatprep.subr.mxu0 0.0
      %2813 = vmatpush1.msra.mxu0 0.0
      %2814 = vmatprep.subr.mxu0 0.0
      %2815 = vmatpush1.msra.mxu0 0.0
      %2816 = vmatprep.subr.mxu0 0.0
      %2817 = vmatpush1.msra.mxu0 0.0
      %2818 = vmatprep.subr.mxu0 0.0
      %2819 = vmatpush1.msra.mxu0 0.0
      %2820 = vmatprep.subr.mxu0 0.0
      %2821 = vmatpush1.msra.mxu0 0.0
      %2822 = vmatprep.subr.mxu0 0.0
      %2823 = vmatpush1.msra.mxu0 0.0
      %2824 = vmatprep.subr.mxu0 0.0
      %2825 = vmatpush1.msra.mxu0 0.0
      %2826 = vmatprep.subr.mxu0 0.0
      %2827 = vmatpush1.msra.mxu0 0.0
      %2828 = vmatprep.subr.mxu0 0.0
      %2829 = vmatpush1.msra.mxu0 0.0
      %2830 = vmatprep.subr.mxu0 0.0
      %2831 = vmatpush1.msra.mxu0 0.0
      %2832 = vmatprep.subr.mxu0 0.0
      %2833 = vmatpush1.msra.mxu0 0.0
      %2834 = vmatprep.subr.mxu0 0.0
      %2835 = vmatpush1.msra.mxu0 0.0
      %2836 = vmatprep.subr.mxu0 0.0
      %2837 = vmatpush1.msra.mxu0 0.0
      %2838 = vmatprep.subr.mxu0 0.0
      %2839 = vmatpush1.msra.mxu0 0.0
      %2840 = vmatprep.subr.mxu0 0.0
      %2841 = vmatpush1.msra.mxu0 0.0
      %2842 = vmatprep.subr.mxu0 0.0
      %2843 = vmatpush1.msra.mxu0 0.0
      %2844 = vmatprep.subr.mxu0 0.0
      %2845 = vmatpush1.msra.mxu0 0.0
      %2846 = vmatprep.subr.mxu0 0.0
      %2847 = vmatpush1.msra.mxu0 0.0
      %2848 = vmatprep.subr.mxu0 0.0
      %2849 = vmatpush1.msra.mxu0 0.0
      %2850 = vmatprep.subr.mxu0 0.0
      %2851 = vmatpush1.msra.mxu0 0.0
      %2852 = vmatprep.subr.mxu0 0.0
      %2853 = vmatpush1.msra.mxu0 0.0
      %2854 = vmatprep.subr.mxu0 0.0
      %2855 = vmatpush1.msra.mxu0 0.0
      %2856 = vmatprep.subr.mxu0 0.0
      %2857 = vmatpush1.msra.mxu0 0.0
      %2858 = vmatprep.subr.mxu0 0.0
      %2859 = vmatpush1.msra.mxu0 0.0
      %2860 = vmatprep.subr.mxu0 0.0
      %2861 = vmatpush1.msra.mxu0 0.0
      %2862 = vmatprep.subr.mxu0 0.0
      %2863 = vmatpush1.msra.mxu0 0.0
      %2864 = vmatprep.subr.mxu0 0.0
      %2865 = vmatpush1.msra.mxu0 0.0
      %2866 = vmatprep.subr.mxu0 0.0
      %2867 = vmatpush1.msra.mxu0 0.0
      %2868 = vmatprep.subr.mxu0 0.0
      %2869 = vmatpush1.msra.mxu0 0.0
      %2870 = vmatprep.mubr.f32.mxu0 0.0
      %2871 = vmatmul.mubr.f32.gmra.mrb[0].mxu0 %v2708
      %v2872 = vpop.f32.mrb[0].mxu0
      %v2873 = vadd.f32 0.0, %v2872
      %v2874 = vpop.f32.mrb[0].mxu0
      %2875 = vmatprep.mubr.f32.mxu0 0.0
      %2876 = vmatmul.mubr.f32.gmra.mrb[0].mxu0 %v2711
      %v2877 = vpop.f32.mrb[0].mxu0
      %v2878 = vadd.f32 0.0, %v2877
      %v2879 = vpop.f32.mrb[0].mxu0
      %2880 = vmatprep.mubr.f32.mxu0 0.0
      %2881 = vmatmul.mubr.f32.gmra.mrb[0].mxu0 %v2714
      %v2882 = vpop.f32.mrb[0].mxu0
      %v2883 = vadd.f32 0.0, %v2882
      %v2884 = vpop.f32.mrb[0].mxu0
      %2885 = vmatprep.mubr.f32.mxu0 0.0
      %2886 = vmatmul.mubr.f32.gmra.mrb[0].mxu0 %v2717
      %v2887 = vpop.f32.mrb[0].mxu0
      %v2888 = vadd.f32 0.0, %v2887
      %v2889 = vpop.f32.mrb[0].mxu0
      %2890 = vmatprep.mubr.f32.mxu0 0.0
      %2891 = vmatmul.mubr.f32.gmra.mrb[0].mxu0 %v2720
      %v2892 = vpop.f32.mrb[0].mxu0
      %v2893 = vadd.f32 0.0, %v2892
      %v2894 = vpop.f32.mrb[0].mxu0
      %2895 = vmatprep.mubr.f32.mxu0 0.0
      %2896 = vmatmul.mubr.f32.gmra.mrb[0].mxu0 %v2723
      %v2897 = vpop.f32.mrb[0].mxu0
      %v2898 = vadd.f32 0.0, %v2897
      %v2899 = vpop.f32.mrb[0].mxu0
      %2900 = vmatprep.mubr.f32.mxu0 0.0
      %2901 = vmatmul.mubr.f32.gmra.mrb[0].mxu0 %v2726
      %v2902 = vpop.f32.mrb[0].mxu0
      %v2903 = vadd.f32 0.0, %v2902
      %v2904 = vpop.f32.mrb[0].mxu0
      %2905 = vmatprep.mubr.f32.mxu0 0.0
      %2906 = vmatmul.mubr.f32.gmra.mrb[0].mxu0 %v2729
      %v2907 = vpop.f32.mrb[0].mxu0
      %v2908 = vadd.f32 0.0, %v2907
      %v2909 = vpop.f32.mrb[0].mxu0
      %2910 = vmatprep.mubr.f32.mxu0 0.0
      %2911 = vmatmul.mubr.f32.gmra.mrb[0].mxu0 %v2732
      %v2912 = vpop.f32.mrb[0].mxu0
      %v2913 = vadd.f32 0.0, %v2912
      %v2914 = vpop.f32.mrb[0].mxu0
      %2915 = vmatprep.mubr.f32.mxu0 0.0
      %2916 = vmatmul.mubr.f32.gmra.mrb[0].mxu0 %v2735
      %v2917 = vpop.f32.mrb[0].mxu0
      %v2918 = vadd.f32 0.0, %v2917
      %v2919 = vpop.f32.mrb[0].mxu0
      %2920 = vmatprep.mubr.f32.mxu0 0.0
      %2921 = vmatmul.mubr.f32.gmra.mrb[0].mxu0 %v2738
      %v2922 = vpop.f32.mrb[0].mxu0
      %v2923 = vadd.f32 0.0, %v2922
      %v2924 = vpop.f32.mrb[0].mxu0
      %2925 = vmatprep.mubr.f32.mxu0 0.0
      %2926 = vmatmul.mubr.f32.gmra.mrb[0].mxu0 %v2741
      %v2927 = vpop.f32.mrb[0].mxu0
      %v2928 = vadd.f32 0.0, %v2927
      %v2929 = vpop.f32.mrb[0].mxu0
      %2930 = vmatprep.mubr.f32.mxu0 0.0
      %2931 = vmatmul.mubr.f32.gmra.mrb[0].mxu0 %v2744
      %v2932 = vpop.f32.mrb[0].mxu0
      %v2933 = vadd.f32 0.0, %v2932
      %v2934 = vpop.f32.mrb[0].mxu0
      %2935 = vmatprep.mubr.f32.mxu0 0.0
      %2936 = vmatmul.mubr.f32.gmra.mrb[0].mxu0 %v2747
      %v2937 = vpop.f32.mrb[0].mxu0
      %v2938 = vadd.f32 0.0, %v2937
      %v2939 = vpop.f32.mrb[0].mxu0
      %2940 = vmatprep.mubr.f32.mxu0 0.0
      %2941 = vmatmul.mubr.f32.gmra.mrb[0].mxu0 %v2750
      %v2942 = vpop.f32.mrb[0].mxu0
      %v2943 = vadd.f32 0.0, %v2942
      %v2944 = vpop.f32.mrb[0].mxu0
      %2945 = vmatprep.mubr.f32.mxu0 0.0
      %2946 = vmatmul.mubr.f32.gmra.mrb[0].mxu0 %v2753
      %v2947 = vpop.f32.mrb[0].mxu0
      %v2948 = vadd.f32 0.0, %v2947
      %v2949 = vpop.f32.mrb[0].mxu0
      %2950 = vmatprep.mubr.f32.mxu0 0.0
      %2951 = vmatmul.mubr.f32.gmra.mrb[0].mxu0 %v2756
      %v2952 = vpop.f32.mrb[0].mxu0
      %v2953 = vadd.f32 0.0, %v2952
      %v2954 = vpop.f32.mrb[0].mxu0
      %2955 = vmatprep.mubr.f32.mxu0 0.0
      %2956 = vmatmul.mubr.f32.gmra.mrb[0].mxu0 %v2759
      %v2957 = vpop.f32.mrb[0].mxu0
      %v2958 = vadd.f32 0.0, %v2957
      %v2959 = vpop.f32.mrb[0].mxu0
      %2960 = vmatprep.mubr.f32.mxu0 0.0
      %2961 = vmatmul.mubr.f32.gmra.mrb[0].mxu0 %v2762
      %v2962 = vpop.f32.mrb[0].mxu0
      %v2963 = vadd.f32 0.0, %v2962
      %v2964 = vpop.f32.mrb[0].mxu0
      %2965 = vmatprep.mubr.f32.mxu0 0.0
      %2966 = vmatmul.mubr.f32.gmra.mrb[0].mxu0 %v2765
      %v2967 = vpop.f32.mrb[0].mxu0
      %v2968 = vadd.f32 0.0, %v2967
      %v2969 = vpop.f32.mrb[0].mxu0
      %2970 = vmatprep.mubr.f32.mxu0 0.0
      %2971 = vmatmul.mubr.f32.gmra.mrb[0].mxu0 %v2768
      %v2972 = vpop.f32.mrb[0].mxu0
      %v2973 = vadd.f32 0.0, %v2972
      %v2974 = vpop.f32.mrb[0].mxu0
      %2975 = vmatprep.mubr.f32.mxu0 0.0
      %2976 = vmatmul.mubr.f32.gmra.mrb[0].mxu0 %v2771
      %v2977 = vpop.f32.mrb[0].mxu0
      %v2978 = vadd.f32 0.0, %v2977
      %v2979 = vpop.f32.mrb[0].mxu0
      %2980 = vmatprep.mubr.f32.mxu0 0.0
      %2981 = vmatmul.mubr.f32.gmra.mrb[0].mxu0 %v2774
      %v2982 = vpop.f32.mrb[0].mxu0
      %v2983 = vadd.f32 0.0, %v2982
      %v2984 = vpop.f32.mrb[0].mxu0
      %2985 = vmatprep.mubr.f32.mxu0 0.0
      %2986 = vmatmul.mubr.f32.gmra.mrb[0].mxu0 %v2777
      %v2987 = vpop.f32.mrb[0].mxu0
      %v2988 = vadd.f32 0.0, %v2987
      %v2989 = vpop.f32.mrb[0].mxu0
      %2990 = vmatprep.mubr.f32.mxu0 0.0
      %2991 = vmatmul.mubr.f32.gmra.mrb[0].mxu0 %v2780
      %v2992 = vpop.f32.mrb[0].mxu0
      %v2993 = vadd.f32 0.0, %v2992
      %v2994 = vpop.f32.mrb[0].mxu0
      %2995 = vmatprep.mubr.f32.mxu0 0.0
      %2996 = vmatmul.mubr.f32.gmra.mrb[0].mxu0 %v2783
      %v2997 = vpop.f32.mrb[0].mxu0
      %v2998 = vadd.f32 0.0, %v2997
      %v2999 = vpop.f32.mrb[0].mxu0
      %3000 = vmatprep.mubr.f32.mxu0 0.0
      %3001 = vmatmul.mubr.f32.gmra.mrb[0].mxu0 %v2786
      %v3002 = vpop.f32.mrb[0].mxu0
      %v3003 = vadd.f32 0.0, %v3002
      %v3004 = vpop.f32.mrb[0].mxu0
      %3005 = vmatprep.mubr.f32.mxu0 0.0
      %3006 = vmatmul.mubr.f32.gmra.mrb[0].mxu0 %v2789
      %v3007 = vpop.f32.mrb[0].mxu0
      %v3008 = vadd.f32 0.0, %v3007
      %v3009 = vpop.f32.mrb[0].mxu0
      %3010 = vmatprep.mubr.f32.mxu0 0.0
      %3011 = vmatmul.mubr.f32.gmra.mrb[0].mxu0 %v2792
      %v3012 = vpop.f32.mrb[0].mxu0
      %v3013 = vadd.f32 0.0, %v3012
      %v3014 = vpop.f32.mrb[0].mxu0
      %3015 = vmatprep.mubr.f32.mxu0 0.0
      %3016 = vmatmul.mubr.f32.gmra.mrb[0].mxu0 %v2795
      %v3017 = vpop.f32.mrb[0].mxu0
      %v3018 = vadd.f32 0.0, %v3017
      %v3019 = vpop.f32.mrb[0].mxu0
      %3020 = vmatprep.mubr.f32.mxu0 0.0
      %3021 = vmatmul.mubr.f32.gmra.mrb[0].mxu0 %v2798
      %v3022 = vpop.f32.mrb[0].mxu0
      %v3023 = vadd.f32 0.0, %v3022
      %v3024 = vpop.f32.mrb[0].mxu0
      %3025 = vmatprep.mubr.f32.mxu0 0.0
      %3026 = vmatmul.mubr.f32.gmra.mrb[0].mxu0 %v2801
      %v3027 = vpop.f32.mrb[0].mxu0
      %v3028 = vadd.f32 0.0, %v3027
      %v3029 = vpop.f32.mrb[0].mxu0
      %3030 = vdwg.mxu0
      %v3031 = vadd.f32 %v2642, %v2873
      %v3032 = vadd.f32 %v2643, %v2878
      %v3033 = vadd.f32 %v2644, %v2883
      %v3034 = vadd.f32 %v2645, %v2888
      %v3035 = vadd.f32 %v2646, %v2893
      %v3036 = vadd.f32 %v2647, %v2898
      %v3037 = vadd.f32 %v2648, %v2903
      %v3038 = vadd.f32 %v2649, %v2908
      %v3039 = vadd.f32 %v2650, %v2913
      %v3040 = vadd.f32 %v2651, %v2918
      %v3041 = vadd.f32 %v2652, %v2923
      %v3042 = vadd.f32 %v2653, %v2928
      %v3043 = vadd.f32 %v2654, %v2933
      %v3044 = vadd.f32 %v2655, %v2938
      %v3045 = vadd.f32 %v2656, %v2943
      %v3046 = vadd.f32 %v2657, %v2948
      %v3047 = vadd.f32 %v2658, %v2953
      %v3048 = vadd.f32 %v2659, %v2958
      %v3049 = vadd.f32 %v2660, %v2963
      %v3050 = vadd.f32 %v2661, %v2968
      %v3051 = vadd.f32 %v2662, %v2973
      %v3052 = vadd.f32 %v2663, %v2978
      %v3053 = vadd.f32 %v2664, %v2983
      %v3054 = vadd.f32 %v2665, %v2988
      %v3055 = vadd.f32 %v2666, %v2993
      %v3056 = vadd.f32 %v2667, %v2998
      %v3057 = vadd.f32 %v2668, %v3003
      %v3058 = vadd.f32 %v2669, %v3008
      %v3059 = vadd.f32 %v2670, %v3013
      %v3060 = vadd.f32 %v2671, %v3018
      %v3061 = vadd.f32 %v2672, %v3023
      %v3062 = vadd.f32 %v2673, %v3028
      %v3063 = vld [vmem:[%s2674 + $0x1] sm:$0xff]
      %v3064 = vld [vmem:[%s2674 + $0x9] sm:$0xff]
      %v3065 = vld [vmem:[%s2674 + $0x19] sm:$0xff]
      %v3066 = vld [vmem:[%s2674 + $0x21] sm:$0xff]
      %v3067 = vld [vmem:[%s2674 + $0x31] sm:$0xff]
      %v3068 = vld [vmem:[%s2674 + $0x39] sm:$0xff]
      %v3069 = vld [vmem:[%s2674 + $0x49] sm:$0xff]
      %v3070 = vld [vmem:[%s2674 + $0x51] sm:$0xff]
      %v3071 = vld [vmem:[%s2674 + $0x61] sm:$0xff]
      %v3072 = vld [vmem:[%s2674 + $0x69] sm:$0xff]
      %v3073 = vld [vmem:[%s2674 + $0x79] sm:$0xff]
      %v3074 = vld [vmem:[%s2674 + $0x81] sm:$0xff]
      %v3075 = vld [vmem:[%s2674 + $0x91] sm:$0xff]
      %v3076 = vld [vmem:[%s2674 + $0x99] sm:$0xff]
      %v3077 = vld [vmem:[%s2674 + $0xa9] sm:$0xff]
      %v3078 = vld [vmem:[%s2674 + $0xb1] sm:$0xff]
      %v3079 = vld [vmem:[%s2674 + $0xc1] sm:$0xff]
      %v3080 = vld [vmem:[%s2674 + $0xc9] sm:$0xff]
      %v3081 = vld [vmem:[%s2674 + $0xd9] sm:$0xff]
      %v3082 = vld [vmem:[%s2674 + $0xe1] sm:$0xff]
      %v3083 = vld [vmem:[%s2674 + $0xf1] sm:$0xff]
      %v3084 = vld [vmem:[%s2674 + $0xf9] sm:$0xff]
      %v3085 = vld [vmem:[%s2674 + $0x109] sm:$0xff]
      %v3086 = vld [vmem:[%s2674 + $0x111] sm:$0xff]
      %v3087 = vld [vmem:[%s2674 + $0x121] sm:$0xff]
      %v3088 = vld [vmem:[%s2674 + $0x129] sm:$0xff]
      %v3089 = vld [vmem:[%s2674 + $0x139] sm:$0xff]
      %v3090 = vld [vmem:[%s2674 + $0x141] sm:$0xff]
      %v3091 = vld [vmem:[%s2674 + $0x151] sm:$0xff]
      %v3092 = vld [vmem:[%s2674 + $0x159] sm:$0xff]
      %v3093 = vld [vmem:[%s2674 + $0x169] sm:$0xff]
      %v3094 = vld [vmem:[%s2674 + $0x171] sm:$0xff]
      %v3096 = vsel %vm279, %v3063, 0
      %v3099 = vsel %vm279, %v3064, 0
      %v3102 = vsel %vm279, %v3065, 0
      %v3105 = vsel %vm279, %v3066, 0
      %v3108 = vsel %vm279, %v3067, 0
      %v3111 = vsel %vm279, %v3068, 0
      %v3114 = vsel %vm279, %v3069, 0
      %v3117 = vsel %vm279, %v3070, 0
      %v3120 = vsel %vm279, %v3071, 0
      %v3123 = vsel %vm279, %v3072, 0
      %v3126 = vsel %vm279, %v3073, 0
      %v3129 = vsel %vm279, %v3074, 0
      %v3132 = vsel %vm279, %v3075, 0
      %v3135 = vsel %vm279, %v3076, 0
      %v3138 = vsel %vm279, %v3077, 0
      %v3141 = vsel %vm279, %v3078, 0
      %v3144 = vsel %vm279, %v3079, 0
      %v3147 = vsel %vm279, %v3080, 0
      %v3150 = vsel %vm279, %v3081, 0
      %v3153 = vsel %vm279, %v3082, 0
      %v3156 = vsel %vm279, %v3083, 0
      %v3159 = vsel %vm279, %v3084, 0
      %v3162 = vsel %vm279, %v3085, 0
      %v3165 = vsel %vm279, %v3086, 0
      %v3168 = vsel %vm279, %v3087, 0
      %v3171 = vsel %vm279, %v3088, 0
      %v3174 = vsel %vm279, %v3089, 0
      %v3177 = vsel %vm279, %v3090, 0
      %v3180 = vsel %vm279, %v3091, 0
      %v3183 = vsel %vm279, %v3092, 0
      %v3186 = vsel %vm279, %v3093, 0
      %v3189 = vsel %vm279, %v3094, 0
      %v3192 = vsel %vm569, %v407, 0
      %3194 = vmatprep.subr.mxu0 0.0
      %3195 = vmatpush1.msra.mxu0 %v3192
      %3196 = vmatprep.subr.mxu0 0.0
      %3197 = vmatpush1.msra.mxu0 0.0
      %3198 = vmatprep.subr.mxu0 0.0
      %3199 = vmatpush1.msra.mxu0 0.0
      %3200 = vmatprep.subr.mxu0 0.0
      %3201 = vmatpush1.msra.mxu0 0.0
      %3202 = vmatprep.subr.mxu0 0.0
      %3203 = vmatpush1.msra.mxu0 0.0
      %3204 = vmatprep.subr.mxu0 0.0
      %3205 = vmatpush1.msra.mxu0 0.0
      %3206 = vmatprep.subr.mxu0 0.0
      %3207 = vmatpush1.msra.mxu0 0.0
      %3208 = vmatprep.subr.mxu0 0.0
      %3209 = vmatpush1.msra.mxu0 0.0
      %3210 = vmatprep.subr.mxu0 0.0
      %3211 = vmatpush1.msra.mxu0 0.0
      %3212 = vmatprep.subr.mxu0 0.0
      %3213 = vmatpush1.msra.mxu0 0.0
      %3214 = vmatprep.subr.mxu0 0.0
      %3215 = vmatpush1.msra.mxu0 0.0
      %3216 = vmatprep.subr.mxu0 0.0
      %3217 = vmatpush1.msra.mxu0 0.0
      %3218 = vmatprep.subr.mxu0 0.0
      %3219 = vmatpush1.msra.mxu0 0.0
      %3220 = vmatprep.subr.mxu0 0.0
      %3221 = vmatpush1.msra.mxu0 0.0
      %3222 = vmatprep.subr.mxu0 0.0
      %3223 = vmatpush1.msra.mxu0 0.0
      %3224 = vmatprep.subr.mxu0 0.0
      %3225 = vmatpush1.msra.mxu0 0.0
      %3226 = vmatprep.subr.mxu0 0.0
      %3227 = vmatpush1.msra.mxu0 0.0
      %3228 = vmatprep.subr.mxu0 0.0
      %3229 = vmatpush1.msra.mxu0 0.0
      %3230 = vmatprep.subr.mxu0 0.0
      %3231 = vmatpush1.msra.mxu0 0.0
      %3232 = vmatprep.subr.mxu0 0.0
      %3233 = vmatpush1.msra.mxu0 0.0
      %3234 = vmatprep.subr.mxu0 0.0
      %3235 = vmatpush1.msra.mxu0 0.0
      %3236 = vmatprep.subr.mxu0 0.0
      %3237 = vmatpush1.msra.mxu0 0.0
      %3238 = vmatprep.subr.mxu0 0.0
      %3239 = vmatpush1.msra.mxu0 0.0
      %3240 = vmatprep.subr.mxu0 0.0
      %3241 = vmatpush1.msra.mxu0 0.0
      %3242 = vmatprep.subr.mxu0 0.0
      %3243 = vmatpush1.msra.mxu0 0.0
      %3244 = vmatprep.subr.mxu0 0.0
      %3245 = vmatpush1.msra.mxu0 0.0
      %3246 = vmatprep.subr.mxu0 0.0
      %3247 = vmatpush1.msra.mxu0 0.0
      %3248 = vmatprep.subr.mxu0 0.0
      %3249 = vmatpush1.msra.mxu0 0.0
      %3250 = vmatprep.subr.mxu0 0.0
      %3251 = vmatpush1.msra.mxu0 0.0
      %3252 = vmatprep.subr.mxu0 0.0
      %3253 = vmatpush1.msra.mxu0 0.0
      %3254 = vmatprep.subr.mxu0 0.0
      %3255 = vmatpush1.msra.mxu0 0.0
      %3256 = vmatprep.subr.mxu0 0.0
      %3257 = vmatpush1.msra.mxu0 0.0
      %3258 = vmatprep.mubr.f32.mxu0 0.0
      %3259 = vmatmul.mubr.f32.gmra.mrb[0].mxu0 %v3096
      %v3260 = vpop.f32.mrb[0].mxu0
      %v3261 = vadd.f32 0.0, %v3260
      %v3262 = vpop.f32.mrb[0].mxu0
      %3263 = vmatprep.mubr.f32.mxu0 0.0
      %3264 = vmatmul.mubr.f32.gmra.mrb[0].mxu0 %v3099
      %v3265 = vpop.f32.mrb[0].mxu0
      %v3266 = vadd.f32 0.0, %v3265
      %v3267 = vpop.f32.mrb[0].mxu0
      %3268 = vmatprep.mubr.f32.mxu0 0.0
      %3269 = vmatmul.mubr.f32.gmra.mrb[0].mxu0 %v3102
      %v3270 = vpop.f32.mrb[0].mxu0
      %v3271 = vadd.f32 0.0, %v3270
      %v3272 = vpop.f32.mrb[0].mxu0
      %3273 = vmatprep.mubr.f32.mxu0 0.0
      %3274 = vmatmul.mubr.f32.gmra.mrb[0].mxu0 %v3105
      %v3275 = vpop.f32.mrb[0].mxu0
      %v3276 = vadd.f32 0.0, %v3275
      %v3277 = vpop.f32.mrb[0].mxu0
      %3278 = vmatprep.mubr.f32.mxu0 0.0
      %3279 = vmatmul.mubr.f32.gmra.mrb[0].mxu0 %v3108
      %v3280 = vpop.f32.mrb[0].mxu0
      %v3281 = vadd.f32 0.0, %v3280
      %v3282 = vpop.f32.mrb[0].mxu0
      %3283 = vmatprep.mubr.f32.mxu0 0.0
      %3284 = vmatmul.mubr.f32.gmra.mrb[0].mxu0 %v3111
      %v3285 = vpop.f32.mrb[0].mxu0
      %v3286 = vadd.f32 0.0, %v3285
      %v3287 = vpop.f32.mrb[0].mxu0
      %3288 = vmatprep.mubr.f32.mxu0 0.0
      %3289 = vmatmul.mubr.f32.gmra.mrb[0].mxu0 %v3114
      %v3290 = vpop.f32.mrb[0].mxu0
      %v3291 = vadd.f32 0.0, %v3290
      %v3292 = vpop.f32.mrb[0].mxu0
      %3293 = vmatprep.mubr.f32.mxu0 0.0
      %3294 = vmatmul.mubr.f32.gmra.mrb[0].mxu0 %v3117
      %v3295 = vpop.f32.mrb[0].mxu0
      %v3296 = vadd.f32 0.0, %v3295
      %v3297 = vpop.f32.mrb[0].mxu0
      %3298 = vmatprep.mubr.f32.mxu0 0.0
      %3299 = vmatmul.mubr.f32.gmra.mrb[0].mxu0 %v3120
      %v3300 = vpop.f32.mrb[0].mxu0
      %v3301 = vadd.f32 0.0, %v3300
      %v3302 = vpop.f32.mrb[0].mxu0
      %3303 = vmatprep.mubr.f32.mxu0 0.0
      %3304 = vmatmul.mubr.f32.gmra.mrb[0].mxu0 %v3123
      %v3305 = vpop.f32.mrb[0].mxu0
      %v3306 = vadd.f32 0.0, %v3305
      %v3307 = vpop.f32.mrb[0].mxu0
      %3308 = vmatprep.mubr.f32.mxu0 0.0
      %3309 = vmatmul.mubr.f32.gmra.mrb[0].mxu0 %v3126
      %v3310 = vpop.f32.mrb[0].mxu0
      %v3311 = vadd.f32 0.0, %v3310
      %v3312 = vpop.f32.mrb[0].mxu0
      %3313 = vmatprep.mubr.f32.mxu0 0.0
      %3314 = vmatmul.mubr.f32.gmra.mrb[0].mxu0 %v3129
      %v3315 = vpop.f32.mrb[0].mxu0
      %v3316 = vadd.f32 0.0, %v3315
      %v3317 = vpop.f32.mrb[0].mxu0
      %3318 = vmatprep.mubr.f32.mxu0 0.0
      %3319 = vmatmul.mubr.f32.gmra.mrb[0].mxu0 %v3132
      %v3320 = vpop.f32.mrb[0].mxu0
      %v3321 = vadd.f32 0.0, %v3320
      %v3322 = vpop.f32.mrb[0].mxu0
      %3323 = vmatprep.mubr.f32.mxu0 0.0
      %3324 = vmatmul.mubr.f32.gmra.mrb[0].mxu0 %v3135
      %v3325 = vpop.f32.mrb[0].mxu0
      %v3326 = vadd.f32 0.0, %v3325
      %v3327 = vpop.f32.mrb[0].mxu0
      %3328 = vmatprep.mubr.f32.mxu0 0.0
      %3329 = vmatmul.mubr.f32.gmra.mrb[0].mxu0 %v3138
      %v3330 = vpop.f32.mrb[0].mxu0
      %v3331 = vadd.f32 0.0, %v3330
      %v3332 = vpop.f32.mrb[0].mxu0
      %3333 = vmatprep.mubr.f32.mxu0 0.0
      %3334 = vmatmul.mubr.f32.gmra.mrb[0].mxu0 %v3141
      %v3335 = vpop.f32.mrb[0].mxu0
      %v3336 = vadd.f32 0.0, %v3335
      %v3337 = vpop.f32.mrb[0].mxu0
      %3338 = vmatprep.mubr.f32.mxu0 0.0
      %3339 = vmatmul.mubr.f32.gmra.mrb[0].mxu0 %v3144
      %v3340 = vpop.f32.mrb[0].mxu0
      %v3341 = vadd.f32 0.0, %v3340
      %v3342 = vpop.f32.mrb[0].mxu0
      %3343 = vmatprep.mubr.f32.mxu0 0.0
      %3344 = vmatmul.mubr.f32.gmra.mrb[0].mxu0 %v3147
      %v3345 = vpop.f32.mrb[0].mxu0
      %v3346 = vadd.f32 0.0, %v3345
      %v3347 = vpop.f32.mrb[0].mxu0
      %3348 = vmatprep.mubr.f32.mxu0 0.0
      %3349 = vmatmul.mubr.f32.gmra.mrb[0].mxu0 %v3150
      %v3350 = vpop.f32.mrb[0].mxu0
      %v3351 = vadd.f32 0.0, %v3350
      %v3352 = vpop.f32.mrb[0].mxu0
      %3353 = vmatprep.mubr.f32.mxu0 0.0
      %3354 = vmatmul.mubr.f32.gmra.mrb[0].mxu0 %v3153
      %v3355 = vpop.f32.mrb[0].mxu0
      %v3356 = vadd.f32 0.0, %v3355
      %v3357 = vpop.f32.mrb[0].mxu0
      %3358 = vmatprep.mubr.f32.mxu0 0.0
      %3359 = vmatmul.mubr.f32.gmra.mrb[0].mxu0 %v3156
      %v3360 = vpop.f32.mrb[0].mxu0
      %v3361 = vadd.f32 0.0, %v3360
      %v3362 = vpop.f32.mrb[0].mxu0
      %3363 = vmatprep.mubr.f32.mxu0 0.0
      %3364 = vmatmul.mubr.f32.gmra.mrb[0].mxu0 %v3159
      %v3365 = vpop.f32.mrb[0].mxu0
      %v3366 = vadd.f32 0.0, %v3365
      %v3367 = vpop.f32.mrb[0].mxu0
      %3368 = vmatprep.mubr.f32.mxu0 0.0
      %3369 = vmatmul.mubr.f32.gmra.mrb[0].mxu0 %v3162
      %v3370 = vpop.f32.mrb[0].mxu0
      %v3371 = vadd.f32 0.0, %v3370
      %v3372 = vpop.f32.mrb[0].mxu0
      %3373 = vmatprep.mubr.f32.mxu0 0.0
      %3374 = vmatmul.mubr.f32.gmra.mrb[0].mxu0 %v3165
      %v3375 = vpop.f32.mrb[0].mxu0
      %v3376 = vadd.f32 0.0, %v3375
      %v3377 = vpop.f32.mrb[0].mxu0
      %3378 = vmatprep.mubr.f32.mxu0 0.0
      %3379 = vmatmul.mubr.f32.gmra.mrb[0].mxu0 %v3168
      %v3380 = vpop.f32.mrb[0].mxu0
      %v3381 = vadd.f32 0.0, %v3380
      %v3382 = vpop.f32.mrb[0].mxu0
      %3383 = vmatprep.mubr.f32.mxu0 0.0
      %3384 = vmatmul.mubr.f32.gmra.mrb[0].mxu0 %v3171
      %v3385 = vpop.f32.mrb[0].mxu0
      %v3386 = vadd.f32 0.0, %v3385
      %v3387 = vpop.f32.mrb[0].mxu0
      %3388 = vmatprep.mubr.f32.mxu0 0.0
      %3389 = vmatmul.mubr.f32.gmra.mrb[0].mxu0 %v3174
      %v3390 = vpop.f32.mrb[0].mxu0
      %v3391 = vadd.f32 0.0, %v3390
      %v3392 = vpop.f32.mrb[0].mxu0
      %3393 = vmatprep.mubr.f32.mxu0 0.0
      %3394 = vmatmul.mubr.f32.gmra.mrb[0].mxu0 %v3177
      %v3395 = vpop.f32.mrb[0].mxu0
      %v3396 = vadd.f32 0.0, %v3395
      %v3397 = vpop.f32.mrb[0].mxu0
      %3398 = vmatprep.mubr.f32.mxu0 0.0
      %3399 = vmatmul.mubr.f32.gmra.mrb[0].mxu0 %v3180
      %v3400 = vpop.f32.mrb[0].mxu0
      %v3401 = vadd.f32 0.0, %v3400
      %v3402 = vpop.f32.mrb[0].mxu0
      %3403 = vmatprep.mubr.f32.mxu0 0.0
      %3404 = vmatmul.mubr.f32.gmra.mrb[0].mxu0 %v3183
      %v3405 = vpop.f32.mrb[0].mxu0
      %v3406 = vadd.f32 0.0, %v3405
      %v3407 = vpop.f32.mrb[0].mxu0
      %3408 = vmatprep.mubr.f32.mxu0 0.0
      %3409 = vmatmul.mubr.f32.gmra.mrb[0].mxu0 %v3186
      %v3410 = vpop.f32.mrb[0].mxu0
      %v3411 = vadd.f32 0.0, %v3410
      %v3412 = vpop.f32.mrb[0].mxu0
      %3413 = vmatprep.mubr.f32.mxu0 0.0
      %3414 = vmatmul.mubr.f32.gmra.mrb[0].mxu0 %v3189
      %v3415 = vpop.f32.mrb[0].mxu0
      %v3416 = vadd.f32 0.0, %v3415
      %v3417 = vpop.f32.mrb[0].mxu0
      %3418 = vdwg.mxu0
      %v3419 = vadd.f32 %v3031, %v3261
      %v3420 = vadd.f32 %v3032, %v3266
      %v3421 = vadd.f32 %v3033, %v3271
      %v3422 = vadd.f32 %v3034, %v3276
      %v3423 = vadd.f32 %v3035, %v3281
      %v3424 = vadd.f32 %v3036, %v3286
      %v3425 = vadd.f32 %v3037, %v3291
      %v3426 = vadd.f32 %v3038, %v3296
      %v3427 = vadd.f32 %v3039, %v3301
      %v3428 = vadd.f32 %v3040, %v3306
      %v3429 = vadd.f32 %v3041, %v3311
      %v3430 = vadd.f32 %v3042, %v3316
      %v3431 = vadd.f32 %v3043, %v3321
      %v3432 = vadd.f32 %v3044, %v3326
      %v3433 = vadd.f32 %v3045, %v3331
      %v3434 = vadd.f32 %v3046, %v3336
      %v3435 = vadd.f32 %v3047, %v3341
      %v3436 = vadd.f32 %v3048, %v3346
      %v3437 = vadd.f32 %v3049, %v3351
      %v3438 = vadd.f32 %v3050, %v3356
      %v3439 = vadd.f32 %v3051, %v3361
      %v3440 = vadd.f32 %v3052, %v3366
      %v3441 = vadd.f32 %v3053, %v3371
      %v3442 = vadd.f32 %v3054, %v3376
      %v3443 = vadd.f32 %v3055, %v3381
      %v3444 = vadd.f32 %v3056, %v3386
      %v3445 = vadd.f32 %v3057, %v3391
      %v3446 = vadd.f32 %v3058, %v3396
      %v3447 = vadd.f32 %v3059, %v3401
      %v3448 = vadd.f32 %v3060, %v3406
      %v3449 = vadd.f32 %v3061, %v3411
      %v3450 = vadd.f32 %v3062, %v3416
      %v3451 = vld [vmem:[%s2674 + $0x2] sm:$0xff]
      %v3452 = vld [vmem:[%s2674 + $0xa] sm:$0xff]
      %v3453 = vld [vmem:[%s2674 + $0x1a] sm:$0xff]
      %v3454 = vld [vmem:[%s2674 + $0x22] sm:$0xff]
      %v3455 = vld [vmem:[%s2674 + $0x32] sm:$0xff]
      %v3456 = vld [vmem:[%s2674 + $0x3a] sm:$0xff]
      %v3457 = vld [vmem:[%s2674 + $0x4a] sm:$0xff]
      %v3458 = vld [vmem:[%s2674 + $0x52] sm:$0xff]
      %v3459 = vld [vmem:[%s2674 + $0x62] sm:$0xff]
      %v3460 = vld [vmem:[%s2674 + $0x6a] sm:$0xff]
      %v3461 = vld [vmem:[%s2674 + $0x7a] sm:$0xff]
      %v3462 = vld [vmem:[%s2674 + $0x82] sm:$0xff]
      %v3463 = vld [vmem:[%s2674 + $0x92] sm:$0xff]
      %v3464 = vld [vmem:[%s2674 + $0x9a] sm:$0xff]
      %v3465 = vld [vmem:[%s2674 + $0xaa] sm:$0xff]
      %v3466 = vld [vmem:[%s2674 + $0xb2] sm:$0xff]
      %v3467 = vld [vmem:[%s2674 + $0xc2] sm:$0xff]
      %v3468 = vld [vmem:[%s2674 + $0xca] sm:$0xff]
      %v3469 = vld [vmem:[%s2674 + $0xda] sm:$0xff]
      %v3470 = vld [vmem:[%s2674 + $0xe2] sm:$0xff]
      %v3471 = vld [vmem:[%s2674 + $0xf2] sm:$0xff]
      %v3472 = vld [vmem:[%s2674 + $0xfa] sm:$0xff]
      %v3473 = vld [vmem:[%s2674 + $0x10a] sm:$0xff]
      %v3474 = vld [vmem:[%s2674 + $0x112] sm:$0xff]
      %v3475 = vld [vmem:[%s2674 + $0x122] sm:$0xff]
      %v3476 = vld [vmem:[%s2674 + $0x12a] sm:$0xff]
      %v3477 = vld [vmem:[%s2674 + $0x13a] sm:$0xff]
      %v3478 = vld [vmem:[%s2674 + $0x142] sm:$0xff]
      %v3479 = vld [vmem:[%s2674 + $0x152] sm:$0xff]
      %v3480 = vld [vmem:[%s2674 + $0x15a] sm:$0xff]
      %v3481 = vld [vmem:[%s2674 + $0x16a] sm:$0xff]
      %v3482 = vld [vmem:[%s2674 + $0x172] sm:$0xff]
      %v3484 = vsel %vm279, %v3451, 0
      %v3487 = vsel %vm279, %v3452, 0
      %v3490 = vsel %vm279, %v3453, 0
      %v3493 = vsel %vm279, %v3454, 0
      %v3496 = vsel %vm279, %v3455, 0
      %v3499 = vsel %vm279, %v3456, 0
      %v3502 = vsel %vm279, %v3457, 0
      %v3505 = vsel %vm279, %v3458, 0
      %v3508 = vsel %vm279, %v3459, 0
      %v3511 = vsel %vm279, %v3460, 0
      %v3514 = vsel %vm279, %v3461, 0
      %v3517 = vsel %vm279, %v3462, 0
      %v3520 = vsel %vm279, %v3463, 0
      %v3523 = vsel %vm279, %v3464, 0
      %v3526 = vsel %vm279, %v3465, 0
      %v3529 = vsel %vm279, %v3466, 0
      %v3532 = vsel %vm279, %v3467, 0
      %v3535 = vsel %vm279, %v3468, 0
      %v3538 = vsel %vm279, %v3469, 0
      %v3541 = vsel %vm279, %v3470, 0
      %v3544 = vsel %vm279, %v3471, 0
      %v3547 = vsel %vm279, %v3472, 0
      %v3550 = vsel %vm279, %v3473, 0
      %v3553 = vsel %vm279, %v3474, 0
      %v3556 = vsel %vm279, %v3475, 0
      %v3559 = vsel %vm279, %v3476, 0
      %v3562 = vsel %vm279, %v3477, 0
      %v3565 = vsel %vm279, %v3478, 0
      %v3568 = vsel %vm279, %v3479, 0
      %v3571 = vsel %vm279, %v3480, 0
      %v3574 = vsel %vm279, %v3481, 0
      %v3577 = vsel %vm279, %v3482, 0
      %v3580 = vsel %vm569, %v408, 0
      %3582 = vmatprep.subr.mxu0 0.0
      %3583 = vmatpush1.msra.mxu0 %v3580
      %3584 = vmatprep.subr.mxu0 0.0
      %3585 = vmatpush1.msra.mxu0 0.0
      %3586 = vmatprep.subr.mxu0 0.0
      %3587 = vmatpush1.msra.mxu0 0.0
      %3588 = vmatprep.subr.mxu0 0.0
      %3589 = vmatpush1.msra.mxu0 0.0
      %3590 = vmatprep.subr.mxu0 0.0
      %3591 = vmatpush1.msra.mxu0 0.0
      %3592 = vmatprep.subr.mxu0 0.0
      %3593 = vmatpush1.msra.mxu0 0.0
      %3594 = vmatprep.subr.mxu0 0.0
      %3595 = vmatpush1.msra.mxu0 0.0
      %3596 = vmatprep.subr.mxu0 0.0
      %3597 = vmatpush1.msra.mxu0 0.0
      %3598 = vmatprep.subr.mxu0 0.0
      %3599 = vmatpush1.msra.mxu0 0.0
      %3600 = vmatprep.subr.mxu0 0.0
      %3601 = vmatpush1.msra.mxu0 0.0
      %3602 = vmatprep.subr.mxu0 0.0
      %3603 = vmatpush1.msra.mxu0 0.0
      %3604 = vmatprep.subr.mxu0 0.0
      %3605 = vmatpush1.msra.mxu0 0.0
      %3606 = vmatprep.subr.mxu0 0.0
      %3607 = vmatpush1.msra.mxu0 0.0
      %3608 = vmatprep.subr.mxu0 0.0
      %3609 = vmatpush1.msra.mxu0 0.0
      %3610 = vmatprep.subr.mxu0 0.0
      %3611 = vmatpush1.msra.mxu0 0.0
      %3612 = vmatprep.subr.mxu0 0.0
      %3613 = vmatpush1.msra.mxu0 0.0
      %3614 = vmatprep.subr.mxu0 0.0
      %3615 = vmatpush1.msra.mxu0 0.0
      %3616 = vmatprep.subr.mxu0 0.0
      %3617 = vmatpush1.msra.mxu0 0.0
      %3618 = vmatprep.subr.mxu0 0.0
      %3619 = vmatpush1.msra.mxu0 0.0
      %3620 = vmatprep.subr.mxu0 0.0
      %3621 = vmatpush1.msra.mxu0 0.0
      %3622 = vmatprep.subr.mxu0 0.0
      %3623 = vmatpush1.msra.mxu0 0.0
      %3624 = vmatprep.subr.mxu0 0.0
      %3625 = vmatpush1.msra.mxu0 0.0
      %3626 = vmatprep.subr.mxu0 0.0
      %3627 = vmatpush1.msra.mxu0 0.0
      %3628 = vmatprep.subr.mxu0 0.0
      %3629 = vmatpush1.msra.mxu0 0.0
      %3630 = vmatprep.subr.mxu0 0.0
      %3631 = vmatpush1.msra.mxu0 0.0
      %3632 = vmatprep.subr.mxu0 0.0
      %3633 = vmatpush1.msra.mxu0 0.0
      %3634 = vmatprep.subr.mxu0 0.0
      %3635 = vmatpush1.msra.mxu0 0.0
      %3636 = vmatprep.subr.mxu0 0.0
      %3637 = vmatpush1.msra.mxu0 0.0
      %3638 = vmatprep.subr.mxu0 0.0
      %3639 = vmatpush1.msra.mxu0 0.0
      %3640 = vmatprep.subr.mxu0 0.0
      %3641 = vmatpush1.msra.mxu0 0.0
      %3642 = vmatprep.subr.mxu0 0.0
      %3643 = vmatpush1.msra.mxu0 0.0
      %3644 = vmatprep.subr.mxu0 0.0
      %3645 = vmatpush1.msra.mxu0 0.0
      %3646 = vmatprep.mubr.f32.mxu0 0.0
      %3647 = vmatmul.mubr.f32.gmra.mrb[0].mxu0 %v3484
      %v3648 = vpop.f32.mrb[0].mxu0
      %v3649 = vadd.f32 0.0, %v3648
      %v3650 = vpop.f32.mrb[0].mxu0
      %3651 = vmatprep.mubr.f32.mxu0 0.0
      %3652 = vmatmul.mubr.f32.gmra.mrb[0].mxu0 %v3487
      %v3653 = vpop.f32.mrb[0].mxu0
      %v3654 = vadd.f32 0.0, %v3653
      %v3655 = vpop.f32.mrb[0].mxu0
      %3656 = vmatprep.mubr.f32.mxu0 0.0
      %3657 = vmatmul.mubr.f32.gmra.mrb[0].mxu0 %v3490
      %v3658 = vpop.f32.mrb[0].mxu0
      %v3659 = vadd.f32 0.0, %v3658
      %v3660 = vpop.f32.mrb[0].mxu0
      %3661 = vmatprep.mubr.f32.mxu0 0.0
      %3662 = vmatmul.mubr.f32.gmra.mrb[0].mxu0 %v3493
      %v3663 = vpop.f32.mrb[0].mxu0
      %v3664 = vadd.f32 0.0, %v3663
      %v3665 = vpop.f32.mrb[0].mxu0
      %3666 = vmatprep.mubr.f32.mxu0 0.0
      %3667 = vmatmul.mubr.f32.gmra.mrb[0].mxu0 %v3496
      %v3668 = vpop.f32.mrb[0].mxu0
      %v3669 = vadd.f32 0.0, %v3668
      %v3670 = vpop.f32.mrb[0].mxu0
      %3671 = vmatprep.mubr.f32.mxu0 0.0
      %3672 = vmatmul.mubr.f32.gmra.mrb[0].mxu0 %v3499
      %v3673 = vpop.f32.mrb[0].mxu0
      %v3674 = vadd.f32 0.0, %v3673
      %v3675 = vpop.f32.mrb[0].mxu0
      %3676 = vmatprep.mubr.f32.mxu0 0.0
      %3677 = vmatmul.mubr.f32.gmra.mrb[0].mxu0 %v3502
      %v3678 = vpop.f32.mrb[0].mxu0
      %v3679 = vadd.f32 0.0, %v3678
      %v3680 = vpop.f32.mrb[0].mxu0
      %3681 = vmatprep.mubr.f32.mxu0 0.0
      %3682 = vmatmul.mubr.f32.gmra.mrb[0].mxu0 %v3505
      %v3683 = vpop.f32.mrb[0].mxu0
      %v3684 = vadd.f32 0.0, %v3683
      %v3685 = vpop.f32.mrb[0].mxu0
      %3686 = vmatprep.mubr.f32.mxu0 0.0
      %3687 = vmatmul.mubr.f32.gmra.mrb[0].mxu0 %v3508
      %v3688 = vpop.f32.mrb[0].mxu0
      %v3689 = vadd.f32 0.0, %v3688
      %v3690 = vpop.f32.mrb[0].mxu0
      %3691 = vmatprep.mubr.f32.mxu0 0.0
      %3692 = vmatmul.mubr.f32.gmra.mrb[0].mxu0 %v3511
      %v3693 = vpop.f32.mrb[0].mxu0
      %v3694 = vadd.f32 0.0, %v3693
      %v3695 = vpop.f32.mrb[0].mxu0
      %3696 = vmatprep.mubr.f32.mxu0 0.0
      %3697 = vmatmul.mubr.f32.gmra.mrb[0].mxu0 %v3514
      %v3698 = vpop.f32.mrb[0].mxu0
      %v3699 = vadd.f32 0.0, %v3698
      %v3700 = vpop.f32.mrb[0].mxu0
      %3701 = vmatprep.mubr.f32.mxu0 0.0
      %3702 = vmatmul.mubr.f32.gmra.mrb[0].mxu0 %v3517
      %v3703 = vpop.f32.mrb[0].mxu0
      %v3704 = vadd.f32 0.0, %v3703
      %v3705 = vpop.f32.mrb[0].mxu0
      %3706 = vmatprep.mubr.f32.mxu0 0.0
      %3707 = vmatmul.mubr.f32.gmra.mrb[0].mxu0 %v3520
      %v3708 = vpop.f32.mrb[0].mxu0
      %v3709 = vadd.f32 0.0, %v3708
      %v3710 = vpop.f32.mrb[0].mxu0
      %3711 = vmatprep.mubr.f32.mxu0 0.0
      %3712 = vmatmul.mubr.f32.gmra.mrb[0].mxu0 %v3523
      %v3713 = vpop.f32.mrb[0].mxu0
      %v3714 = vadd.f32 0.0, %v3713
      %v3715 = vpop.f32.mrb[0].mxu0
      %3716 = vmatprep.mubr.f32.mxu0 0.0
      %3717 = vmatmul.mubr.f32.gmra.mrb[0].mxu0 %v3526
      %v3718 = vpop.f32.mrb[0].mxu0
      %v3719 = vadd.f32 0.0, %v3718
      %v3720 = vpop.f32.mrb[0].mxu0
      %3721 = vmatprep.mubr.f32.mxu0 0.0
      %3722 = vmatmul.mubr.f32.gmra.mrb[0].mxu0 %v3529
      %v3723 = vpop.f32.mrb[0].mxu0
      %v3724 = vadd.f32 0.0, %v3723
      %v3725 = vpop.f32.mrb[0].mxu0
      %3726 = vmatprep.mubr.f32.mxu0 0.0
      %3727 = vmatmul.mubr.f32.gmra.mrb[0].mxu0 %v3532
      %v3728 = vpop.f32.mrb[0].mxu0
      %v3729 = vadd.f32 0.0, %v3728
      %v3730 = vpop.f32.mrb[0].mxu0
      %3731 = vmatprep.mubr.f32.mxu0 0.0
      %3732 = vmatmul.mubr.f32.gmra.mrb[0].mxu0 %v3535
      %v3733 = vpop.f32.mrb[0].mxu0
      %v3734 = vadd.f32 0.0, %v3733
      %v3735 = vpop.f32.mrb[0].mxu0
      %3736 = vmatprep.mubr.f32.mxu0 0.0
      %3737 = vmatmul.mubr.f32.gmra.mrb[0].mxu0 %v3538
      %v3738 = vpop.f32.mrb[0].mxu0
      %v3739 = vadd.f32 0.0, %v3738
      %v3740 = vpop.f32.mrb[0].mxu0
      %3741 = vmatprep.mubr.f32.mxu0 0.0
      %3742 = vmatmul.mubr.f32.gmra.mrb[0].mxu0 %v3541
      %v3743 = vpop.f32.mrb[0].mxu0
      %v3744 = vadd.f32 0.0, %v3743
      %v3745 = vpop.f32.mrb[0].mxu0
      %3746 = vmatprep.mubr.f32.mxu0 0.0
      %3747 = vmatmul.mubr.f32.gmra.mrb[0].mxu0 %v3544
      %v3748 = vpop.f32.mrb[0].mxu0
      %v3749 = vadd.f32 0.0, %v3748
      %v3750 = vpop.f32.mrb[0].mxu0
      %3751 = vmatprep.mubr.f32.mxu0 0.0
      %3752 = vmatmul.mubr.f32.gmra.mrb[0].mxu0 %v3547
      %v3753 = vpop.f32.mrb[0].mxu0
      %v3754 = vadd.f32 0.0, %v3753
      %v3755 = vpop.f32.mrb[0].mxu0
      %3756 = vmatprep.mubr.f32.mxu0 0.0
      %3757 = vmatmul.mubr.f32.gmra.mrb[0].mxu0 %v3550
      %v3758 = vpop.f32.mrb[0].mxu0
      %v3759 = vadd.f32 0.0, %v3758
      %v3760 = vpop.f32.mrb[0].mxu0
      %3761 = vmatprep.mubr.f32.mxu0 0.0
      %3762 = vmatmul.mubr.f32.gmra.mrb[0].mxu0 %v3553
      %v3763 = vpop.f32.mrb[0].mxu0
      %v3764 = vadd.f32 0.0, %v3763
      %v3765 = vpop.f32.mrb[0].mxu0
      %3766 = vmatprep.mubr.f32.mxu0 0.0
      %3767 = vmatmul.mubr.f32.gmra.mrb[0].mxu0 %v3556
      %v3768 = vpop.f32.mrb[0].mxu0
      %v3769 = vadd.f32 0.0, %v3768
      %v3770 = vpop.f32.mrb[0].mxu0
      %3771 = vmatprep.mubr.f32.mxu0 0.0
      %3772 = vmatmul.mubr.f32.gmra.mrb[0].mxu0 %v3559
      %v3773 = vpop.f32.mrb[0].mxu0
      %v3774 = vadd.f32 0.0, %v3773
      %v3775 = vpop.f32.mrb[0].mxu0
      %3776 = vmatprep.mubr.f32.mxu0 0.0
      %3777 = vmatmul.mubr.f32.gmra.mrb[0].mxu0 %v3562
      %v3778 = vpop.f32.mrb[0].mxu0
      %v3779 = vadd.f32 0.0, %v3778
      %v3780 = vpop.f32.mrb[0].mxu0
      %3781 = vmatprep.mubr.f32.mxu0 0.0
      %3782 = vmatmul.mubr.f32.gmra.mrb[0].mxu0 %v3565
      %v3783 = vpop.f32.mrb[0].mxu0
      %v3784 = vadd.f32 0.0, %v3783
      %v3785 = vpop.f32.mrb[0].mxu0
      %3786 = vmatprep.mubr.f32.mxu0 0.0
      %3787 = vmatmul.mubr.f32.gmra.mrb[0].mxu0 %v3568
      %v3788 = vpop.f32.mrb[0].mxu0
      %v3789 = vadd.f32 0.0, %v3788
      %v3790 = vpop.f32.mrb[0].mxu0
      %3791 = vmatprep.mubr.f32.mxu0 0.0
      %3792 = vmatmul.mubr.f32.gmra.mrb[0].mxu0 %v3571
      %v3793 = vpop.f32.mrb[0].mxu0
      %v3794 = vadd.f32 0.0, %v3793
      %v3795 = vpop.f32.mrb[0].mxu0
      %3796 = vmatprep.mubr.f32.mxu0 0.0
      %3797 = vmatmul.mubr.f32.gmra.mrb[0].mxu0 %v3574
      %v3798 = vpop.f32.mrb[0].mxu0
      %v3799 = vadd.f32 0.0, %v3798
      %v3800 = vpop.f32.mrb[0].mxu0
      %3801 = vmatprep.mubr.f32.mxu0 0.0
      %3802 = vmatmul.mubr.f32.gmra.mrb[0].mxu0 %v3577
      %v3803 = vpop.f32.mrb[0].mxu0
      %v3804 = vadd.f32 0.0, %v3803
      %v3805 = vpop.f32.mrb[0].mxu0
      %3806 = vdwg.mxu0
      %v3807 = vadd.f32 %v3419, %v3649
      %v3808 = vadd.f32 %v3420, %v3654
      %v3809 = vadd.f32 %v3421, %v3659
      %v3810 = vadd.f32 %v3422, %v3664
      %v3811 = vadd.f32 %v3423, %v3669
      %v3812 = vadd.f32 %v3424, %v3674
      %v3813 = vadd.f32 %v3425, %v3679
      %v3814 = vadd.f32 %v3426, %v3684
      %v3815 = vadd.f32 %v3427, %v3689
      %v3816 = vadd.f32 %v3428, %v3694
      %v3817 = vadd.f32 %v3429, %v3699
      %v3818 = vadd.f32 %v3430, %v3704
      %v3819 = vadd.f32 %v3431, %v3709
      %v3820 = vadd.f32 %v3432, %v3714
      %v3821 = vadd.f32 %v3433, %v3719
      %v3822 = vadd.f32 %v3434, %v3724
      %v3823 = vadd.f32 %v3435, %v3729
      %v3824 = vadd.f32 %v3436, %v3734
      %v3825 = vadd.f32 %v3437, %v3739
      %v3826 = vadd.f32 %v3438, %v3744
      %v3827 = vadd.f32 %v3439, %v3749
      %v3828 = vadd.f32 %v3440, %v3754
      %v3829 = vadd.f32 %v3441, %v3759
      %v3830 = vadd.f32 %v3442, %v3764
      %v3831 = vadd.f32 %v3443, %v3769
      %v3832 = vadd.f32 %v3444, %v3774
      %v3833 = vadd.f32 %v3445, %v3779
      %v3834 = vadd.f32 %v3446, %v3784
      %v3835 = vadd.f32 %v3447, %v3789
      %v3836 = vadd.f32 %v3448, %v3794
      %v3837 = vadd.f32 %v3449, %v3799
      %v3838 = vadd.f32 %v3450, %v3804
      %v3839 = vld [vmem:[%s2] sm:$0x1]
      %v3841 = vlaneseq
      %v3842 = vshrl.u32 %v3841, 7
      %v3843 = vsub.s32 0, %v3842
      %v3844 = vrot.slane %v3839, %v3843
      %v3846 = vmul.f32 %v3807, %v3844
      %v3847 = vmul.f32 %v3808, %v3844
      %v3848 = vmul.f32 %v3809, %v3844
      %v3849 = vmul.f32 %v3810, %v3844
      %v3850 = vmul.f32 %v3811, %v3844
      %v3851 = vmul.f32 %v3812, %v3844
      %v3852 = vmul.f32 %v3813, %v3844
      %v3853 = vmul.f32 %v3814, %v3844
      %v3854 = vmul.f32 %v3815, %v3844
      %v3855 = vmul.f32 %v3816, %v3844
      %v3856 = vmul.f32 %v3817, %v3844
      %v3857 = vmul.f32 %v3818, %v3844
      %v3858 = vmul.f32 %v3819, %v3844
      %v3859 = vmul.f32 %v3820, %v3844
      %v3860 = vmul.f32 %v3821, %v3844
      %v3861 = vmul.f32 %v3822, %v3844
      %v3862 = vmul.f32 %v3823, %v3844
      %v3863 = vmul.f32 %v3824, %v3844
      %v3864 = vmul.f32 %v3825, %v3844
      %v3865 = vmul.f32 %v3826, %v3844
      %v3866 = vmul.f32 %v3827, %v3844
      %v3867 = vmul.f32 %v3828, %v3844
      %v3868 = vmul.f32 %v3829, %v3844
      %v3869 = vmul.f32 %v3830, %v3844
      %v3870 = vmul.f32 %v3831, %v3844
      %v3871 = vmul.f32 %v3832, %v3844
      %v3872 = vmul.f32 %v3833, %v3844
      %v3873 = vmul.f32 %v3834, %v3844
      %v3874 = vmul.f32 %v3835, %v3844
      %v3875 = vmul.f32 %v3836, %v3844
      %v3876 = vmul.f32 %v3837, %v3844
      %v3877 = vmul.f32 %v3838, %v3844
      %v3878 = vld [vmem:[%s3] sm:$0x1]
      %v3880 = vlaneseq
      %v3881 = vshrl.u32 %v3880, 7
      %v3882 = vsub.s32 0, %v3881
      %v3883 = vrot.slane %v3878, %v3882
      %v3885 = vadd.f32 %v3846, %v3883
      %v3886 = vadd.f32 %v3847, %v3883
      %v3887 = vadd.f32 %v3848, %v3883
      %v3888 = vadd.f32 %v3849, %v3883
      %v3889 = vadd.f32 %v3850, %v3883
      %v3890 = vadd.f32 %v3851, %v3883
      %v3891 = vadd.f32 %v3852, %v3883
      %v3892 = vadd.f32 %v3853, %v3883
      %v3893 = vadd.f32 %v3854, %v3883
      %v3894 = vadd.f32 %v3855, %v3883
      %v3895 = vadd.f32 %v3856, %v3883
      %v3896 = vadd.f32 %v3857, %v3883
      %v3897 = vadd.f32 %v3858, %v3883
      %v3898 = vadd.f32 %v3859, %v3883
      %v3899 = vadd.f32 %v3860, %v3883
      %v3900 = vadd.f32 %v3861, %v3883
      %v3901 = vadd.f32 %v3862, %v3883
      %v3902 = vadd.f32 %v3863, %v3883
      %v3903 = vadd.f32 %v3864, %v3883
      %v3904 = vadd.f32 %v3865, %v3883
      %v3905 = vadd.f32 %v3866, %v3883
      %v3906 = vadd.f32 %v3867, %v3883
      %v3907 = vadd.f32 %v3868, %v3883
      %v3908 = vadd.f32 %v3869, %v3883
      %v3909 = vadd.f32 %v3870, %v3883
      %v3910 = vadd.f32 %v3871, %v3883
      %v3911 = vadd.f32 %v3872, %v3883
      %v3912 = vadd.f32 %v3873, %v3883
      %v3913 = vadd.f32 %v3874, %v3883
      %v3914 = vadd.f32 %v3875, %v3883
      %v3915 = vadd.f32 %v3876, %v3883
      %v3916 = vadd.f32 %v3877, %v3883
      %v3917 = vmax.f32 %v3885, 0.0
      %v3918 = vmax.f32 %v3886, 0.0
      %v3919 = vmax.f32 %v3887, 0.0
      %v3920 = vmax.f32 %v3888, 0.0
      %v3921 = vmax.f32 %v3889, 0.0
      %v3922 = vmax.f32 %v3890, 0.0
      %v3923 = vmax.f32 %v3891, 0.0
      %v3924 = vmax.f32 %v3892, 0.0
      %v3925 = vmax.f32 %v3893, 0.0
      %v3926 = vmax.f32 %v3894, 0.0
      %v3927 = vmax.f32 %v3895, 0.0
      %v3928 = vmax.f32 %v3896, 0.0
      %v3929 = vmax.f32 %v3897, 0.0
      %v3930 = vmax.f32 %v3898, 0.0
      %v3931 = vmax.f32 %v3899, 0.0
      %v3932 = vmax.f32 %v3900, 0.0
      %v3933 = vmax.f32 %v3901, 0.0
      %v3934 = vmax.f32 %v3902, 0.0
      %v3935 = vmax.f32 %v3903, 0.0
      %v3936 = vmax.f32 %v3904, 0.0
      %v3937 = vmax.f32 %v3905, 0.0
      %v3938 = vmax.f32 %v3906, 0.0
      %v3939 = vmax.f32 %v3907, 0.0
      %v3940 = vmax.f32 %v3908, 0.0
      %v3941 = vmax.f32 %v3909, 0.0
      %v3942 = vmax.f32 %v3910, 0.0
      %v3943 = vmax.f32 %v3911, 0.0
      %v3944 = vmax.f32 %v3912, 0.0
      %v3945 = vmax.f32 %v3913, 0.0
      %v3946 = vmax.f32 %v3914, 0.0
      %v3947 = vmax.f32 %v3915, 0.0
      %v3948 = vmax.f32 %v3916, 0.0
      %vm3949 = vcmask 64512
      %3950 = vst.msk [vmem:[#allocation3] sm:$0xff] %vm3949, 0.0
      %3951 = vst.msk [vmem:[#allocation3 + $0x8] sm:$0xff] %vm3949, 0.0
      %vm3952 = vcmask 58368
      %3953 = vst.msk [vmem:[#allocation3 + $0x10] sm:$0x3] %vm3952, 0.0
      %3954 = vst.msk [vmem:[#allocation3 + $0x18] sm:$0xff] %vm3949, 0.0
      %3955 = vst.msk [vmem:[#allocation3 + $0x20] sm:$0xff] %vm3949, 0.0
      %3956 = vst.msk [vmem:[#allocation3 + $0x28] sm:$0x3] %vm3952, 0.0
      %3957 = vst.msk [vmem:[#allocation3 + $0x30] sm:$0xff] %vm3949, 0.0
      %3958 = vst.msk [vmem:[#allocation3 + $0x38] sm:$0xff] %vm3949, 0.0
      %3959 = vst.msk [vmem:[#allocation3 + $0x40] sm:$0x3] %vm3952, 0.0
      %3960 = vst.msk [vmem:[#allocation3 + $0x48] sm:$0xff] %vm3949, 0.0
      %3961 = vst.msk [vmem:[#allocation3 + $0x50] sm:$0xff] %vm3949, 0.0
      %3962 = vst.msk [vmem:[#allocation3 + $0x58] sm:$0x3] %vm3952, 0.0
      %3963 = vst.msk [vmem:[#allocation3 + $0x60] sm:$0xff] %vm3949, 0.0
      %3964 = vst.msk [vmem:[#allocation3 + $0x68] sm:$0xff] %vm3949, 0.0
      %3965 = vst.msk [vmem:[#allocation3 + $0x70] sm:$0x3] %vm3952, 0.0
      %3966 = vst.msk [vmem:[#allocation3 + $0x78] sm:$0xff] %vm3949, 0.0
      %3967 = vst.msk [vmem:[#allocation3 + $0x80] sm:$0xff] %vm3949, 0.0
      %3968 = vst.msk [vmem:[#allocation3 + $0x88] sm:$0x3] %vm3952, 0.0
      %3969 = vst.msk [vmem:[#allocation3 + $0x90] sm:$0xff] %vm3949, 0.0
      %3970 = vst.msk [vmem:[#allocation3 + $0x98] sm:$0xff] %vm3949, 0.0
      %3971 = vst.msk [vmem:[#allocation3 + $0xa0] sm:$0x3] %vm3952, 0.0
      %3972 = vst.msk [vmem:[#allocation3 + $0xa8] sm:$0xff] %vm3949, 0.0
      %3973 = vst.msk [vmem:[#allocation3 + $0xb0] sm:$0xff] %vm3949, 0.0
      %3974 = vst.msk [vmem:[#allocation3 + $0xb8] sm:$0x3] %vm3952, 0.0
      %3975 = vst.msk [vmem:[#allocation3 + $0xc0] sm:$0xff] %vm3949, 0.0
      %3976 = vst.msk [vmem:[#allocation3 + $0xc8] sm:$0xff] %vm3949, 0.0
      %3977 = vst.msk [vmem:[#allocation3 + $0xd0] sm:$0x3] %vm3952, 0.0
      %3978 = vst.msk [vmem:[#allocation3 + $0xd8] sm:$0xff] %vm3949, 0.0
      %3979 = vst.msk [vmem:[#allocation3 + $0xe0] sm:$0xff] %vm3949, 0.0
      %3980 = vst.msk [vmem:[#allocation3 + $0xe8] sm:$0x3] %vm3952, 0.0
      %3981 = vst.msk [vmem:[#allocation3 + $0xf0] sm:$0xff] %vm3949, 0.0
      %3982 = vst.msk [vmem:[#allocation3 + $0xf8] sm:$0xff] %vm3949, 0.0
      %3983 = vst.msk [vmem:[#allocation3 + $0x100] sm:$0x3] %vm3952, 0.0
      %3984 = vst.msk [vmem:[#allocation3 + $0x108] sm:$0xff] %vm3949, 0.0
      %3985 = vst.msk [vmem:[#allocation3 + $0x110] sm:$0xff] %vm3949, 0.0
      %3986 = vst.msk [vmem:[#allocation3 + $0x118] sm:$0x3] %vm3952, 0.0
      %3987 = vst.msk [vmem:[#allocation3 + $0x120] sm:$0xff] %vm3949, 0.0
      %3988 = vst.msk [vmem:[#allocation3 + $0x128] sm:$0xff] %vm3949, 0.0
      %3989 = vst.msk [vmem:[#allocation3 + $0x130] sm:$0x3] %vm3952, 0.0
      %3990 = vst.msk [vmem:[#allocation3 + $0x138] sm:$0xff] %vm3949, 0.0
      %3991 = vst.msk [vmem:[#allocation3 + $0x140] sm:$0xff] %vm3949, 0.0
      %3992 = vst.msk [vmem:[#allocation3 + $0x148] sm:$0x3] %vm3952, 0.0
      %3993 = vst.msk [vmem:[#allocation3 + $0x150] sm:$0xff] %vm3949, 0.0
      %3994 = vst.msk [vmem:[#allocation3 + $0x158] sm:$0xff] %vm3949, 0.0
      %3995 = vst.msk [vmem:[#allocation3 + $0x160] sm:$0x3] %vm3952, 0.0
      %3996 = vst.msk [vmem:[#allocation3 + $0x168] sm:$0xff] %vm3949, 0.0
      %3997 = vst.msk [vmem:[#allocation3 + $0x170] sm:$0xff] %vm3949, 0.0
      %3998 = vst.msk [vmem:[#allocation3 + $0x178] sm:$0x3] %vm3952, 0.0
      %3999 = vst.msk [vmem:[#allocation3 + $0x180] sm:$0xff] %vm3949, 0.0
      %4000 = vst.msk [vmem:[#allocation3 + $0x188] sm:$0xff] %vm3949, 0.0
      %4001 = vst.msk [vmem:[#allocation3 + $0x190] sm:$0x3] %vm3952, 0.0
      %4002 = vst.msk [vmem:[#allocation3 + $0x198] sm:$0xff] %vm3949, 0.0
      %4003 = vst.msk [vmem:[#allocation3 + $0x1a0] sm:$0xff] %vm3949, 0.0
      %4004 = vst.msk [vmem:[#allocation3 + $0x1a8] sm:$0x3] %vm3952, 0.0
      %s4005 = scalar_lea.vmem [#allocation3], 24
      %4006 = vst.msk [vmem:[%s4005 + $0x1] sm:$0xff] %vm3949, %v3917
      %4007 = vst.msk [vmem:[%s4005 + $0x9] sm:$0xff] %vm3949, %v3918
      %4008 = vst.msk [vmem:[%s4005 + $0x19] sm:$0xff] %vm3949, %v3919
      %4009 = vst.msk [vmem:[%s4005 + $0x21] sm:$0xff] %vm3949, %v3920
      %4010 = vst.msk [vmem:[%s4005 + $0x31] sm:$0xff] %vm3949, %v3921
      %4011 = vst.msk [vmem:[%s4005 + $0x39] sm:$0xff] %vm3949, %v3922
      %4012 = vst.msk [vmem:[%s4005 + $0x49] sm:$0xff] %vm3949, %v3923
      %4013 = vst.msk [vmem:[%s4005 + $0x51] sm:$0xff] %vm3949, %v3924
      %4014 = vst.msk [vmem:[%s4005 + $0x61] sm:$0xff] %vm3949, %v3925
      %4015 = vst.msk [vmem:[%s4005 + $0x69] sm:$0xff] %vm3949, %v3926
      %4016 = vst.msk [vmem:[%s4005 + $0x79] sm:$0xff] %vm3949, %v3927
      %4017 = vst.msk [vmem:[%s4005 + $0x81] sm:$0xff] %vm3949, %v3928
      %4018 = vst.msk [vmem:[%s4005 + $0x91] sm:$0xff] %vm3949, %v3929
      %4019 = vst.msk [vmem:[%s4005 + $0x99] sm:$0xff] %vm3949, %v3930
      %4020 = vst.msk [vmem:[%s4005 + $0xa9] sm:$0xff] %vm3949, %v3931
      %4021 = vst.msk [vmem:[%s4005 + $0xb1] sm:$0xff] %vm3949, %v3932
      %4022 = vst.msk [vmem:[%s4005 + $0xc1] sm:$0xff] %vm3949, %v3933
      %4023 = vst.msk [vmem:[%s4005 + $0xc9] sm:$0xff] %vm3949, %v3934
      %4024 = vst.msk [vmem:[%s4005 + $0xd9] sm:$0xff] %vm3949, %v3935
      %4025 = vst.msk [vmem:[%s4005 + $0xe1] sm:$0xff] %vm3949, %v3936
      %4026 = vst.msk [vmem:[%s4005 + $0xf1] sm:$0xff] %vm3949, %v3937
      %4027 = vst.msk [vmem:[%s4005 + $0xf9] sm:$0xff] %vm3949, %v3938
      %4028 = vst.msk [vmem:[%s4005 + $0x109] sm:$0xff] %vm3949, %v3939
      %4029 = vst.msk [vmem:[%s4005 + $0x111] sm:$0xff] %vm3949, %v3940
      %4030 = vst.msk [vmem:[%s4005 + $0x121] sm:$0xff] %vm3949, %v3941
      %4031 = vst.msk [vmem:[%s4005 + $0x129] sm:$0xff] %vm3949, %v3942
      %4032 = vst.msk [vmem:[%s4005 + $0x139] sm:$0xff] %vm3949, %v3943
      %4033 = vst.msk [vmem:[%s4005 + $0x141] sm:$0xff] %vm3949, %v3944
      %4034 = vst.msk [vmem:[%s4005 + $0x151] sm:$0xff] %vm3949, %v3945
      %4035 = vst.msk [vmem:[%s4005 + $0x159] sm:$0xff] %vm3949, %v3946
      %4036 = vst.msk [vmem:[%s4005 + $0x169] sm:$0xff] %vm3949, %v3947
      %4037 = vst.msk [vmem:[%s4005 + $0x171] sm:$0xff] %vm3949, %v3948
      %v4038 = vld [vmem:[%s4] sm:$0x7]
      %v4039 = vld [vmem:[%s4 + $0x4] sm:$0x7]
      %v4040 = vld [vmem:[%s4 + $0x8] sm:$0x7]
      %v4041 = vld [vmem:[%s4 + $0xc] sm:$0x7]
      %v4042 = vld [vmem:[%s4 + $0x10] sm:$0x7]
      %v4043 = vld [vmem:[%s4 + $0x14] sm:$0x7]
      %v4044 = vld [vmem:[%s4 + $0x18] sm:$0x7]
      %v4045 = vld [vmem:[%s4 + $0x1c] sm:$0x7]
      %v4046 = vld [vmem:[%s4 + $0x20] sm:$0x7]
      %v4047 = vld [vmem:[#allocation3] sm:$0xff]
      %v4048 = vld [vmem:[#allocation3 + $0x8] sm:$0xff]
      %v4049 = vld [vmem:[#allocation3 + $0x18] sm:$0xff]
      %v4050 = vld [vmem:[#allocation3 + $0x20] sm:$0xff]
      %v4051 = vld [vmem:[#allocation3 + $0x30] sm:$0xff]
      %v4052 = vld [vmem:[#allocation3 + $0x38] sm:$0xff]
      %v4053 = vld [vmem:[#allocation3 + $0x48] sm:$0xff]
      %v4054 = vld [vmem:[#allocation3 + $0x50] sm:$0xff]
      %v4055 = vld [vmem:[#allocation3 + $0x60] sm:$0xff]
      %v4056 = vld [vmem:[#allocation3 + $0x68] sm:$0xff]
      %v4057 = vld [vmem:[#allocation3 + $0x78] sm:$0xff]
      %v4058 = vld [vmem:[#allocation3 + $0x80] sm:$0xff]
      %v4059 = vld [vmem:[#allocation3 + $0x90] sm:$0xff]
      %v4060 = vld [vmem:[#allocation3 + $0x98] sm:$0xff]
      %v4061 = vld [vmem:[#allocation3 + $0xa8] sm:$0xff]
      %v4062 = vld [vmem:[#allocation3 + $0xb0] sm:$0xff]
      %v4063 = vld [vmem:[#allocation3 + $0xc0] sm:$0xff]
      %v4064 = vld [vmem:[#allocation3 + $0xc8] sm:$0xff]
      %v4065 = vld [vmem:[#allocation3 + $0xd8] sm:$0xff]
      %v4066 = vld [vmem:[#allocation3 + $0xe0] sm:$0xff]
      %v4067 = vld [vmem:[#allocation3 + $0xf0] sm:$0xff]
      %v4068 = vld [vmem:[#allocation3 + $0xf8] sm:$0xff]
      %v4069 = vld [vmem:[#allocation3 + $0x108] sm:$0xff]
      %v4070 = vld [vmem:[#allocation3 + $0x110] sm:$0xff]
      %v4071 = vld [vmem:[#allocation3 + $0x120] sm:$0xff]
      %v4072 = vld [vmem:[#allocation3 + $0x128] sm:$0xff]
      %v4073 = vld [vmem:[#allocation3 + $0x138] sm:$0xff]
      %v4074 = vld [vmem:[#allocation3 + $0x140] sm:$0xff]
      %v4075 = vld [vmem:[#allocation3 + $0x150] sm:$0xff]
      %v4076 = vld [vmem:[#allocation3 + $0x158] sm:$0xff]
      %v4077 = vld [vmem:[#allocation3 + $0x168] sm:$0xff]
      %v4078 = vld [vmem:[#allocation3 + $0x170] sm:$0xff]
      %v4079 = vld [vmem:[#allocation3 + $0x1] sm:$0xff]
      %v4080 = vld [vmem:[#allocation3 + $0x9] sm:$0xff]
      %v4081 = vld [vmem:[#allocation3 + $0x19] sm:$0xff]
      %v4082 = vld [vmem:[#allocation3 + $0x21] sm:$0xff]
      %v4083 = vld [vmem:[#allocation3 + $0x31] sm:$0xff]
      %v4084 = vld [vmem:[#allocation3 + $0x39] sm:$0xff]
      %v4085 = vld [vmem:[#allocation3 + $0x49] sm:$0xff]
      %v4086 = vld [vmem:[#allocation3 + $0x51] sm:$0xff]
      %v4087 = vld [vmem:[#allocation3 + $0x61] sm:$0xff]
      %v4088 = vld [vmem:[#allocation3 + $0x69] sm:$0xff]
      %v4089 = vld [vmem:[#allocation3 + $0x79] sm:$0xff]
      %v4090 = vld [vmem:[#allocation3 + $0x81] sm:$0xff]
      %v4091 = vld [vmem:[#allocation3 + $0x91] sm:$0xff]
      %v4092 = vld [vmem:[#allocation3 + $0x99] sm:$0xff]
      %v4093 = vld [vmem:[#allocation3 + $0xa9] sm:$0xff]
      %v4094 = vld [vmem:[#allocation3 + $0xb1] sm:$0xff]
      %v4095 = vld [vmem:[#allocation3 + $0xc1] sm:$0xff]
      %v4096 = vld [vmem:[#allocation3 + $0xc9] sm:$0xff]
      %v4097 = vld [vmem:[#allocation3 + $0xd9] sm:$0xff]
      %v4098 = vld [vmem:[#allocation3 + $0xe1] sm:$0xff]
      %v4099 = vld [vmem:[#allocation3 + $0xf1] sm:$0xff]
      %v4100 = vld [vmem:[#allocation3 + $0xf9] sm:$0xff]
      %v4101 = vld [vmem:[#allocation3 + $0x109] sm:$0xff]
      %v4102 = vld [vmem:[#allocation3 + $0x111] sm:$0xff]
      %v4103 = vld [vmem:[#allocation3 + $0x121] sm:$0xff]
      %v4104 = vld [vmem:[#allocation3 + $0x129] sm:$0xff]
      %v4105 = vld [vmem:[#allocation3 + $0x139] sm:$0xff]
      %v4106 = vld [vmem:[#allocation3 + $0x141] sm:$0xff]
      %v4107 = vld [vmem:[#allocation3 + $0x151] sm:$0xff]
      %v4108 = vld [vmem:[#allocation3 + $0x159] sm:$0xff]
      %v4109 = vld [vmem:[#allocation3 + $0x169] sm:$0xff]
      %v4110 = vld [vmem:[#allocation3 + $0x171] sm:$0xff]
      %v4112 = vsel %vm3949, %v4039, 0
      %v4115 = vsel %vm3949, %v4079, 0
      %v4118 = vsel %vm3949, %v4080, 0
      %v4121 = vsel %vm3949, %v4081, 0
      %v4124 = vsel %vm3949, %v4082, 0
      %v4127 = vsel %vm3949, %v4083, 0
      %v4130 = vsel %vm3949, %v4084, 0
      %v4133 = vsel %vm3949, %v4085, 0
      %v4136 = vsel %vm3949, %v4086, 0
      %v4139 = vsel %vm3949, %v4087, 0
      %v4142 = vsel %vm3949, %v4088, 0
      %v4145 = vsel %vm3949, %v4089, 0
      %v4148 = vsel %vm3949, %v4090, 0
      %v4151 = vsel %vm3949, %v4091, 0
      %v4154 = vsel %vm3949, %v4092, 0
      %v4157 = vsel %vm3949, %v4093, 0
      %v4160 = vsel %vm3949, %v4094, 0
      %v4163 = vsel %vm3949, %v4095, 0
      %v4166 = vsel %vm3949, %v4096, 0
      %v4169 = vsel %vm3949, %v4097, 0
      %v4172 = vsel %vm3949, %v4098, 0
      %v4175 = vsel %vm3949, %v4099, 0
      %v4178 = vsel %vm3949, %v4100, 0
      %v4181 = vsel %vm3949, %v4101, 0
      %v4184 = vsel %vm3949, %v4102, 0
      %v4187 = vsel %vm3949, %v4103, 0
      %v4190 = vsel %vm3949, %v4104, 0
      %v4193 = vsel %vm3949, %v4105, 0
      %v4196 = vsel %vm3949, %v4106, 0
      %v4199 = vsel %vm3949, %v4107, 0
      %v4202 = vsel %vm3949, %v4108, 0
      %v4205 = vsel %vm3949, %v4109, 0
      %v4208 = vsel %vm3949, %v4110, 0
      %4210 = vmatprep.subr.mxu0 0.0
      %4211 = vmatpush1.xpose.msra.mxu0 %v4115
      %4212 = vmatprep.subr.mxu0 0.0
      %4213 = vmatpush1.xpose.msra.mxu0 %v4118
      %4214 = vmatprep.subr.mxu0 0.0
      %4215 = vmatpush1.xpose.msra.mxu0 %v4121
      %4216 = vmatprep.subr.mxu0 0.0
      %4217 = vmatpush1.xpose.msra.mxu0 %v4124
      %4218 = vmatprep.subr.mxu0 0.0
      %4219 = vmatpush1.xpose.msra.mxu0 %v4127
      %4220 = vmatprep.subr.mxu0 0.0
      %4221 = vmatpush1.xpose.msra.mxu0 %v4130
      %4222 = vmatprep.subr.mxu0 0.0
      %4223 = vmatpush1.xpose.msra.mxu0 %v4133
      %4224 = vmatprep.subr.mxu0 0.0
      %4225 = vmatpush1.xpose.msra.mxu0 %v4136
      %4226 = vmatprep.subr.mxu0 0.0
      %4227 = vmatpush1.xpose.msra.mxu0 %v4139
      %4228 = vmatprep.subr.mxu0 0.0
      %4229 = vmatpush1.xpose.msra.mxu0 %v4142
      %4230 = vmatprep.subr.mxu0 0.0
      %4231 = vmatpush1.xpose.msra.mxu0 %v4145
      %4232 = vmatprep.subr.mxu0 0.0
      %4233 = vmatpush1.xpose.msra.mxu0 %v4148
      %4234 = vmatprep.subr.mxu0 0.0
      %4235 = vmatpush1.xpose.msra.mxu0 %v4151
      %4236 = vmatprep.subr.mxu0 0.0
      %4237 = vmatpush1.xpose.msra.mxu0 %v4154
      %4238 = vmatprep.subr.mxu0 0.0
      %4239 = vmatpush1.xpose.msra.mxu0 %v4157
      %4240 = vmatprep.subr.mxu0 0.0
      %4241 = vmatpush1.xpose.msra.mxu0 %v4160
      %4242 = vmatprep.subr.mxu0 0.0
      %4243 = vmatpush1.xpose.msra.mxu0 %v4163
      %4244 = vmatprep.subr.mxu0 0.0
      %4245 = vmatpush1.xpose.msra.mxu0 %v4166
      %4246 = vmatprep.subr.mxu0 0.0
      %4247 = vmatpush1.xpose.msra.mxu0 %v4169
      %4248 = vmatprep.subr.mxu0 0.0
      %4249 = vmatpush1.xpose.msra.mxu0 %v4172
      %4250 = vmatprep.subr.mxu0 0.0
      %4251 = vmatpush1.xpose.msra.mxu0 %v4175
      %4252 = vmatprep.subr.mxu0 0.0
      %4253 = vmatpush1.xpose.msra.mxu0 %v4178
      %4254 = vmatprep.subr.mxu0 0.0
      %4255 = vmatpush1.xpose.msra.mxu0 %v4181
      %4256 = vmatprep.subr.mxu0 0.0
      %4257 = vmatpush1.xpose.msra.mxu0 %v4184
      %4258 = vmatprep.subr.mxu0 0.0
      %4259 = vmatpush1.xpose.msra.mxu0 %v4187
      %4260 = vmatprep.subr.mxu0 0.0
      %4261 = vmatpush1.xpose.msra.mxu0 %v4190
      %4262 = vmatprep.subr.mxu0 0.0
      %4263 = vmatpush1.xpose.msra.mxu0 %v4193
      %4264 = vmatprep.subr.mxu0 0.0
      %4265 = vmatpush1.xpose.msra.mxu0 %v4196
      %4266 = vmatprep.subr.mxu0 0.0
      %4267 = vmatpush1.xpose.msra.mxu0 %v4199
      %4268 = vmatprep.subr.mxu0 0.0
      %4269 = vmatpush1.xpose.msra.mxu0 %v4202
      %4270 = vmatprep.subr.mxu0 0.0
      %4271 = vmatpush1.xpose.msra.mxu0 %v4205
      %4272 = vmatprep.subr.mxu0 0.0
      %4273 = vmatpush1.xpose.msra.mxu0 %v4208
      %4274 = vmatprep.mubr.f32.mxu0 0.0
      %4275 = vmatmul.mubr.f32.gmra.mrb[0].mxu0 %v4112
      %v4276 = vpop.f32.mrb[0].mxu0
      %v4277 = vadd.f32 0.0, %v4276
      %v4278 = vpop.f32.mrb[0].mxu0
      %v4279 = vadd.f32 0.0, %v4278
      %4280 = vdwg.mxu0
      %v4282 = vsel %vm3949, %v4038, 0
      %v4285 = vsel %vm3949, %v4047, 0
      %v4288 = vsel %vm3949, %v4048, 0
      %v4291 = vsel %vm3949, %v4049, 0
      %v4294 = vsel %vm3949, %v4050, 0
      %v4297 = vsel %vm3949, %v4051, 0
      %v4300 = vsel %vm3949, %v4052, 0
      %v4303 = vsel %vm3949, %v4053, 0
      %v4306 = vsel %vm3949, %v4054, 0
      %v4309 = vsel %vm3949, %v4055, 0
      %v4312 = vsel %vm3949, %v4056, 0
      %v4315 = vsel %vm3949, %v4057, 0
      %v4318 = vsel %vm3949, %v4058, 0
      %v4321 = vsel %vm3949, %v4059, 0
      %v4324 = vsel %vm3949, %v4060, 0
      %v4327 = vsel %vm3949, %v4061, 0
      %v4330 = vsel %vm3949, %v4062, 0
      %v4333 = vsel %vm3949, %v4063, 0
      %v4336 = vsel %vm3949, %v4064, 0
      %v4339 = vsel %vm3949, %v4065, 0
      %v4342 = vsel %vm3949, %v4066, 0
      %v4345 = vsel %vm3949, %v4067, 0
      %v4348 = vsel %vm3949, %v4068, 0
      %v4351 = vsel %vm3949, %v4069, 0
      %v4354 = vsel %vm3949, %v4070, 0
      %v4357 = vsel %vm3949, %v4071, 0
      %v4360 = vsel %vm3949, %v4072, 0
      %v4363 = vsel %vm3949, %v4073, 0
      %v4366 = vsel %vm3949, %v4074, 0
      %v4369 = vsel %vm3949, %v4075, 0
      %v4372 = vsel %vm3949, %v4076, 0
      %v4375 = vsel %vm3949, %v4077, 0
      %v4378 = vsel %vm3949, %v4078, 0
      %4380 = vmatprep.subr.mxu0 0.0
      %4381 = vmatpush1.xpose.msra.mxu0 %v4285
      %4382 = vmatprep.subr.mxu0 0.0
      %4383 = vmatpush1.xpose.msra.mxu0 %v4288
      %4384 = vmatprep.subr.mxu0 0.0
      %4385 = vmatpush1.xpose.msra.mxu0 %v4291
      %4386 = vmatprep.subr.mxu0 0.0
      %4387 = vmatpush1.xpose.msra.mxu0 %v4294
      %4388 = vmatprep.subr.mxu0 0.0
      %4389 = vmatpush1.xpose.msra.mxu0 %v4297
      %4390 = vmatprep.subr.mxu0 0.0
      %4391 = vmatpush1.xpose.msra.mxu0 %v4300
      %4392 = vmatprep.subr.mxu0 0.0
      %4393 = vmatpush1.xpose.msra.mxu0 %v4303
      %4394 = vmatprep.subr.mxu0 0.0
      %4395 = vmatpush1.xpose.msra.mxu0 %v4306
      %4396 = vmatprep.subr.mxu0 0.0
      %4397 = vmatpush1.xpose.msra.mxu0 %v4309
      %4398 = vmatprep.subr.mxu0 0.0
      %4399 = vmatpush1.xpose.msra.mxu0 %v4312
      %4400 = vmatprep.subr.mxu0 0.0
      %4401 = vmatpush1.xpose.msra.mxu0 %v4315
      %4402 = vmatprep.subr.mxu0 0.0
      %4403 = vmatpush1.xpose.msra.mxu0 %v4318
      %4404 = vmatprep.subr.mxu0 0.0
      %4405 = vmatpush1.xpose.msra.mxu0 %v4321
      %4406 = vmatprep.subr.mxu0 0.0
      %4407 = vmatpush1.xpose.msra.mxu0 %v4324
      %4408 = vmatprep.subr.mxu0 0.0
      %4409 = vmatpush1.xpose.msra.mxu0 %v4327
      %4410 = vmatprep.subr.mxu0 0.0
      %4411 = vmatpush1.xpose.msra.mxu0 %v4330
      %4412 = vmatprep.subr.mxu0 0.0
      %4413 = vmatpush1.xpose.msra.mxu0 %v4333
      %4414 = vmatprep.subr.mxu0 0.0
      %4415 = vmatpush1.xpose.msra.mxu0 %v4336
      %4416 = vmatprep.subr.mxu0 0.0
      %4417 = vmatpush1.xpose.msra.mxu0 %v4339
      %4418 = vmatprep.subr.mxu0 0.0
      %4419 = vmatpush1.xpose.msra.mxu0 %v4342
      %4420 = vmatprep.subr.mxu0 0.0
      %4421 = vmatpush1.xpose.msra.mxu0 %v4345
      %4422 = vmatprep.subr.mxu0 0.0
      %4423 = vmatpush1.xpose.msra.mxu0 %v4348
      %4424 = vmatprep.subr.mxu0 0.0
      %4425 = vmatpush1.xpose.msra.mxu0 %v4351
      %4426 = vmatprep.subr.mxu0 0.0
      %4427 = vmatpush1.xpose.msra.mxu0 %v4354
      %4428 = vmatprep.subr.mxu0 0.0
      %4429 = vmatpush1.xpose.msra.mxu0 %v4357
      %4430 = vmatprep.subr.mxu0 0.0
      %4431 = vmatpush1.xpose.msra.mxu0 %v4360
      %4432 = vmatprep.subr.mxu0 0.0
      %4433 = vmatpush1.xpose.msra.mxu0 %v4363
      %4434 = vmatprep.subr.mxu0 0.0
      %4435 = vmatpush1.xpose.msra.mxu0 %v4366
      %4436 = vmatprep.subr.mxu0 0.0
      %4437 = vmatpush1.xpose.msra.mxu0 %v4369
      %4438 = vmatprep.subr.mxu0 0.0
      %4439 = vmatpush1.xpose.msra.mxu0 %v4372
      %4440 = vmatprep.subr.mxu0 0.0
      %4441 = vmatpush1.xpose.msra.mxu0 %v4375
      %4442 = vmatprep.subr.mxu0 0.0
      %4443 = vmatpush1.xpose.msra.mxu0 %v4378
      %4444 = vmatprep.mubr.f32.mxu0 0.0
      %4445 = vmatmul.mubr.f32.gmra.mrb[0].mxu0 %v4282
      %v4446 = vpop.f32.mrb[0].mxu0
      %v4447 = vadd.f32 %v4277, %v4446
      %v4448 = vpop.f32.mrb[0].mxu0
      %v4449 = vadd.f32 %v4279, %v4448
      %4450 = vdwg.mxu0
      %v4451 = vld [vmem:[#allocation3 + $0x2] sm:$0xff]
      %v4452 = vld [vmem:[#allocation3 + $0xa] sm:$0xff]
      %v4453 = vld [vmem:[#allocation3 + $0x1a] sm:$0xff]
      %v4454 = vld [vmem:[#allocation3 + $0x22] sm:$0xff]
      %v4455 = vld [vmem:[#allocation3 + $0x32] sm:$0xff]
      %v4456 = vld [vmem:[#allocation3 + $0x3a] sm:$0xff]
      %v4457 = vld [vmem:[#allocation3 + $0x4a] sm:$0xff]
      %v4458 = vld [vmem:[#allocation3 + $0x52] sm:$0xff]
      %v4459 = vld [vmem:[#allocation3 + $0x62] sm:$0xff]
      %v4460 = vld [vmem:[#allocation3 + $0x6a] sm:$0xff]
      %v4461 = vld [vmem:[#allocation3 + $0x7a] sm:$0xff]
      %v4462 = vld [vmem:[#allocation3 + $0x82] sm:$0xff]
      %v4463 = vld [vmem:[#allocation3 + $0x92] sm:$0xff]
      %v4464 = vld [vmem:[#allocation3 + $0x9a] sm:$0xff]
      %v4465 = vld [vmem:[#allocation3 + $0xaa] sm:$0xff]
      %v4466 = vld [vmem:[#allocation3 + $0xb2] sm:$0xff]
      %v4467 = vld [vmem:[#allocation3 + $0xc2] sm:$0xff]
      %v4468 = vld [vmem:[#allocation3 + $0xca] sm:$0xff]
      %v4469 = vld [vmem:[#allocation3 + $0xda] sm:$0xff]
      %v4470 = vld [vmem:[#allocation3 + $0xe2] sm:$0xff]
      %v4471 = vld [vmem:[#allocation3 + $0xf2] sm:$0xff]
      %v4472 = vld [vmem:[#allocation3 + $0xfa] sm:$0xff]
      %v4473 = vld [vmem:[#allocation3 + $0x10a] sm:$0xff]
      %v4474 = vld [vmem:[#allocation3 + $0x112] sm:$0xff]
      %v4475 = vld [vmem:[#allocation3 + $0x122] sm:$0xff]
      %v4476 = vld [vmem:[#allocation3 + $0x12a] sm:$0xff]
      %v4477 = vld [vmem:[#allocation3 + $0x13a] sm:$0xff]
      %v4478 = vld [vmem:[#allocation3 + $0x142] sm:$0xff]
      %v4479 = vld [vmem:[#allocation3 + $0x152] sm:$0xff]
      %v4480 = vld [vmem:[#allocation3 + $0x15a] sm:$0xff]
      %v4481 = vld [vmem:[#allocation3 + $0x16a] sm:$0xff]
      %v4482 = vld [vmem:[#allocation3 + $0x172] sm:$0xff]
      %v4484 = vsel %vm3949, %v4040, 0
      %v4487 = vsel %vm3949, %v4451, 0
      %v4490 = vsel %vm3949, %v4452, 0
      %v4493 = vsel %vm3949, %v4453, 0
      %v4496 = vsel %vm3949, %v4454, 0
      %v4499 = vsel %vm3949, %v4455, 0
      %v4502 = vsel %vm3949, %v4456, 0
      %v4505 = vsel %vm3949, %v4457, 0
      %v4508 = vsel %vm3949, %v4458, 0
      %v4511 = vsel %vm3949, %v4459, 0
      %v4514 = vsel %vm3949, %v4460, 0
      %v4517 = vsel %vm3949, %v4461, 0
      %v4520 = vsel %vm3949, %v4462, 0
      %v4523 = vsel %vm3949, %v4463, 0
      %v4526 = vsel %vm3949, %v4464, 0
      %v4529 = vsel %vm3949, %v4465, 0
      %v4532 = vsel %vm3949, %v4466, 0
      %v4535 = vsel %vm3949, %v4467, 0
      %v4538 = vsel %vm3949, %v4468, 0
      %v4541 = vsel %vm3949, %v4469, 0
      %v4544 = vsel %vm3949, %v4470, 0
      %v4547 = vsel %vm3949, %v4471, 0
      %v4550 = vsel %vm3949, %v4472, 0
      %v4553 = vsel %vm3949, %v4473, 0
      %v4556 = vsel %vm3949, %v4474, 0
      %v4559 = vsel %vm3949, %v4475, 0
      %v4562 = vsel %vm3949, %v4476, 0
      %v4565 = vsel %vm3949, %v4477, 0
      %v4568 = vsel %vm3949, %v4478, 0
      %v4571 = vsel %vm3949, %v4479, 0
      %v4574 = vsel %vm3949, %v4480, 0
      %v4577 = vsel %vm3949, %v4481, 0
      %v4580 = vsel %vm3949, %v4482, 0
      %4582 = vmatprep.subr.mxu0 0.0
      %4583 = vmatpush1.xpose.msra.mxu0 %v4487
      %4584 = vmatprep.subr.mxu0 0.0
      %4585 = vmatpush1.xpose.msra.mxu0 %v4490
      %4586 = vmatprep.subr.mxu0 0.0
      %4587 = vmatpush1.xpose.msra.mxu0 %v4493
      %4588 = vmatprep.subr.mxu0 0.0
      %4589 = vmatpush1.xpose.msra.mxu0 %v4496
      %4590 = vmatprep.subr.mxu0 0.0
      %4591 = vmatpush1.xpose.msra.mxu0 %v4499
      %4592 = vmatprep.subr.mxu0 0.0
      %4593 = vmatpush1.xpose.msra.mxu0 %v4502
      %4594 = vmatprep.subr.mxu0 0.0
      %4595 = vmatpush1.xpose.msra.mxu0 %v4505
      %4596 = vmatprep.subr.mxu0 0.0
      %4597 = vmatpush1.xpose.msra.mxu0 %v4508
      %4598 = vmatprep.subr.mxu0 0.0
      %4599 = vmatpush1.xpose.msra.mxu0 %v4511
      %4600 = vmatprep.subr.mxu0 0.0
      %4601 = vmatpush1.xpose.msra.mxu0 %v4514
      %4602 = vmatprep.subr.mxu0 0.0
      %4603 = vmatpush1.xpose.msra.mxu0 %v4517
      %4604 = vmatprep.subr.mxu0 0.0
      %4605 = vmatpush1.xpose.msra.mxu0 %v4520
      %4606 = vmatprep.subr.mxu0 0.0
      %4607 = vmatpush1.xpose.msra.mxu0 %v4523
      %4608 = vmatprep.subr.mxu0 0.0
      %4609 = vmatpush1.xpose.msra.mxu0 %v4526
      %4610 = vmatprep.subr.mxu0 0.0
      %4611 = vmatpush1.xpose.msra.mxu0 %v4529
      %4612 = vmatprep.subr.mxu0 0.0
      %4613 = vmatpush1.xpose.msra.mxu0 %v4532
      %4614 = vmatprep.subr.mxu0 0.0
      %4615 = vmatpush1.xpose.msra.mxu0 %v4535
      %4616 = vmatprep.subr.mxu0 0.0
      %4617 = vmatpush1.xpose.msra.mxu0 %v4538
      %4618 = vmatprep.subr.mxu0 0.0
      %4619 = vmatpush1.xpose.msra.mxu0 %v4541
      %4620 = vmatprep.subr.mxu0 0.0
      %4621 = vmatpush1.xpose.msra.mxu0 %v4544
      %4622 = vmatprep.subr.mxu0 0.0
      %4623 = vmatpush1.xpose.msra.mxu0 %v4547
      %4624 = vmatprep.subr.mxu0 0.0
      %4625 = vmatpush1.xpose.msra.mxu0 %v4550
      %4626 = vmatprep.subr.mxu0 0.0
      %4627 = vmatpush1.xpose.msra.mxu0 %v4553
      %4628 = vmatprep.subr.mxu0 0.0
      %4629 = vmatpush1.xpose.msra.mxu0 %v4556
      %4630 = vmatprep.subr.mxu0 0.0
      %4631 = vmatpush1.xpose.msra.mxu0 %v4559
      %4632 = vmatprep.subr.mxu0 0.0
      %4633 = vmatpush1.xpose.msra.mxu0 %v4562
      %4634 = vmatprep.subr.mxu0 0.0
      %4635 = vmatpush1.xpose.msra.mxu0 %v4565
      %4636 = vmatprep.subr.mxu0 0.0
      %4637 = vmatpush1.xpose.msra.mxu0 %v4568
      %4638 = vmatprep.subr.mxu0 0.0
      %4639 = vmatpush1.xpose.msra.mxu0 %v4571
      %4640 = vmatprep.subr.mxu0 0.0
      %4641 = vmatpush1.xpose.msra.mxu0 %v4574
      %4642 = vmatprep.subr.mxu0 0.0
      %4643 = vmatpush1.xpose.msra.mxu0 %v4577
      %4644 = vmatprep.subr.mxu0 0.0
      %4645 = vmatpush1.xpose.msra.mxu0 %v4580
      %4646 = vmatprep.mubr.f32.mxu0 0.0
      %4647 = vmatmul.mubr.f32.gmra.mrb[0].mxu0 %v4484
      %v4648 = vpop.f32.mrb[0].mxu0
      %v4649 = vadd.f32 0.0, %v4648
      %v4650 = vpop.f32.mrb[0].mxu0
      %v4651 = vadd.f32 0.0, %v4650
      %4652 = vdwg.mxu0
      %v4653 = vadd.f32 %v4447, %v4649
      %v4654 = vadd.f32 %v4449, %v4651
      %v4655 = vld [vmem:[%s4005] sm:$0xff]
      %v4656 = vld [vmem:[%s4005 + $0x8] sm:$0xff]
      %v4657 = vld [vmem:[%s4005 + $0x18] sm:$0xff]
      %v4658 = vld [vmem:[%s4005 + $0x20] sm:$0xff]
      %v4659 = vld [vmem:[%s4005 + $0x30] sm:$0xff]
      %v4660 = vld [vmem:[%s4005 + $0x38] sm:$0xff]
      %v4661 = vld [vmem:[%s4005 + $0x48] sm:$0xff]
      %v4662 = vld [vmem:[%s4005 + $0x50] sm:$0xff]
      %v4663 = vld [vmem:[%s4005 + $0x60] sm:$0xff]
      %v4664 = vld [vmem:[%s4005 + $0x68] sm:$0xff]
      %v4665 = vld [vmem:[%s4005 + $0x78] sm:$0xff]
      %v4666 = vld [vmem:[%s4005 + $0x80] sm:$0xff]
      %v4667 = vld [vmem:[%s4005 + $0x90] sm:$0xff]
      %v4668 = vld [vmem:[%s4005 + $0x98] sm:$0xff]
      %v4669 = vld [vmem:[%s4005 + $0xa8] sm:$0xff]
      %v4670 = vld [vmem:[%s4005 + $0xb0] sm:$0xff]
      %v4671 = vld [vmem:[%s4005 + $0xc0] sm:$0xff]
      %v4672 = vld [vmem:[%s4005 + $0xc8] sm:$0xff]
      %v4673 = vld [vmem:[%s4005 + $0xd8] sm:$0xff]
      %v4674 = vld [vmem:[%s4005 + $0xe0] sm:$0xff]
      %v4675 = vld [vmem:[%s4005 + $0xf0] sm:$0xff]
      %v4676 = vld [vmem:[%s4005 + $0xf8] sm:$0xff]
      %v4677 = vld [vmem:[%s4005 + $0x108] sm:$0xff]
      %v4678 = vld [vmem:[%s4005 + $0x110] sm:$0xff]
      %v4679 = vld [vmem:[%s4005 + $0x120] sm:$0xff]
      %v4680 = vld [vmem:[%s4005 + $0x128] sm:$0xff]
      %v4681 = vld [vmem:[%s4005 + $0x138] sm:$0xff]
      %v4682 = vld [vmem:[%s4005 + $0x140] sm:$0xff]
      %v4683 = vld [vmem:[%s4005 + $0x150] sm:$0xff]
      %v4684 = vld [vmem:[%s4005 + $0x158] sm:$0xff]
      %v4685 = vld [vmem:[%s4005 + $0x168] sm:$0xff]
      %v4686 = vld [vmem:[%s4005 + $0x170] sm:$0xff]
      %v4688 = vsel %vm3949, %v4041, 0
      %v4691 = vsel %vm3949, %v4655, 0
      %v4694 = vsel %vm3949, %v4656, 0
      %v4697 = vsel %vm3949, %v4657, 0
      %v4700 = vsel %vm3949, %v4658, 0
      %v4703 = vsel %vm3949, %v4659, 0
      %v4706 = vsel %vm3949, %v4660, 0
      %v4709 = vsel %vm3949, %v4661, 0
      %v4712 = vsel %vm3949, %v4662, 0
      %v4715 = vsel %vm3949, %v4663, 0
      %v4718 = vsel %vm3949, %v4664, 0
      %v4721 = vsel %vm3949, %v4665, 0
      %v4724 = vsel %vm3949, %v4666, 0
      %v4727 = vsel %vm3949, %v4667, 0
      %v4730 = vsel %vm3949, %v4668, 0
      %v4733 = vsel %vm3949, %v4669, 0
      %v4736 = vsel %vm3949, %v4670, 0
      %v4739 = vsel %vm3949, %v4671, 0
      %v4742 = vsel %vm3949, %v4672, 0
      %v4745 = vsel %vm3949, %v4673, 0
      %v4748 = vsel %vm3949, %v4674, 0
      %v4751 = vsel %vm3949, %v4675, 0
      %v4754 = vsel %vm3949, %v4676, 0
      %v4757 = vsel %vm3949, %v4677, 0
      %v4760 = vsel %vm3949, %v4678, 0
      %v4763 = vsel %vm3949, %v4679, 0
      %v4766 = vsel %vm3949, %v4680, 0
      %v4769 = vsel %vm3949, %v4681, 0
      %v4772 = vsel %vm3949, %v4682, 0
      %v4775 = vsel %vm3949, %v4683, 0
      %v4778 = vsel %vm3949, %v4684, 0
      %v4781 = vsel %vm3949, %v4685, 0
      %v4784 = vsel %vm3949, %v4686, 0
      %4786 = vmatprep.subr.mxu0 0.0
      %4787 = vmatpush1.xpose.msra.mxu0 %v4691
      %4788 = vmatprep.subr.mxu0 0.0
      %4789 = vmatpush1.xpose.msra.mxu0 %v4694
      %4790 = vmatprep.subr.mxu0 0.0
      %4791 = vmatpush1.xpose.msra.mxu0 %v4697
      %4792 = vmatprep.subr.mxu0 0.0
      %4793 = vmatpush1.xpose.msra.mxu0 %v4700
      %4794 = vmatprep.subr.mxu0 0.0
      %4795 = vmatpush1.xpose.msra.mxu0 %v4703
      %4796 = vmatprep.subr.mxu0 0.0
      %4797 = vmatpush1.xpose.msra.mxu0 %v4706
      %4798 = vmatprep.subr.mxu0 0.0
      %4799 = vmatpush1.xpose.msra.mxu0 %v4709
      %4800 = vmatprep.subr.mxu0 0.0
      %4801 = vmatpush1.xpose.msra.mxu0 %v4712
      %4802 = vmatprep.subr.mxu0 0.0
      %4803 = vmatpush1.xpose.msra.mxu0 %v4715
      %4804 = vmatprep.subr.mxu0 0.0
      %4805 = vmatpush1.xpose.msra.mxu0 %v4718
      %4806 = vmatprep.subr.mxu0 0.0
      %4807 = vmatpush1.xpose.msra.mxu0 %v4721
      %4808 = vmatprep.subr.mxu0 0.0
      %4809 = vmatpush1.xpose.msra.mxu0 %v4724
      %4810 = vmatprep.subr.mxu0 0.0
      %4811 = vmatpush1.xpose.msra.mxu0 %v4727
      %4812 = vmatprep.subr.mxu0 0.0
      %4813 = vmatpush1.xpose.msra.mxu0 %v4730
      %4814 = vmatprep.subr.mxu0 0.0
      %4815 = vmatpush1.xpose.msra.mxu0 %v4733
      %4816 = vmatprep.subr.mxu0 0.0
      %4817 = vmatpush1.xpose.msra.mxu0 %v4736
      %4818 = vmatprep.subr.mxu0 0.0
      %4819 = vmatpush1.xpose.msra.mxu0 %v4739
      %4820 = vmatprep.subr.mxu0 0.0
      %4821 = vmatpush1.xpose.msra.mxu0 %v4742
      %4822 = vmatprep.subr.mxu0 0.0
      %4823 = vmatpush1.xpose.msra.mxu0 %v4745
      %4824 = vmatprep.subr.mxu0 0.0
      %4825 = vmatpush1.xpose.msra.mxu0 %v4748
      %4826 = vmatprep.subr.mxu0 0.0
      %4827 = vmatpush1.xpose.msra.mxu0 %v4751
      %4828 = vmatprep.subr.mxu0 0.0
      %4829 = vmatpush1.xpose.msra.mxu0 %v4754
      %4830 = vmatprep.subr.mxu0 0.0
      %4831 = vmatpush1.xpose.msra.mxu0 %v4757
      %4832 = vmatprep.subr.mxu0 0.0
      %4833 = vmatpush1.xpose.msra.mxu0 %v4760
      %4834 = vmatprep.subr.mxu0 0.0
      %4835 = vmatpush1.xpose.msra.mxu0 %v4763
      %4836 = vmatprep.subr.mxu0 0.0
      %4837 = vmatpush1.xpose.msra.mxu0 %v4766
      %4838 = vmatprep.subr.mxu0 0.0
      %4839 = vmatpush1.xpose.msra.mxu0 %v4769
      %4840 = vmatprep.subr.mxu0 0.0
      %4841 = vmatpush1.xpose.msra.mxu0 %v4772
      %4842 = vmatprep.subr.mxu0 0.0
      %4843 = vmatpush1.xpose.msra.mxu0 %v4775
      %4844 = vmatprep.subr.mxu0 0.0
      %4845 = vmatpush1.xpose.msra.mxu0 %v4778
      %4846 = vmatprep.subr.mxu0 0.0
      %4847 = vmatpush1.xpose.msra.mxu0 %v4781
      %4848 = vmatprep.subr.mxu0 0.0
      %4849 = vmatpush1.xpose.msra.mxu0 %v4784
      %4850 = vmatprep.mubr.f32.mxu0 0.0
      %4851 = vmatmul.mubr.f32.gmra.mrb[0].mxu0 %v4688
      %v4852 = vpop.f32.mrb[0].mxu0
      %v4853 = vadd.f32 0.0, %v4852
      %v4854 = vpop.f32.mrb[0].mxu0
      %v4855 = vadd.f32 0.0, %v4854
      %4856 = vdwg.mxu0
      %v4857 = vadd.f32 %v4653, %v4853
      %v4858 = vadd.f32 %v4654, %v4855
      %v4859 = vld [vmem:[%s4005 + $0x1] sm:$0xff]
      %v4860 = vld [vmem:[%s4005 + $0x9] sm:$0xff]
      %v4861 = vld [vmem:[%s4005 + $0x19] sm:$0xff]
      %v4862 = vld [vmem:[%s4005 + $0x21] sm:$0xff]
      %v4863 = vld [vmem:[%s4005 + $0x31] sm:$0xff]
      %v4864 = vld [vmem:[%s4005 + $0x39] sm:$0xff]
      %v4865 = vld [vmem:[%s4005 + $0x49] sm:$0xff]
      %v4866 = vld [vmem:[%s4005 + $0x51] sm:$0xff]
      %v4867 = vld [vmem:[%s4005 + $0x61] sm:$0xff]
      %v4868 = vld [vmem:[%s4005 + $0x69] sm:$0xff]
      %v4869 = vld [vmem:[%s4005 + $0x79] sm:$0xff]
      %v4870 = vld [vmem:[%s4005 + $0x81] sm:$0xff]
      %v4871 = vld [vmem:[%s4005 + $0x91] sm:$0xff]
      %v4872 = vld [vmem:[%s4005 + $0x99] sm:$0xff]
      %v4873 = vld [vmem:[%s4005 + $0xa9] sm:$0xff]
      %v4874 = vld [vmem:[%s4005 + $0xb1] sm:$0xff]
      %v4875 = vld [vmem:[%s4005 + $0xc1] sm:$0xff]
      %v4876 = vld [vmem:[%s4005 + $0xc9] sm:$0xff]
      %v4877 = vld [vmem:[%s4005 + $0xd9] sm:$0xff]
      %v4878 = vld [vmem:[%s4005 + $0xe1] sm:$0xff]
      %v4879 = vld [vmem:[%s4005 + $0xf1] sm:$0xff]
      %v4880 = vld [vmem:[%s4005 + $0xf9] sm:$0xff]
      %v4881 = vld [vmem:[%s4005 + $0x109] sm:$0xff]
      %v4882 = vld [vmem:[%s4005 + $0x111] sm:$0xff]
      %v4883 = vld [vmem:[%s4005 + $0x121] sm:$0xff]
      %v4884 = vld [vmem:[%s4005 + $0x129] sm:$0xff]
      %v4885 = vld [vmem:[%s4005 + $0x139] sm:$0xff]
      %v4886 = vld [vmem:[%s4005 + $0x141] sm:$0xff]
      %v4887 = vld [vmem:[%s4005 + $0x151] sm:$0xff]
      %v4888 = vld [vmem:[%s4005 + $0x159] sm:$0xff]
      %v4889 = vld [vmem:[%s4005 + $0x169] sm:$0xff]
      %v4890 = vld [vmem:[%s4005 + $0x171] sm:$0xff]
      %v4892 = vsel %vm3949, %v4042, 0
      %v4895 = vsel %vm3949, %v4859, 0
      %v4898 = vsel %vm3949, %v4860, 0
      %v4901 = vsel %vm3949, %v4861, 0
      %v4904 = vsel %vm3949, %v4862, 0
      %v4907 = vsel %vm3949, %v4863, 0
      %v4910 = vsel %vm3949, %v4864, 0
      %v4913 = vsel %vm3949, %v4865, 0
      %v4916 = vsel %vm3949, %v4866, 0
      %v4919 = vsel %vm3949, %v4867, 0
      %v4922 = vsel %vm3949, %v4868, 0
      %v4925 = vsel %vm3949, %v4869, 0
      %v4928 = vsel %vm3949, %v4870, 0
      %v4931 = vsel %vm3949, %v4871, 0
      %v4934 = vsel %vm3949, %v4872, 0
      %v4937 = vsel %vm3949, %v4873, 0
      %v4940 = vsel %vm3949, %v4874, 0
      %v4943 = vsel %vm3949, %v4875, 0
      %v4946 = vsel %vm3949, %v4876, 0
      %v4949 = vsel %vm3949, %v4877, 0
      %v4952 = vsel %vm3949, %v4878, 0
      %v4955 = vsel %vm3949, %v4879, 0
      %v4958 = vsel %vm3949, %v4880, 0
      %v4961 = vsel %vm3949, %v4881, 0
      %v4964 = vsel %vm3949, %v4882, 0
      %v4967 = vsel %vm3949, %v4883, 0
      %v4970 = vsel %vm3949, %v4884, 0
      %v4973 = vsel %vm3949, %v4885, 0
      %v4976 = vsel %vm3949, %v4886, 0
      %v4979 = vsel %vm3949, %v4887, 0
      %v4982 = vsel %vm3949, %v4888, 0
      %v4985 = vsel %vm3949, %v4889, 0
      %v4988 = vsel %vm3949, %v4890, 0
      %4990 = vmatprep.subr.mxu0 0.0
      %4991 = vmatpush1.xpose.msra.mxu0 %v4895
      %4992 = vmatprep.subr.mxu0 0.0
      %4993 = vmatpush1.xpose.msra.mxu0 %v4898
      %4994 = vmatprep.subr.mxu0 0.0
      %4995 = vmatpush1.xpose.msra.mxu0 %v4901
      %4996 = vmatprep.subr.mxu0 0.0
      %4997 = vmatpush1.xpose.msra.mxu0 %v4904
      %4998 = vmatprep.subr.mxu0 0.0
      %4999 = vmatpush1.xpose.msra.mxu0 %v4907
      %5000 = vmatprep.subr.mxu0 0.0
      %5001 = vmatpush1.xpose.msra.mxu0 %v4910
      %5002 = vmatprep.subr.mxu0 0.0
      %5003 = vmatpush1.xpose.msra.mxu0 %v4913
      %5004 = vmatprep.subr.mxu0 0.0
      %5005 = vmatpush1.xpose.msra.mxu0 %v4916
      %5006 = vmatprep.subr.mxu0 0.0
      %5007 = vmatpush1.xpose.msra.mxu0 %v4919
      %5008 = vmatprep.subr.mxu0 0.0
      %5009 = vmatpush1.xpose.msra.mxu0 %v4922
      %5010 = vmatprep.subr.mxu0 0.0
      %5011 = vmatpush1.xpose.msra.mxu0 %v4925
      %5012 = vmatprep.subr.mxu0 0.0
      %5013 = vmatpush1.xpose.msra.mxu0 %v4928
      %5014 = vmatprep.subr.mxu0 0.0
      %5015 = vmatpush1.xpose.msra.mxu0 %v4931
      %5016 = vmatprep.subr.mxu0 0.0
      %5017 = vmatpush1.xpose.msra.mxu0 %v4934
      %5018 = vmatprep.subr.mxu0 0.0
      %5019 = vmatpush1.xpose.msra.mxu0 %v4937
      %5020 = vmatprep.subr.mxu0 0.0
      %5021 = vmatpush1.xpose.msra.mxu0 %v4940
      %5022 = vmatprep.subr.mxu0 0.0
      %5023 = vmatpush1.xpose.msra.mxu0 %v4943
      %5024 = vmatprep.subr.mxu0 0.0
      %5025 = vmatpush1.xpose.msra.mxu0 %v4946
      %5026 = vmatprep.subr.mxu0 0.0
      %5027 = vmatpush1.xpose.msra.mxu0 %v4949
      %5028 = vmatprep.subr.mxu0 0.0
      %5029 = vmatpush1.xpose.msra.mxu0 %v4952
      %5030 = vmatprep.subr.mxu0 0.0
      %5031 = vmatpush1.xpose.msra.mxu0 %v4955
      %5032 = vmatprep.subr.mxu0 0.0
      %5033 = vmatpush1.xpose.msra.mxu0 %v4958
      %5034 = vmatprep.subr.mxu0 0.0
      %5035 = vmatpush1.xpose.msra.mxu0 %v4961
      %5036 = vmatprep.subr.mxu0 0.0
      %5037 = vmatpush1.xpose.msra.mxu0 %v4964
      %5038 = vmatprep.subr.mxu0 0.0
      %5039 = vmatpush1.xpose.msra.mxu0 %v4967
      %5040 = vmatprep.subr.mxu0 0.0
      %5041 = vmatpush1.xpose.msra.mxu0 %v4970
      %5042 = vmatprep.subr.mxu0 0.0
      %5043 = vmatpush1.xpose.msra.mxu0 %v4973
      %5044 = vmatprep.subr.mxu0 0.0
      %5045 = vmatpush1.xpose.msra.mxu0 %v4976
      %5046 = vmatprep.subr.mxu0 0.0
      %5047 = vmatpush1.xpose.msra.mxu0 %v4979
      %5048 = vmatprep.subr.mxu0 0.0
      %5049 = vmatpush1.xpose.msra.mxu0 %v4982
      %5050 = vmatprep.subr.mxu0 0.0
      %5051 = vmatpush1.xpose.msra.mxu0 %v4985
      %5052 = vmatprep.subr.mxu0 0.0
      %5053 = vmatpush1.xpose.msra.mxu0 %v4988
      %5054 = vmatprep.mubr.f32.mxu0 0.0
      %5055 = vmatmul.mubr.f32.gmra.mrb[0].mxu0 %v4892
      %v5056 = vpop.f32.mrb[0].mxu0
      %v5057 = vadd.f32 0.0, %v5056
      %v5058 = vpop.f32.mrb[0].mxu0
      %v5059 = vadd.f32 0.0, %v5058
      %5060 = vdwg.mxu0
      %v5061 = vadd.f32 %v4857, %v5057
      %v5062 = vadd.f32 %v4858, %v5059
      %v5063 = vld [vmem:[%s4005 + $0x2] sm:$0xff]
      %v5064 = vld [vmem:[%s4005 + $0xa] sm:$0xff]
      %v5065 = vld [vmem:[%s4005 + $0x1a] sm:$0xff]
      %v5066 = vld [vmem:[%s4005 + $0x22] sm:$0xff]
      %v5067 = vld [vmem:[%s4005 + $0x32] sm:$0xff]
      %v5068 = vld [vmem:[%s4005 + $0x3a] sm:$0xff]
      %v5069 = vld [vmem:[%s4005 + $0x4a] sm:$0xff]
      %v5070 = vld [vmem:[%s4005 + $0x52] sm:$0xff]
      %v5071 = vld [vmem:[%s4005 + $0x62] sm:$0xff]
      %v5072 = vld [vmem:[%s4005 + $0x6a] sm:$0xff]
      %v5073 = vld [vmem:[%s4005 + $0x7a] sm:$0xff]
      %v5074 = vld [vmem:[%s4005 + $0x82] sm:$0xff]
      %v5075 = vld [vmem:[%s4005 + $0x92] sm:$0xff]
      %v5076 = vld [vmem:[%s4005 + $0x9a] sm:$0xff]
      %v5077 = vld [vmem:[%s4005 + $0xaa] sm:$0xff]
      %v5078 = vld [vmem:[%s4005 + $0xb2] sm:$0xff]
      %v5079 = vld [vmem:[%s4005 + $0xc2] sm:$0xff]
      %v5080 = vld [vmem:[%s4005 + $0xca] sm:$0xff]
      %v5081 = vld [vmem:[%s4005 + $0xda] sm:$0xff]
      %v5082 = vld [vmem:[%s4005 + $0xe2] sm:$0xff]
      %v5083 = vld [vmem:[%s4005 + $0xf2] sm:$0xff]
      %v5084 = vld [vmem:[%s4005 + $0xfa] sm:$0xff]
      %v5085 = vld [vmem:[%s4005 + $0x10a] sm:$0xff]
      %v5086 = vld [vmem:[%s4005 + $0x112] sm:$0xff]
      %v5087 = vld [vmem:[%s4005 + $0x122] sm:$0xff]
      %v5088 = vld [vmem:[%s4005 + $0x12a] sm:$0xff]
      %v5089 = vld [vmem:[%s4005 + $0x13a] sm:$0xff]
      %v5090 = vld [vmem:[%s4005 + $0x142] sm:$0xff]
      %v5091 = vld [vmem:[%s4005 + $0x152] sm:$0xff]
      %v5092 = vld [vmem:[%s4005 + $0x15a] sm:$0xff]
      %v5093 = vld [vmem:[%s4005 + $0x16a] sm:$0xff]
      %v5094 = vld [vmem:[%s4005 + $0x172] sm:$0xff]
      %v5096 = vsel %vm3949, %v4043, 0
      %v5099 = vsel %vm3949, %v5063, 0
      %v5102 = vsel %vm3949, %v5064, 0
      %v5105 = vsel %vm3949, %v5065, 0
      %v5108 = vsel %vm3949, %v5066, 0
      %v5111 = vsel %vm3949, %v5067, 0
      %v5114 = vsel %vm3949, %v5068, 0
      %v5117 = vsel %vm3949, %v5069, 0
      %v5120 = vsel %vm3949, %v5070, 0
      %v5123 = vsel %vm3949, %v5071, 0
      %v5126 = vsel %vm3949, %v5072, 0
      %v5129 = vsel %vm3949, %v5073, 0
      %v5132 = vsel %vm3949, %v5074, 0
      %v5135 = vsel %vm3949, %v5075, 0
      %v5138 = vsel %vm3949, %v5076, 0
      %v5141 = vsel %vm3949, %v5077, 0
      %v5144 = vsel %vm3949, %v5078, 0
      %v5147 = vsel %vm3949, %v5079, 0
      %v5150 = vsel %vm3949, %v5080, 0
      %v5153 = vsel %vm3949, %v5081, 0
      %v5156 = vsel %vm3949, %v5082, 0
      %v5159 = vsel %vm3949, %v5083, 0
      %v5162 = vsel %vm3949, %v5084, 0
      %v5165 = vsel %vm3949, %v5085, 0
      %v5168 = vsel %vm3949, %v5086, 0
      %v5171 = vsel %vm3949, %v5087, 0
      %v5174 = vsel %vm3949, %v5088, 0
      %v5177 = vsel %vm3949, %v5089, 0
      %v5180 = vsel %vm3949, %v5090, 0
      %v5183 = vsel %vm3949, %v5091, 0
      %v5186 = vsel %vm3949, %v5092, 0
      %v5189 = vsel %vm3949, %v5093, 0
      %v5192 = vsel %vm3949, %v5094, 0
      %5194 = vmatprep.subr.mxu0 0.0
      %5195 = vmatpush1.xpose.msra.mxu0 %v5099
      %5196 = vmatprep.subr.mxu0 0.0
      %5197 = vmatpush1.xpose.msra.mxu0 %v5102
      %5198 = vmatprep.subr.mxu0 0.0
      %5199 = vmatpush1.xpose.msra.mxu0 %v5105
      %5200 = vmatprep.subr.mxu0 0.0
      %5201 = vmatpush1.xpose.msra.mxu0 %v5108
      %5202 = vmatprep.subr.mxu0 0.0
      %5203 = vmatpush1.xpose.msra.mxu0 %v5111
      %5204 = vmatprep.subr.mxu0 0.0
      %5205 = vmatpush1.xpose.msra.mxu0 %v5114
      %5206 = vmatprep.subr.mxu0 0.0
      %5207 = vmatpush1.xpose.msra.mxu0 %v5117
      %5208 = vmatprep.subr.mxu0 0.0
      %5209 = vmatpush1.xpose.msra.mxu0 %v5120
      %5210 = vmatprep.subr.mxu0 0.0
      %5211 = vmatpush1.xpose.msra.mxu0 %v5123
      %5212 = vmatprep.subr.mxu0 0.0
      %5213 = vmatpush1.xpose.msra.mxu0 %v5126
      %5214 = vmatprep.subr.mxu0 0.0
      %5215 = vmatpush1.xpose.msra.mxu0 %v5129
      %5216 = vmatprep.subr.mxu0 0.0
      %5217 = vmatpush1.xpose.msra.mxu0 %v5132
      %5218 = vmatprep.subr.mxu0 0.0
      %5219 = vmatpush1.xpose.msra.mxu0 %v5135
      %5220 = vmatprep.subr.mxu0 0.0
      %5221 = vmatpush1.xpose.msra.mxu0 %v5138
      %5222 = vmatprep.subr.mxu0 0.0
      %5223 = vmatpush1.xpose.msra.mxu0 %v5141
      %5224 = vmatprep.subr.mxu0 0.0
      %5225 = vmatpush1.xpose.msra.mxu0 %v5144
      %5226 = vmatprep.subr.mxu0 0.0
      %5227 = vmatpush1.xpose.msra.mxu0 %v5147
      %5228 = vmatprep.subr.mxu0 0.0
      %5229 = vmatpush1.xpose.msra.mxu0 %v5150
      %5230 = vmatprep.subr.mxu0 0.0
      %5231 = vmatpush1.xpose.msra.mxu0 %v5153
      %5232 = vmatprep.subr.mxu0 0.0
      %5233 = vmatpush1.xpose.msra.mxu0 %v5156
      %5234 = vmatprep.subr.mxu0 0.0
      %5235 = vmatpush1.xpose.msra.mxu0 %v5159
      %5236 = vmatprep.subr.mxu0 0.0
      %5237 = vmatpush1.xpose.msra.mxu0 %v5162
      %5238 = vmatprep.subr.mxu0 0.0
      %5239 = vmatpush1.xpose.msra.mxu0 %v5165
      %5240 = vmatprep.subr.mxu0 0.0
      %5241 = vmatpush1.xpose.msra.mxu0 %v5168
      %5242 = vmatprep.subr.mxu0 0.0
      %5243 = vmatpush1.xpose.msra.mxu0 %v5171
      %5244 = vmatprep.subr.mxu0 0.0
      %5245 = vmatpush1.xpose.msra.mxu0 %v5174
      %5246 = vmatprep.subr.mxu0 0.0
      %5247 = vmatpush1.xpose.msra.mxu0 %v5177
      %5248 = vmatprep.subr.mxu0 0.0
      %5249 = vmatpush1.xpose.msra.mxu0 %v5180
      %5250 = vmatprep.subr.mxu0 0.0
      %5251 = vmatpush1.xpose.msra.mxu0 %v5183
      %5252 = vmatprep.subr.mxu0 0.0
      %5253 = vmatpush1.xpose.msra.mxu0 %v5186
      %5254 = vmatprep.subr.mxu0 0.0
      %5255 = vmatpush1.xpose.msra.mxu0 %v5189
      %5256 = vmatprep.subr.mxu0 0.0
      %5257 = vmatpush1.xpose.msra.mxu0 %v5192
      %5258 = vmatprep.mubr.f32.mxu0 0.0
      %5259 = vmatmul.mubr.f32.gmra.mrb[0].mxu0 %v5096
      %v5260 = vpop.f32.mrb[0].mxu0
      %v5261 = vadd.f32 0.0, %v5260
      %v5262 = vpop.f32.mrb[0].mxu0
      %v5263 = vadd.f32 0.0, %v5262
      %5264 = vdwg.mxu0
      %v5265 = vadd.f32 %v5061, %v5261
      %v5266 = vadd.f32 %v5062, %v5263
      %s5267 = scalar_lea.vmem [#allocation3], 48
      %v5268 = vld [vmem:[%s5267] sm:$0xff]
      %v5269 = vld [vmem:[%s5267 + $0x8] sm:$0xff]
      %v5270 = vld [vmem:[%s5267 + $0x18] sm:$0xff]
      %v5271 = vld [vmem:[%s5267 + $0x20] sm:$0xff]
      %v5272 = vld [vmem:[%s5267 + $0x30] sm:$0xff]
      %v5273 = vld [vmem:[%s5267 + $0x38] sm:$0xff]
      %v5274 = vld [vmem:[%s5267 + $0x48] sm:$0xff]
      %v5275 = vld [vmem:[%s5267 + $0x50] sm:$0xff]
      %v5276 = vld [vmem:[%s5267 + $0x60] sm:$0xff]
      %v5277 = vld [vmem:[%s5267 + $0x68] sm:$0xff]
      %v5278 = vld [vmem:[%s5267 + $0x78] sm:$0xff]
      %v5279 = vld [vmem:[%s5267 + $0x80] sm:$0xff]
      %v5280 = vld [vmem:[%s5267 + $0x90] sm:$0xff]
      %v5281 = vld [vmem:[%s5267 + $0x98] sm:$0xff]
      %v5282 = vld [vmem:[%s5267 + $0xa8] sm:$0xff]
      %v5283 = vld [vmem:[%s5267 + $0xb0] sm:$0xff]
      %v5284 = vld [vmem:[%s5267 + $0xc0] sm:$0xff]
      %v5285 = vld [vmem:[%s5267 + $0xc8] sm:$0xff]
      %v5286 = vld [vmem:[%s5267 + $0xd8] sm:$0xff]
      %v5287 = vld [vmem:[%s5267 + $0xe0] sm:$0xff]
      %v5288 = vld [vmem:[%s5267 + $0xf0] sm:$0xff]
      %v5289 = vld [vmem:[%s5267 + $0xf8] sm:$0xff]
      %v5290 = vld [vmem:[%s5267 + $0x108] sm:$0xff]
      %v5291 = vld [vmem:[%s5267 + $0x110] sm:$0xff]
      %v5292 = vld [vmem:[%s5267 + $0x120] sm:$0xff]
      %v5293 = vld [vmem:[%s5267 + $0x128] sm:$0xff]
      %v5294 = vld [vmem:[%s5267 + $0x138] sm:$0xff]
      %v5295 = vld [vmem:[%s5267 + $0x140] sm:$0xff]
      %v5296 = vld [vmem:[%s5267 + $0x150] sm:$0xff]
      %v5297 = vld [vmem:[%s5267 + $0x158] sm:$0xff]
      %v5298 = vld [vmem:[%s5267 + $0x168] sm:$0xff]
      %v5299 = vld [vmem:[%s5267 + $0x170] sm:$0xff]
      %v5301 = vsel %vm3949, %v4044, 0
      %v5304 = vsel %vm3949, %v5268, 0
      %v5307 = vsel %vm3949, %v5269, 0
      %v5310 = vsel %vm3949, %v5270, 0
      %v5313 = vsel %vm3949, %v5271, 0
      %v5316 = vsel %vm3949, %v5272, 0
      %v5319 = vsel %vm3949, %v5273, 0
      %v5322 = vsel %vm3949, %v5274, 0
      %v5325 = vsel %vm3949, %v5275, 0
      %v5328 = vsel %vm3949, %v5276, 0
      %v5331 = vsel %vm3949, %v5277, 0
      %v5334 = vsel %vm3949, %v5278, 0
      %v5337 = vsel %vm3949, %v5279, 0
      %v5340 = vsel %vm3949, %v5280, 0
      %v5343 = vsel %vm3949, %v5281, 0
      %v5346 = vsel %vm3949, %v5282, 0
      %v5349 = vsel %vm3949, %v5283, 0
      %v5352 = vsel %vm3949, %v5284, 0
      %v5355 = vsel %vm3949, %v5285, 0
      %v5358 = vsel %vm3949, %v5286, 0
      %v5361 = vsel %vm3949, %v5287, 0
      %v5364 = vsel %vm3949, %v5288, 0
      %v5367 = vsel %vm3949, %v5289, 0
      %v5370 = vsel %vm3949, %v5290, 0
      %v5373 = vsel %vm3949, %v5291, 0
      %v5376 = vsel %vm3949, %v5292, 0
      %v5379 = vsel %vm3949, %v5293, 0
      %v5382 = vsel %vm3949, %v5294, 0
      %v5385 = vsel %vm3949, %v5295, 0
      %v5388 = vsel %vm3949, %v5296, 0
      %v5391 = vsel %vm3949, %v5297, 0
      %v5394 = vsel %vm3949, %v5298, 0
      %v5397 = vsel %vm3949, %v5299, 0
      %5399 = vmatprep.subr.mxu0 0.0
      %5400 = vmatpush1.xpose.msra.mxu0 %v5304
      %5401 = vmatprep.subr.mxu0 0.0
      %5402 = vmatpush1.xpose.msra.mxu0 %v5307
      %5403 = vmatprep.subr.mxu0 0.0
      %5404 = vmatpush1.xpose.msra.mxu0 %v5310
      %5405 = vmatprep.subr.mxu0 0.0
      %5406 = vmatpush1.xpose.msra.mxu0 %v5313
      %5407 = vmatprep.subr.mxu0 0.0
      %5408 = vmatpush1.xpose.msra.mxu0 %v5316
      %5409 = vmatprep.subr.mxu0 0.0
      %5410 = vmatpush1.xpose.msra.mxu0 %v5319
      %5411 = vmatprep.subr.mxu0 0.0
      %5412 = vmatpush1.xpose.msra.mxu0 %v5322
      %5413 = vmatprep.subr.mxu0 0.0
      %5414 = vmatpush1.xpose.msra.mxu0 %v5325
      %5415 = vmatprep.subr.mxu0 0.0
      %5416 = vmatpush1.xpose.msra.mxu0 %v5328
      %5417 = vmatprep.subr.mxu0 0.0
      %5418 = vmatpush1.xpose.msra.mxu0 %v5331
      %5419 = vmatprep.subr.mxu0 0.0
      %5420 = vmatpush1.xpose.msra.mxu0 %v5334
      %5421 = vmatprep.subr.mxu0 0.0
      %5422 = vmatpush1.xpose.msra.mxu0 %v5337
      %5423 = vmatprep.subr.mxu0 0.0
      %5424 = vmatpush1.xpose.msra.mxu0 %v5340
      %5425 = vmatprep.subr.mxu0 0.0
      %5426 = vmatpush1.xpose.msra.mxu0 %v5343
      %5427 = vmatprep.subr.mxu0 0.0
      %5428 = vmatpush1.xpose.msra.mxu0 %v5346
      %5429 = vmatprep.subr.mxu0 0.0
      %5430 = vmatpush1.xpose.msra.mxu0 %v5349
      %5431 = vmatprep.subr.mxu0 0.0
      %5432 = vmatpush1.xpose.msra.mxu0 %v5352
      %5433 = vmatprep.subr.mxu0 0.0
      %5434 = vmatpush1.xpose.msra.mxu0 %v5355
      %5435 = vmatprep.subr.mxu0 0.0
      %5436 = vmatpush1.xpose.msra.mxu0 %v5358
      %5437 = vmatprep.subr.mxu0 0.0
      %5438 = vmatpush1.xpose.msra.mxu0 %v5361
      %5439 = vmatprep.subr.mxu0 0.0
      %5440 = vmatpush1.xpose.msra.mxu0 %v5364
      %5441 = vmatprep.subr.mxu0 0.0
      %5442 = vmatpush1.xpose.msra.mxu0 %v5367
      %5443 = vmatprep.subr.mxu0 0.0
      %5444 = vmatpush1.xpose.msra.mxu0 %v5370
      %5445 = vmatprep.subr.mxu0 0.0
      %5446 = vmatpush1.xpose.msra.mxu0 %v5373
      %5447 = vmatprep.subr.mxu0 0.0
      %5448 = vmatpush1.xpose.msra.mxu0 %v5376
      %5449 = vmatprep.subr.mxu0 0.0
      %5450 = vmatpush1.xpose.msra.mxu0 %v5379
      %5451 = vmatprep.subr.mxu0 0.0
      %5452 = vmatpush1.xpose.msra.mxu0 %v5382
      %5453 = vmatprep.subr.mxu0 0.0
      %5454 = vmatpush1.xpose.msra.mxu0 %v5385
      %5455 = vmatprep.subr.mxu0 0.0
      %5456 = vmatpush1.xpose.msra.mxu0 %v5388
      %5457 = vmatprep.subr.mxu0 0.0
      %5458 = vmatpush1.xpose.msra.mxu0 %v5391
      %5459 = vmatprep.subr.mxu0 0.0
      %5460 = vmatpush1.xpose.msra.mxu0 %v5394
      %5461 = vmatprep.subr.mxu0 0.0
      %5462 = vmatpush1.xpose.msra.mxu0 %v5397
      %5463 = vmatprep.mubr.f32.mxu0 0.0
      %5464 = vmatmul.mubr.f32.gmra.mrb[0].mxu0 %v5301
      %v5465 = vpop.f32.mrb[0].mxu0
      %v5466 = vadd.f32 0.0, %v5465
      %v5467 = vpop.f32.mrb[0].mxu0
      %v5468 = vadd.f32 0.0, %v5467
      %5469 = vdwg.mxu0
      %v5470 = vadd.f32 %v5265, %v5466
      %v5471 = vadd.f32 %v5266, %v5468
      %v5472 = vld [vmem:[%s5267 + $0x1] sm:$0xff]
      %v5473 = vld [vmem:[%s5267 + $0x9] sm:$0xff]
      %v5474 = vld [vmem:[%s5267 + $0x19] sm:$0xff]
      %v5475 = vld [vmem:[%s5267 + $0x21] sm:$0xff]
      %v5476 = vld [vmem:[%s5267 + $0x31] sm:$0xff]
      %v5477 = vld [vmem:[%s5267 + $0x39] sm:$0xff]
      %v5478 = vld [vmem:[%s5267 + $0x49] sm:$0xff]
      %v5479 = vld [vmem:[%s5267 + $0x51] sm:$0xff]
      %v5480 = vld [vmem:[%s5267 + $0x61] sm:$0xff]
      %v5481 = vld [vmem:[%s5267 + $0x69] sm:$0xff]
      %v5482 = vld [vmem:[%s5267 + $0x79] sm:$0xff]
      %v5483 = vld [vmem:[%s5267 + $0x81] sm:$0xff]
      %v5484 = vld [vmem:[%s5267 + $0x91] sm:$0xff]
      %v5485 = vld [vmem:[%s5267 + $0x99] sm:$0xff]
      %v5486 = vld [vmem:[%s5267 + $0xa9] sm:$0xff]
      %v5487 = vld [vmem:[%s5267 + $0xb1] sm:$0xff]
      %v5488 = vld [vmem:[%s5267 + $0xc1] sm:$0xff]
      %v5489 = vld [vmem:[%s5267 + $0xc9] sm:$0xff]
      %v5490 = vld [vmem:[%s5267 + $0xd9] sm:$0xff]
      %v5491 = vld [vmem:[%s5267 + $0xe1] sm:$0xff]
      %v5492 = vld [vmem:[%s5267 + $0xf1] sm:$0xff]
      %v5493 = vld [vmem:[%s5267 + $0xf9] sm:$0xff]
      %v5494 = vld [vmem:[%s5267 + $0x109] sm:$0xff]
      %v5495 = vld [vmem:[%s5267 + $0x111] sm:$0xff]
      %v5496 = vld [vmem:[%s5267 + $0x121] sm:$0xff]
      %v5497 = vld [vmem:[%s5267 + $0x129] sm:$0xff]
      %v5498 = vld [vmem:[%s5267 + $0x139] sm:$0xff]
      %v5499 = vld [vmem:[%s5267 + $0x141] sm:$0xff]
      %v5500 = vld [vmem:[%s5267 + $0x151] sm:$0xff]
      %v5501 = vld [vmem:[%s5267 + $0x159] sm:$0xff]
      %v5502 = vld [vmem:[%s5267 + $0x169] sm:$0xff]
      %v5503 = vld [vmem:[%s5267 + $0x171] sm:$0xff]
      %v5505 = vsel %vm3949, %v4045, 0
      %v5508 = vsel %vm3949, %v5472, 0
      %v5511 = vsel %vm3949, %v5473, 0
      %v5514 = vsel %vm3949, %v5474, 0
      %v5517 = vsel %vm3949, %v5475, 0
      %v5520 = vsel %vm3949, %v5476, 0
      %v5523 = vsel %vm3949, %v5477, 0
      %v5526 = vsel %vm3949, %v5478, 0
      %v5529 = vsel %vm3949, %v5479, 0
      %v5532 = vsel %vm3949, %v5480, 0
      %v5535 = vsel %vm3949, %v5481, 0
      %v5538 = vsel %vm3949, %v5482, 0
      %v5541 = vsel %vm3949, %v5483, 0
      %v5544 = vsel %vm3949, %v5484, 0
      %v5547 = vsel %vm3949, %v5485, 0
      %v5550 = vsel %vm3949, %v5486, 0
      %v5553 = vsel %vm3949, %v5487, 0
      %v5556 = vsel %vm3949, %v5488, 0
      %v5559 = vsel %vm3949, %v5489, 0
      %v5562 = vsel %vm3949, %v5490, 0
      %v5565 = vsel %vm3949, %v5491, 0
      %v5568 = vsel %vm3949, %v5492, 0
      %v5571 = vsel %vm3949, %v5493, 0
      %v5574 = vsel %vm3949, %v5494, 0
      %v5577 = vsel %vm3949, %v5495, 0
      %v5580 = vsel %vm3949, %v5496, 0
      %v5583 = vsel %vm3949, %v5497, 0
      %v5586 = vsel %vm3949, %v5498, 0
      %v5589 = vsel %vm3949, %v5499, 0
      %v5592 = vsel %vm3949, %v5500, 0
      %v5595 = vsel %vm3949, %v5501, 0
      %v5598 = vsel %vm3949, %v5502, 0
      %v5601 = vsel %vm3949, %v5503, 0
      %5603 = vmatprep.subr.mxu0 0.0
      %5604 = vmatpush1.xpose.msra.mxu0 %v5508
      %5605 = vmatprep.subr.mxu0 0.0
      %5606 = vmatpush1.xpose.msra.mxu0 %v5511
      %5607 = vmatprep.subr.mxu0 0.0
      %5608 = vmatpush1.xpose.msra.mxu0 %v5514
      %5609 = vmatprep.subr.mxu0 0.0
      %5610 = vmatpush1.xpose.msra.mxu0 %v5517
      %5611 = vmatprep.subr.mxu0 0.0
      %5612 = vmatpush1.xpose.msra.mxu0 %v5520
      %5613 = vmatprep.subr.mxu0 0.0
      %5614 = vmatpush1.xpose.msra.mxu0 %v5523
      %5615 = vmatprep.subr.mxu0 0.0
      %5616 = vmatpush1.xpose.msra.mxu0 %v5526
      %5617 = vmatprep.subr.mxu0 0.0
      %5618 = vmatpush1.xpose.msra.mxu0 %v5529
      %5619 = vmatprep.subr.mxu0 0.0
      %5620 = vmatpush1.xpose.msra.mxu0 %v5532
      %5621 = vmatprep.subr.mxu0 0.0
      %5622 = vmatpush1.xpose.msra.mxu0 %v5535
      %5623 = vmatprep.subr.mxu0 0.0
      %5624 = vmatpush1.xpose.msra.mxu0 %v5538
      %5625 = vmatprep.subr.mxu0 0.0
      %5626 = vmatpush1.xpose.msra.mxu0 %v5541
      %5627 = vmatprep.subr.mxu0 0.0
      %5628 = vmatpush1.xpose.msra.mxu0 %v5544
      %5629 = vmatprep.subr.mxu0 0.0
      %5630 = vmatpush1.xpose.msra.mxu0 %v5547
      %5631 = vmatprep.subr.mxu0 0.0
      %5632 = vmatpush1.xpose.msra.mxu0 %v5550
      %5633 = vmatprep.subr.mxu0 0.0
      %5634 = vmatpush1.xpose.msra.mxu0 %v5553
      %5635 = vmatprep.subr.mxu0 0.0
      %5636 = vmatpush1.xpose.msra.mxu0 %v5556
      %5637 = vmatprep.subr.mxu0 0.0
      %5638 = vmatpush1.xpose.msra.mxu0 %v5559
      %5639 = vmatprep.subr.mxu0 0.0
      %5640 = vmatpush1.xpose.msra.mxu0 %v5562
      %5641 = vmatprep.subr.mxu0 0.0
      %5642 = vmatpush1.xpose.msra.mxu0 %v5565
      %5643 = vmatprep.subr.mxu0 0.0
      %5644 = vmatpush1.xpose.msra.mxu0 %v5568
      %5645 = vmatprep.subr.mxu0 0.0
      %5646 = vmatpush1.xpose.msra.mxu0 %v5571
      %5647 = vmatprep.subr.mxu0 0.0
      %5648 = vmatpush1.xpose.msra.mxu0 %v5574
      %5649 = vmatprep.subr.mxu0 0.0
      %5650 = vmatpush1.xpose.msra.mxu0 %v5577
      %5651 = vmatprep.subr.mxu0 0.0
      %5652 = vmatpush1.xpose.msra.mxu0 %v5580
      %5653 = vmatprep.subr.mxu0 0.0
      %5654 = vmatpush1.xpose.msra.mxu0 %v5583
      %5655 = vmatprep.subr.mxu0 0.0
      %5656 = vmatpush1.xpose.msra.mxu0 %v5586
      %5657 = vmatprep.subr.mxu0 0.0
      %5658 = vmatpush1.xpose.msra.mxu0 %v5589
      %5659 = vmatprep.subr.mxu0 0.0
      %5660 = vmatpush1.xpose.msra.mxu0 %v5592
      %5661 = vmatprep.subr.mxu0 0.0
      %5662 = vmatpush1.xpose.msra.mxu0 %v5595
      %5663 = vmatprep.subr.mxu0 0.0
      %5664 = vmatpush1.xpose.msra.mxu0 %v5598
      %5665 = vmatprep.subr.mxu0 0.0
      %5666 = vmatpush1.xpose.msra.mxu0 %v5601
      %5667 = vmatprep.mubr.f32.mxu0 0.0
      %5668 = vmatmul.mubr.f32.gmra.mrb[0].mxu0 %v5505
      %v5669 = vpop.f32.mrb[0].mxu0
      %v5670 = vadd.f32 0.0, %v5669
      %v5671 = vpop.f32.mrb[0].mxu0
      %v5672 = vadd.f32 0.0, %v5671
      %5673 = vdwg.mxu0
      %v5674 = vadd.f32 %v5470, %v5670
      %v5675 = vadd.f32 %v5471, %v5672
      %v5676 = vld [vmem:[%s5267 + $0x2] sm:$0xff]
      %v5677 = vld [vmem:[%s5267 + $0xa] sm:$0xff]
      %v5678 = vld [vmem:[%s5267 + $0x1a] sm:$0xff]
      %v5679 = vld [vmem:[%s5267 + $0x22] sm:$0xff]
      %v5680 = vld [vmem:[%s5267 + $0x32] sm:$0xff]
      %v5681 = vld [vmem:[%s5267 + $0x3a] sm:$0xff]
      %v5682 = vld [vmem:[%s5267 + $0x4a] sm:$0xff]
      %v5683 = vld [vmem:[%s5267 + $0x52] sm:$0xff]
      %v5684 = vld [vmem:[%s5267 + $0x62] sm:$0xff]
      %v5685 = vld [vmem:[%s5267 + $0x6a] sm:$0xff]
      %v5686 = vld [vmem:[%s5267 + $0x7a] sm:$0xff]
      %v5687 = vld [vmem:[%s5267 + $0x82] sm:$0xff]
      %v5688 = vld [vmem:[%s5267 + $0x92] sm:$0xff]
      %v5689 = vld [vmem:[%s5267 + $0x9a] sm:$0xff]
      %v5690 = vld [vmem:[%s5267 + $0xaa] sm:$0xff]
      %v5691 = vld [vmem:[%s5267 + $0xb2] sm:$0xff]
      %v5692 = vld [vmem:[%s5267 + $0xc2] sm:$0xff]
      %v5693 = vld [vmem:[%s5267 + $0xca] sm:$0xff]
      %v5694 = vld [vmem:[%s5267 + $0xda] sm:$0xff]
      %v5695 = vld [vmem:[%s5267 + $0xe2] sm:$0xff]
      %v5696 = vld [vmem:[%s5267 + $0xf2] sm:$0xff]
      %v5697 = vld [vmem:[%s5267 + $0xfa] sm:$0xff]
      %v5698 = vld [vmem:[%s5267 + $0x10a] sm:$0xff]
      %v5699 = vld [vmem:[%s5267 + $0x112] sm:$0xff]
      %v5700 = vld [vmem:[%s5267 + $0x122] sm:$0xff]
      %v5701 = vld [vmem:[%s5267 + $0x12a] sm:$0xff]
      %v5702 = vld [vmem:[%s5267 + $0x13a] sm:$0xff]
      %v5703 = vld [vmem:[%s5267 + $0x142] sm:$0xff]
      %v5704 = vld [vmem:[%s5267 + $0x152] sm:$0xff]
      %v5705 = vld [vmem:[%s5267 + $0x15a] sm:$0xff]
      %v5706 = vld [vmem:[%s5267 + $0x16a] sm:$0xff]
      %v5707 = vld [vmem:[%s5267 + $0x172] sm:$0xff]
      %v5709 = vsel %vm3949, %v4046, 0
      %v5712 = vsel %vm3949, %v5676, 0
      %v5715 = vsel %vm3949, %v5677, 0
      %v5718 = vsel %vm3949, %v5678, 0
      %v5721 = vsel %vm3949, %v5679, 0
      %v5724 = vsel %vm3949, %v5680, 0
      %v5727 = vsel %vm3949, %v5681, 0
      %v5730 = vsel %vm3949, %v5682, 0
      %v5733 = vsel %vm3949, %v5683, 0
      %v5736 = vsel %vm3949, %v5684, 0
      %v5739 = vsel %vm3949, %v5685, 0
      %v5742 = vsel %vm3949, %v5686, 0
      %v5745 = vsel %vm3949, %v5687, 0
      %v5748 = vsel %vm3949, %v5688, 0
      %v5751 = vsel %vm3949, %v5689, 0
      %v5754 = vsel %vm3949, %v5690, 0
      %v5757 = vsel %vm3949, %v5691, 0
      %v5760 = vsel %vm3949, %v5692, 0
      %v5763 = vsel %vm3949, %v5693, 0
      %v5766 = vsel %vm3949, %v5694, 0
      %v5769 = vsel %vm3949, %v5695, 0
      %v5772 = vsel %vm3949, %v5696, 0
      %v5775 = vsel %vm3949, %v5697, 0
      %v5778 = vsel %vm3949, %v5698, 0
      %v5781 = vsel %vm3949, %v5699, 0
      %v5784 = vsel %vm3949, %v5700, 0
      %v5787 = vsel %vm3949, %v5701, 0
      %v5790 = vsel %vm3949, %v5702, 0
      %v5793 = vsel %vm3949, %v5703, 0
      %v5796 = vsel %vm3949, %v5704, 0
      %v5799 = vsel %vm3949, %v5705, 0
      %v5802 = vsel %vm3949, %v5706, 0
      %v5805 = vsel %vm3949, %v5707, 0
      %5807 = vmatprep.subr.mxu0 0.0
      %5808 = vmatpush1.xpose.msra.mxu0 %v5712
      %5809 = vmatprep.subr.mxu0 0.0
      %5810 = vmatpush1.xpose.msra.mxu0 %v5715
      %5811 = vmatprep.subr.mxu0 0.0
      %5812 = vmatpush1.xpose.msra.mxu0 %v5718
      %5813 = vmatprep.subr.mxu0 0.0
      %5814 = vmatpush1.xpose.msra.mxu0 %v5721
      %5815 = vmatprep.subr.mxu0 0.0
      %5816 = vmatpush1.xpose.msra.mxu0 %v5724
      %5817 = vmatprep.subr.mxu0 0.0
      %5818 = vmatpush1.xpose.msra.mxu0 %v5727
      %5819 = vmatprep.subr.mxu0 0.0
      %5820 = vmatpush1.xpose.msra.mxu0 %v5730
      %5821 = vmatprep.subr.mxu0 0.0
      %5822 = vmatpush1.xpose.msra.mxu0 %v5733
      %5823 = vmatprep.subr.mxu0 0.0
      %5824 = vmatpush1.xpose.msra.mxu0 %v5736
      %5825 = vmatprep.subr.mxu0 0.0
      %5826 = vmatpush1.xpose.msra.mxu0 %v5739
      %5827 = vmatprep.subr.mxu0 0.0
      %5828 = vmatpush1.xpose.msra.mxu0 %v5742
      %5829 = vmatprep.subr.mxu0 0.0
      %5830 = vmatpush1.xpose.msra.mxu0 %v5745
      %5831 = vmatprep.subr.mxu0 0.0
      %5832 = vmatpush1.xpose.msra.mxu0 %v5748
      %5833 = vmatprep.subr.mxu0 0.0
      %5834 = vmatpush1.xpose.msra.mxu0 %v5751
      %5835 = vmatprep.subr.mxu0 0.0
      %5836 = vmatpush1.xpose.msra.mxu0 %v5754
      %5837 = vmatprep.subr.mxu0 0.0
      %5838 = vmatpush1.xpose.msra.mxu0 %v5757
      %5839 = vmatprep.subr.mxu0 0.0
      %5840 = vmatpush1.xpose.msra.mxu0 %v5760
      %5841 = vmatprep.subr.mxu0 0.0
      %5842 = vmatpush1.xpose.msra.mxu0 %v5763
      %5843 = vmatprep.subr.mxu0 0.0
      %5844 = vmatpush1.xpose.msra.mxu0 %v5766
      %5845 = vmatprep.subr.mxu0 0.0
      %5846 = vmatpush1.xpose.msra.mxu0 %v5769
      %5847 = vmatprep.subr.mxu0 0.0
      %5848 = vmatpush1.xpose.msra.mxu0 %v5772
      %5849 = vmatprep.subr.mxu0 0.0
      %5850 = vmatpush1.xpose.msra.mxu0 %v5775
      %5851 = vmatprep.subr.mxu0 0.0
      %5852 = vmatpush1.xpose.msra.mxu0 %v5778
      %5853 = vmatprep.subr.mxu0 0.0
      %5854 = vmatpush1.xpose.msra.mxu0 %v5781
      %5855 = vmatprep.subr.mxu0 0.0
      %5856 = vmatpush1.xpose.msra.mxu0 %v5784
      %5857 = vmatprep.subr.mxu0 0.0
      %5858 = vmatpush1.xpose.msra.mxu0 %v5787
      %5859 = vmatprep.subr.mxu0 0.0
      %5860 = vmatpush1.xpose.msra.mxu0 %v5790
      %5861 = vmatprep.subr.mxu0 0.0
      %5862 = vmatpush1.xpose.msra.mxu0 %v5793
      %5863 = vmatprep.subr.mxu0 0.0
      %5864 = vmatpush1.xpose.msra.mxu0 %v5796
      %5865 = vmatprep.subr.mxu0 0.0
      %5866 = vmatpush1.xpose.msra.mxu0 %v5799
      %5867 = vmatprep.subr.mxu0 0.0
      %5868 = vmatpush1.xpose.msra.mxu0 %v5802
      %5869 = vmatprep.subr.mxu0 0.0
      %5870 = vmatpush1.xpose.msra.mxu0 %v5805
      %5871 = vmatprep.mubr.f32.mxu0 0.0
      %5872 = vmatmul.mubr.f32.gmra.mrb[0].mxu0 %v5709
      %v5873 = vpop.f32.mrb[0].mxu0
      %v5874 = vadd.f32 0.0, %v5873
      %v5875 = vpop.f32.mrb[0].mxu0
      %v5876 = vadd.f32 0.0, %v5875
      %5877 = vdwg.mxu0
      %v5878 = vadd.f32 %v5674, %v5874
      %v5879 = vadd.f32 %v5675, %v5876
      %v5880 = vld [vmem:[%s5] sm:$0x7]
      %5882 = vset.pattern.permute.xlu0 0
      %5883 = vperm.xlu0 %5882, %v5880
      %v5884 = vpop.permute.xlu0 %5883
      %v5886 = vmul.f32 %v5878, %v5884
      %v5887 = vmul.f32 %v5879, %v5884
      %v5888 = vld [vmem:[%s6] sm:$0x7]
      %5890 = vset.pattern.permute.xlu0 0
      %5891 = vperm.xlu0 %5890, %v5888
      %v5892 = vpop.permute.xlu0 %5891
      %v5894 = vadd.f32 %v5886, %v5892
      %v5895 = vadd.f32 %v5887, %v5892
      %v5898 = vcombine.low %v5894, %v5895
      %5900 = vst [vmem:[%s278] sm:$0x77] %v5898
      %p5901 = scmp.lt.s32.totalorder %s18, 1
      %s5902 = scalar_select %p5901, %s18, 1
      %s5903 = smul.addr %s5902, 2
      %s5904 = smul.addr %s5903, 4
      %s5905 = scalar_lea.vmem %s7, %s5904
      // Predicated region
      $region49: #{tpu_custom_call.1} parent=47 // pred_check
        %p5906 = pneg %p188
      $region50: #{tpu_custom_call.1} parent=47 // pred_check_branch
        %5908 = sbr.rel (%p5906) target = $region52
      $region51: #{tpu_custom_call.1} parent=47 // pred_region
        _
      $region52: #{tpu_custom_call.1} parent=47 // pred_fallthru
        _
    $region48: #{tpu_custom_call.1} parent=5 // pred_fallthru
      _
    %p5909 = scmp.le.s32.totalorder 2, %s13
    // Predicated region
    $region53: #{tpu_custom_call.1} parent=5 // pred_check
      %p5910 = pneg %p5909
    $region54: #{tpu_custom_call.1} parent=5 // pred_check_branch
      %5912 = sbr.rel (%p5910) target = $region56
    $region55: #{tpu_custom_call.1} parent=5 // pred_region
      %s5913 = ssub.s32 %s13, 2
      // Predicated region
      $region57: #{tpu_custom_call.1} parent=55 // pred_check
        %p5914 = pneg %p194
      $region58: #{tpu_custom_call.1} parent=55 // pred_check_branch
        %5916 = sbr.rel (%p5914) target = $region60
      $region59: #{tpu_custom_call.1} parent=55 // pred_region
        %p5917 = scmp.lt.s32.totalorder %s19, 1
        %s5918 = scalar_select %p5917, %s19, 1
        %s5919 = smul.addr %s5918, 2
        %s5920 = smul.addr %s5919, 4
        %s5921 = scalar_lea.vmem %s7, %s5920
      $region60: #{tpu_custom_call.1} parent=55 // pred_fallthru
        _
    $region56: #{tpu_custom_call.1} parent=5 // pred_fallthru
      _
  $region6: #{tpu_custom_call.1} parent=0 // loop_footer
    %s17 = sadd.s32 1, %s13
  $region7: #{tpu_custom_call.1} parent=0 // loop_footer_branch
    %12 = sbr.rel target = $region3
  $region8: #{tpu_custom_call.1} parent=0 // loop_exit
    _

</llo_original>
